<compile_context>
chip_gen: v7x
topology: tpu7x:2x2x1
jax: 0.10.0
libtpu: 0.0.40
codegen_flags: <defaults>
</compile_context>

<pallas_src>
import functools
import math

import jax
import jax.numpy as jnp
from jax.experimental import pallas as pl
from jax.experimental.pallas import tpu as pltpu


# ---------------------------------------------------------------------------
# In-kernel math helpers (VPU/EUP-only ops, guaranteed to lower in Mosaic)
# ---------------------------------------------------------------------------
def _layernorm(x, gamma, beta, eps=1e-5):
    """LayerNorm over the last axis (torch.nn.LayerNorm defaults, biased var)."""
    mu = jnp.mean(x, axis=-1, keepdims=True)
    xc = x - mu
    var = jnp.mean(xc * xc, axis=-1, keepdims=True)
    return xc * jax.lax.rsqrt(var + eps) * gamma + beta


def _erf(x):
    # Abramowitz & Stegun 7.1.26 polynomial, |err| <= 1.5e-7 (f32-exact here).
    p = 0.3275911
    a1, a2, a3, a4, a5 = (0.254829592, -0.284496736, 1.421413741,
                          -1.453152027, 1.061405429)
    s = jnp.where(x >= 0.0, 1.0, -1.0)
    ax = jnp.abs(x)
    t = 1.0 / (1.0 + p * ax)
    poly = ((((a5 * t + a4) * t + a3) * t + a2) * t + a1) * t
    return s * (1.0 - poly * jnp.exp(-ax * ax))


def _gelu_exact(x):
    # torch.nn.GELU default is the exact (erf) variant.
    return 0.5 * x * (1.0 + _erf(x * (1.0 / math.sqrt(2.0))))


# ---------------------------------------------------------------------------
# Pallas kernels
# ---------------------------------------------------------------------------
def _patch_embed_kernel(x_ref, w_ref, b_ref, pos_ref, out_ref):
    # x_ref: (1, N, P) flattened patches of one image; w: (P, D); b: (1, D); pos: (N, D)
    x = x_ref[0].astype(jnp.float32) * (1.0 / 255.0)          # fused `x / 255.0`
    y = jnp.dot(x, w_ref[...], preferred_element_type=jnp.float32)
    out_ref[0] = (y + b_ref[...] + pos_ref[...]).astype(out_ref.dtype)


def _encoder_block_kernel(x_ref, ln1g_ref, ln1b_ref, wqkv_ref, wproj_ref,
                          bproj_ref, ln2g_ref, ln2b_ref, wfc1_ref, bfc1_ref,
                          wfc2_ref, bfc2_ref, out_ref, *, num_heads, head_dim):
    D = num_heads * head_dim
    scale = head_dim ** -0.5
    x = x_ref[0].astype(jnp.float32)                          # (N, D) resident in VMEM

    # --- multi-head self-attention (pre-norm) ------------------------------
    h = _layernorm(x, ln1g_ref[...], ln1b_ref[...])
    qkv = jnp.dot(h, wqkv_ref[...], preferred_element_type=jnp.float32)   # (N, 3D)
    head_outs = []
    for hi in range(num_heads):                               # static unroll
        lo = hi * head_dim
        q = qkv[:, lo:lo + head_dim] * scale
        k = qkv[:, D + lo:D + lo + head_dim]
        v = qkv[:, 2 * D + lo:2 * D + lo + head_dim]
        s = jax.lax.dot_general(q, k, (((1,), (1,)), ((), ())),           # q @ k^T
                                preferred_element_type=jnp.float32)
        s = s - jnp.max(s, axis=-1, keepdims=True)
        e = jnp.exp(s)
        p_attn = e / jnp.sum(e, axis=-1, keepdims=True)
        head_outs.append(jnp.dot(p_attn, v, preferred_element_type=jnp.float32))
    attn = jnp.concatenate(head_outs, axis=-1)                # (N, D)
    attn = jnp.dot(attn, wproj_ref[...],
                   preferred_element_type=jnp.float32) + bproj_ref[...]
    x = x + attn

    # --- MLP (pre-norm) -----------------------------------------------------
    h2 = _layernorm(x, ln2g_ref[...], ln2b_ref[...])
    m = jnp.dot(h2, wfc1_ref[...], preferred_element_type=jnp.float32) + bfc1_ref[...]
    m = _gelu_exact(m)
    m = jnp.dot(m, wfc2_ref[...], preferred_element_type=jnp.float32) + bfc2_ref[...]
    out_ref[0] = (x + m).astype(out_ref.dtype)


def _final_norm_mean_kernel(x_ref, g_ref, b_ref, out_ref, *, inv_n):
    x = x_ref[0].astype(jnp.float32)                          # (N, D)
    h = _layernorm(x, g_ref[...], b_ref[...])
    out_ref[0] = (jnp.sum(h, axis=0, keepdims=True) * inv_n).astype(out_ref.dtype)


# ---------------------------------------------------------------------------
# pallas_call wrappers
# ---------------------------------------------------------------------------
def _full(shape):
    # Whole-array block with a constant index_map: DMA'd once, stays resident
    # across the (batch) grid axis.
    return pl.BlockSpec(shape, lambda b: (0,) * len(shape))


def _patch_embed(patches, w, b, pos):
    B, N, P = patches.shape
    D = w.shape[1]
    return pl.pallas_call(
        _patch_embed_kernel,
        out_shape=jax.ShapeDtypeStruct((B, N, D), jnp.float32),
        grid_spec=pltpu.PrefetchScalarGridSpec(
            num_scalar_prefetch=0,
            grid=(B,),
            in_specs=[
                pl.BlockSpec((1, N, P), lambda b: (b, 0, 0)),
                _full((P, D)), _full((1, D)), _full((N, D)),
            ],
            out_specs=pl.BlockSpec((1, N, D), lambda b: (b, 0, 0)),
        ),
        compiler_params=pltpu.CompilerParams(dimension_semantics=("parallel",)),
    )(patches, w, b, pos)


def _encoder_block(x, blk, *, num_heads):
    B, N, D = x.shape
    H = blk["w_fc1"].shape[1]
    kernel = functools.partial(_encoder_block_kernel, num_heads=num_heads,
                               head_dim=D // num_heads)
    return pl.pallas_call(
        kernel,
        out_shape=jax.ShapeDtypeStruct((B, N, D), x.dtype),
        grid_spec=pltpu.PrefetchScalarGridSpec(
            num_scalar_prefetch=0,
            grid=(B,),
            in_specs=[
                pl.BlockSpec((1, N, D), lambda b: (b, 0, 0)),   # tokens
                _full((1, D)), _full((1, D)),                   # ln1 gamma / beta
                _full((D, 3 * D)),                              # qkv weight (qkv_bias=False)
                _full((D, D)), _full((1, D)),                   # attn proj weight / bias
                _full((1, D)), _full((1, D)),                   # ln2 gamma / beta
                _full((D, H)), _full((1, H)),                   # mlp fc1 weight / bias
                _full((H, D)), _full((1, D)),                   # mlp fc2 weight / bias
            ],
            out_specs=pl.BlockSpec((1, N, D), lambda b: (b, 0, 0)),
        ),
        compiler_params=pltpu.CompilerParams(dimension_semantics=("parallel",)),
        input_output_aliases={0: 0},     # tokens buffer is reused in place
    )(x, blk["ln1_g"], blk["ln1_b"], blk["w_qkv"], blk["w_proj"], blk["b_proj"],
      blk["ln2_g"], blk["ln2_b"], blk["w_fc1"], blk["b_fc1"], blk["w_fc2"],
      blk["b_fc2"])


def _final_norm_mean(x, g, b):
    B, N, D = x.shape
    out = pl.pallas_call(
        functools.partial(_final_norm_mean_kernel, inv_n=1.0 / N),
        out_shape=jax.ShapeDtypeStruct((B, 1, D), x.dtype),
        grid_spec=pltpu.PrefetchScalarGridSpec(
            num_scalar_prefetch=0,
            grid=(B,),
            in_specs=[
                pl.BlockSpec((1, N, D), lambda b: (b, 0, 0)),
                _full((1, D)), _full((1, D)),
            ],
            out_specs=pl.BlockSpec((1, 1, D), lambda b: (b, 0, 0)),
        ),
        compiler_params=pltpu.CompilerParams(dimension_semantics=("parallel",)),
    )(x, g, b)
    return out.reshape(B, D)


# ---------------------------------------------------------------------------
# Parameters and forward pass
# ---------------------------------------------------------------------------
def get_sinusoid_encoding_table(n_position, d_hid):
    """Same table as the PyTorch helper (without the leading batch dim)."""
    pos = jnp.arange(n_position, dtype=jnp.float32)[:, None]
    idx = jnp.arange(d_hid, dtype=jnp.float32)[None, :]
    angle = pos / jnp.power(10000.0, 2.0 * jnp.floor(idx / 2.0) / d_hid)
    even = (jnp.arange(d_hid) % 2 == 0)[None, :]
    return jnp.where(even, jnp.sin(angle), jnp.cos(angle)).astype(jnp.float32)


def init_vit_params(key, *, img_size, patch_size, in_chans, embed_dim, depth,
                    num_heads, mlp_ratio):
    del num_heads  # layout does not depend on the head split
    num_patches = (img_size // patch_size) ** 2
    patch_dim = in_chans * patch_size * patch_size
    hidden = int(embed_dim * mlp_ratio)

    def dense(k, fi, fo):
        return jax.random.normal(k, (fi, fo), jnp.float32) * 0.02

    def vec(k, n):
        return jax.random.normal(k, (1, n), jnp.float32) * 0.02

    keys = jax.random.split(key, 2 + depth)
    params = {
        # Conv2d(in_chans, D, k=p, s=p) weight reshaped to (C*p*p, D) + bias.
        "w_patch": dense(keys[0], patch_dim, embed_dim),
        "b_patch": vec(keys[1], embed_dim),
        "pos": get_sinusoid_encoding_table(num_patches, embed_dim),
        "norm_g": jnp.ones((1, embed_dim), jnp.float32),
        "norm_b": jnp.zeros((1, embed_dim), jnp.float32),
        "blocks": [],
    }
    for i in range(depth):
        bk = jax.random.split(keys[2 + i], 11)
        params["blocks"].append({
            "ln1_g": 1.0 + vec(bk[0], embed_dim),
            "ln1_b": vec(bk[1], embed_dim),
            "w_qkv": dense(bk[2], embed_dim, 3 * embed_dim),
            "w_proj": dense(bk[3], embed_dim, embed_dim),
            "b_proj": vec(bk[4], embed_dim),
            "ln2_g": 1.0 + vec(bk[5], embed_dim),
            "ln2_b": vec(bk[6], embed_dim),
            "w_fc1": dense(bk[7], embed_dim, hidden),
            "b_fc1": vec(bk[8], hidden),
            "w_fc2": dense(bk[9], hidden, embed_dim),
            "b_fc2": vec(bk[10], embed_dim),
        })
    return params


@functools.partial(jax.jit, static_argnames=("patch_size", "num_heads"))
def _vit_forward(x, params, *, patch_size, num_heads):
    B, C, Himg, Wimg = x.shape
    p = patch_size
    nh, nw = Himg // p, Wimg // p
    # Layout-only patch extraction (== Conv2d(k=p, stride=p) + flatten + transpose);
    # the /255 scaling itself is fused into the patch-embed kernel.
    patches = jnp.transpose(x.reshape(B, C, nh, p, nw, p), (0, 2, 4, 1, 3, 5))
    patches = patches.reshape(B, nh * nw, C * p * p)
    tokens = _patch_embed(patches, params["w_patch"], params["b_patch"], params["pos"])
    for blk in params["blocks"]:
        tokens = _encoder_block(tokens, blk, num_heads=num_heads)
    return _final_norm_mean(tokens, params["norm_g"], params["norm_b"])


def vit_encoder_forward(x, params, *, patch_size, num_heads, mask=None, detach=False):
    if mask is not None:
        # TODO(synk): the visible-token gather x[:, ~mask] is not implemented; mask=None only.
        raise NotImplementedError("mask-based token selection is not supported")
    out = _vit_forward(x, params, patch_size=patch_size, num_heads=num_heads)
    return jax.lax.stop_gradient(out) if detach else out


class ViTEncoder:
    """Pallas TPU mirror of the PyTorch ViTEncoder (forward pass only)."""

    def __init__(self, img_size=84, patch_size=12, in_chans=9, num_classes=0,
                 embed_dim=512, depth=4, num_heads=6, mlp_ratio=4.0,
                 qkv_bias=False, qk_scale=None, drop_rate=0.0, attn_drop_rate=0.0,
                 drop_path_rate=0.0, norm_layer=None, init_values=0,
                 use_learnable_pos_emb=False, feature_dim=50, key=None):
        del norm_layer  # LayerNorm is hard-wired (matches the default)
        assert img_size % patch_size == 0
        # Only the default (zero dropout, Identity head, no layer-scale,
        # sinusoid pos-embed, no qkv bias) forward path is implemented.
        assert num_classes == 0 and init_values == 0 and not use_learnable_pos_emb
        assert drop_rate == 0.0 and attn_drop_rate == 0.0 and drop_path_rate == 0.0
        assert not qkv_bias and qk_scale is None
        # TODO(synk): VideoMAE allows all_head_dim != embed_dim (e.g. 512 dims / 6 heads);
        # only the embed_dim % num_heads == 0 case is implemented here.
        assert embed_dim % num_heads == 0
        self.feature_dim = feature_dim
        self.embed_dim = embed_dim
        self.patch_size = patch_size
        self.num_heads = num_heads
        if key is None:
            key = jax.random.PRNGKey(0)
        self.params = init_vit_params(
            key, img_size=img_size, patch_size=patch_size, in_chans=in_chans,
            embed_dim=embed_dim, depth=depth, num_heads=num_heads, mlp_ratio=mlp_ratio)
        # NOTE: the PyTorch module also defines `self.state` (Linear+LayerNorm),
        # but it is never used in forward, so it is omitted.

    def __call__(self, x, mask=None, detach=False):
        return vit_encoder_forward(x, self.params, patch_size=self.patch_size,
                                   num_heads=self.num_heads, mask=mask, detach=detach)

    def copy_conv_weights_from(self, source):
        """Tie weights: share the parameter pytree with the source encoder."""
        self.params = source.params

    def log(self, L, step, log_freq):
        pass


# ---------------------------------------------------------------------------
# Pure-jnp reference (mirrors the PyTorch forward) for validation
# ---------------------------------------------------------------------------
def _reference_forward(x, params, *, patch_size, num_heads):
    B, C, Himg, Wimg = x.shape
    p = patch_size
    nh, nw = Himg // p, Wimg // p

    def ln(z, g, b):
        mu = z.mean(-1, keepdims=True)
        var = ((z - mu) ** 2).mean(-1, keepdims=True)
        return (z - mu) / jnp.sqrt(var + 1e-5) * g + b

    t = jnp.transpose((x / 255.0).reshape(B, C, nh, p, nw, p), (0, 2, 4, 1, 3, 5))
    t = t.reshape(B, nh * nw, C * p * p) @ params["w_patch"] + params["b_patch"]
    t = t + params["pos"][None]
    for blk in params["blocks"]:
        D = t.shape[-1]
        hd = D // num_heads

        def heads(z):
            return jnp.transpose(z.reshape(B, -1, num_heads, hd), (0, 2, 1, 3))

        h = ln(t, blk["ln1_g"], blk["ln1_b"])
        q, k, v = jnp.split(h @ blk["w_qkv"], 3, axis=-1)
        q, k, v = heads(q) * hd ** -0.5, heads(k), heads(v)
        a = jax.nn.softmax(jnp.einsum("bhqd,bhkd->bhqk", q, k), axis=-1)
        o = jnp.transpose(jnp.einsum("bhqk,bhkd->bhqd", a, v), (0, 2, 1, 3)).reshape(B, -1, D)
        t = t + o @ blk["w_proj"] + blk["b_proj"]
        h2 = ln(t, blk["ln2_g"], blk["ln2_b"])
        m = jax.nn.gelu(h2 @ blk["w_fc1"] + blk["b_fc1"], approximate=False)
        t = t + m @ blk["w_fc2"] + blk["b_fc2"]
    t = ln(t, params["norm_g"], params["norm_b"])
    return t.mean(axis=1)


if __name__ == "__main__":
    key = jax.random.PRNGKey(0)
    k_x, k_p = jax.random.split(key)

    # Small config consistent with the module: 16x16 image, 4x4 patches
    # (-> 16 patches), 4 channels, embed_dim=128 (lane-dense), 2 blocks, 4 heads.
    batch, in_chans, img_size, patch_size = 2, 4, 16, 4
    embed_dim, depth, num_heads = 128, 2, 4

    x = jax.random.uniform(k_x, (batch, in_chans, img_size, img_size),
                           dtype=jnp.float32, minval=0.0, maxval=255.0)

    enc = ViTEncoder(img_size=img_size, patch_size=patch_size, in_chans=in_chans,
                     embed_dim=embed_dim, depth=depth, num_heads=num_heads,
                     mlp_ratio=4.0, feature_dim=50, key=k_p)

    out = jax.block_until_ready(enc(x))               # (batch, embed_dim)
    assert out.shape == (batch, embed_dim)

    with jax.default_matmul_precision("float32"):
        ref = _reference_forward(x, enc.params, patch_size=patch_size,
                                 num_heads=num_heads)
    err = float(jnp.max(jnp.abs(out - ref)))
    assert bool(jnp.all(jnp.isfinite(out))) and err < 2e-2, f"mismatch vs reference: {err}"

    # detach only affects autograd; forward values must be identical.
    out_d = jax.block_until_ready(enc(x, detach=True))
    assert bool(jnp.all(out_d == out))

    print("KERNEL_OK")
</pallas_src>

<mosaic_0001>
module attributes {stable_mosaic.version = 11 : i64} {
  func.func @_patch_embed_kernel(%arg0: i32, %arg1: memref<1x16x64xf32, #tpu.memory_space<vmem>>, %arg2: memref<64x128xf32, #tpu.memory_space<vmem>>, %arg3: memref<1x128xf32, #tpu.memory_space<vmem>>, %arg4: memref<16x128xf32, #tpu.memory_space<vmem>>, %arg5: memref<1x16x128xf32, #tpu.memory_space<vmem>>) attributes {dimension_semantics = [#tpu.dimension_semantics<parallel>], iteration_bounds = array<i64: 2>, scalar_prefetch = 0 : i64, scratch_operands = 0 : i64, tpu.core_type = #tpu.core_type<tc>, window_params = [{transform_indices = @transform_0, window_bounds = array<i64: 1, 16, 64>}, {pipeline_mode = #tpu.pipeline_mode<synchronous>, transform_indices = @transform_1, window_bounds = array<i64: 64, 128>}, {pipeline_mode = #tpu.pipeline_mode<synchronous>, transform_indices = @transform_2, window_bounds = array<i64: 1, 128>}, {pipeline_mode = #tpu.pipeline_mode<synchronous>, transform_indices = @transform_3, window_bounds = array<i64: 16, 128>}, {transform_indices = @transform_4, window_bounds = array<i64: 1, 16, 128>}]} {
    %c0 = arith.constant 0 : index
    %c0_0 = arith.constant 0 : index
    %c0_1 = arith.constant 0 : index
    %0 = vector.load %arg1[%c0, %c0_0, %c0_1] : memref<1x16x64xf32, #tpu.memory_space<vmem>>, vector<1x16x64xf32>
    %1 = vector.shape_cast %0 : vector<1x16x64xf32> to vector<16x64xf32>
    %cst = arith.constant 0.00392156886 : f32
    %2 = vector.broadcast %cst : f32 to vector<16x64xf32>
    %3 = arith.mulf %1, %2 : vector<16x64xf32>
    %c0_2 = arith.constant 0 : index
    %c0_3 = arith.constant 0 : index
    %4 = vector.load %arg2[%c0_2, %c0_3] : memref<64x128xf32, #tpu.memory_space<vmem>>, vector<64x128xf32>
    %cst_4 = arith.constant dense<0.000000e+00> : vector<16x128xf32>
    %5 = tpu.matmul %3, %4, %cst_4 {dimension_numbers = #tpu.dot_dimension_numbers<[1], [0], [0], [1], [0, 0, 1, 1], [], []>} : vector<16x64xf32>, vector<64x128xf32>, vector<16x128xf32> -> vector<16x128xf32>
    %c0_5 = arith.constant 0 : index
    %c0_6 = arith.constant 0 : index
    %6 = vector.load %arg3[%c0_5, %c0_6] : memref<1x128xf32, #tpu.memory_space<vmem>>, vector<1x128xf32>
    %7 = vector.broadcast %6 : vector<1x128xf32> to vector<16x128xf32>
    %8 = arith.addf %5, %7 : vector<16x128xf32>
    %c0_7 = arith.constant 0 : index
    %c0_8 = arith.constant 0 : index
    %9 = vector.load %arg4[%c0_7, %c0_8] : memref<16x128xf32, #tpu.memory_space<vmem>>, vector<16x128xf32>
    %10 = arith.addf %8, %9 : vector<16x128xf32>
    %c0_9 = arith.constant 0 : index
    %c0_10 = arith.constant 0 : index
    %c0_11 = arith.constant 0 : index
    %11 = vector.load %arg5[%c0_9, %c0_10, %c0_11] : memref<1x16x128xf32, #tpu.memory_space<vmem>>, vector<1x16x128xf32>
    %12 = vector.shape_cast %11 : vector<1x16x128xf32> to vector<16x128xf32>
    %13 = vector.shape_cast %10 : vector<16x128xf32> to vector<1x16x128xf32>
    tpu.vector_store %arg5[%c0_9, %c0_10, %c0_11], %13 {strides = array<i32>} : memref<1x16x128xf32, #tpu.memory_space<vmem>>, vector<1x16x128xf32>,
    return
  }
  func.func @transform_0(%arg0: i32) -> (i32, i32, i32) {
    %c0_i32 = arith.constant 0 : i32
    %c0_i32_0 = arith.constant 0 : i32
    %c0_i32_1 = arith.constant 0 : i32
    return %arg0, %c0_i32, %c0_i32_0 : i32, i32, i32
  }
  func.func @transform_1(%arg0: i32) -> (i32, i32) {
    %c0_i32 = arith.constant 0 : i32
    %c0_i32_0 = arith.constant 0 : i32
    %c0_i32_1 = arith.constant 0 : i32
    return %c0_i32, %c0_i32_0 : i32, i32
  }
  func.func @transform_2(%arg0: i32) -> (i32, i32) {
    %c0_i32 = arith.constant 0 : i32
    %c0_i32_0 = arith.constant 0 : i32
    %c0_i32_1 = arith.constant 0 : i32
    return %c0_i32, %c0_i32_0 : i32, i32
  }
  func.func @transform_3(%arg0: i32) -> (i32, i32) {
    %c0_i32 = arith.constant 0 : i32
    %c0_i32_0 = arith.constant 0 : i32
    %c0_i32_1 = arith.constant 0 : i32
    return %c0_i32, %c0_i32_0 : i32, i32
  }
  func.func @transform_4(%arg0: i32) -> (i32, i32, i32) {
    %c0_i32 = arith.constant 0 : i32
    %c0_i32_0 = arith.constant 0 : i32
    %c0_i32_1 = arith.constant 0 : i32
    return %arg0, %c0_i32, %c0_i32_0 : i32, i32, i32
  }
}

module attributes {stable_mosaic.version = 11 : i64} {
  func.func @_encoder_block_kernel(%arg0: i32, %arg1: memref<1x16x128xf32, #tpu.memory_space<vmem>>, %arg2: memref<1x128xf32, #tpu.memory_space<vmem>>, %arg3: memref<1x128xf32, #tpu.memory_space<vmem>>, %arg4: memref<128x384xf32, #tpu.memory_space<vmem>>, %arg5: memref<128x128xf32, #tpu.memory_space<vmem>>, %arg6: memref<1x128xf32, #tpu.memory_space<vmem>>, %arg7: memref<1x128xf32, #tpu.memory_space<vmem>>, %arg8: memref<1x128xf32, #tpu.memory_space<vmem>>, %arg9: memref<128x512xf32, #tpu.memory_space<vmem>>, %arg10: memref<1x512xf32, #tpu.memory_space<vmem>>, %arg11: memref<512x128xf32, #tpu.memory_space<vmem>>, %arg12: memref<1x128xf32, #tpu.memory_space<vmem>>, %arg13: memref<1x16x128xf32, #tpu.memory_space<vmem>>) attributes {dimension_semantics = [#tpu.dimension_semantics<parallel>], iteration_bounds = array<i64: 2>, scalar_prefetch = 0 : i64, scratch_operands = 0 : i64, tpu.core_type = #tpu.core_type<tc>, window_params = [{transform_indices = @transform_0, window_bounds = array<i64: 1, 16, 128>}, {pipeline_mode = #tpu.pipeline_mode<synchronous>, transform_indices = @transform_1, window_bounds = array<i64: 1, 128>}, {pipeline_mode = #tpu.pipeline_mode<synchronous>, transform_indices = @transform_2, window_bounds = array<i64: 1, 128>}, {pipeline_mode = #tpu.pipeline_mode<synchronous>, transform_indices = @transform_3, window_bounds = array<i64: 128, 384>}, {pipeline_mode = #tpu.pipeline_mode<synchronous>, transform_indices = @transform_4, window_bounds = array<i64: 128, 128>}, {pipeline_mode = #tpu.pipeline_mode<synchronous>, transform_indices = @transform_5, window_bounds = array<i64: 1, 128>}, {pipeline_mode = #tpu.pipeline_mode<synchronous>, transform_indices = @transform_6, window_bounds = array<i64: 1, 128>}, {pipeline_mode = #tpu.pipeline_mode<synchronous>, transform_indices = @transform_7, window_bounds = array<i64: 1, 128>}, {pipeline_mode = #tpu.pipeline_mode<synchronous>, transform_indices = @transform_8, window_bounds = array<i64: 128, 512>}, {pipeline_mode = #tpu.pipeline_mode<synchronous>, transform_indices = @transform_9, window_bounds = array<i64: 1, 512>}, {pipeline_mode = #tpu.pipeline_mode<synchronous>, transform_indices = @transform_10, window_bounds = array<i64: 512, 128>}, {pipeline_mode = #tpu.pipeline_mode<synchronous>, transform_indices = @transform_11, window_bounds = array<i64: 1, 128>}, {transform_indices = @transform_12, window_bounds = array<i64: 1, 16, 128>}]} {
    %c0 = arith.constant 0 : index
    %c0_0 = arith.constant 0 : index
    %c0_1 = arith.constant 0 : index
    %0 = vector.load %arg1[%c0, %c0_0, %c0_1] : memref<1x16x128xf32, #tpu.memory_space<vmem>>, vector<1x16x128xf32>
    %1 = vector.shape_cast %0 : vector<1x16x128xf32> to vector<16x128xf32>
    %c0_2 = arith.constant 0 : index
    %c0_3 = arith.constant 0 : index
    %2 = vector.load %arg2[%c0_2, %c0_3] : memref<1x128xf32, #tpu.memory_space<vmem>>, vector<1x128xf32>
    %c0_4 = arith.constant 0 : index
    %c0_5 = arith.constant 0 : index
    %3 = vector.load %arg3[%c0_4, %c0_5] : memref<1x128xf32, #tpu.memory_space<vmem>>, vector<1x128xf32>
    %cst = arith.constant dense<0.000000e+00> : vector<16xf32>
    %4 = vector.multi_reduction <add>, %1, %cst [1] : vector<16x128xf32> to vector<16xf32>
    %5 = vector.shape_cast %4 : vector<16xf32> to vector<16x1xf32>
    %cst_6 = arith.constant 1.280000e+02 : f32
    %6 = vector.broadcast %cst_6 : f32 to vector<16x1xf32>
    %7 = arith.divf %5, %6 : vector<16x1xf32>
    %8 = vector.broadcast %7 : vector<16x1xf32> to vector<16x128xf32>
    %9 = arith.subf %1, %8 : vector<16x128xf32>
    %10 = arith.mulf %9, %9 : vector<16x128xf32>
    %cst_7 = arith.constant dense<0.000000e+00> : vector<16xf32>
    %11 = vector.multi_reduction <add>, %10, %cst_7 [1] : vector<16x128xf32> to vector<16xf32>
    %12 = vector.shape_cast %11 : vector<16xf32> to vector<16x1xf32>
    %cst_8 = arith.constant 1.280000e+02 : f32
    %13 = vector.broadcast %cst_8 : f32 to vector<16x1xf32>
    %14 = arith.divf %12, %13 : vector<16x1xf32>
    %cst_9 = arith.constant 9.99999974E-6 : f32
    %15 = vector.broadcast %cst_9 : f32 to vector<16x1xf32>
    %16 = arith.addf %14, %15 : vector<16x1xf32>
    %17 = math.rsqrt %16 : vector<16x1xf32>
    %18 = vector.broadcast %17 : vector<16x1xf32> to vector<16x128xf32>
    %19 = arith.mulf %9, %18 : vector<16x128xf32>
    %20 = vector.broadcast %2 : vector<1x128xf32> to vector<16x128xf32>
    %21 = arith.mulf %19, %20 : vector<16x128xf32>
    %22 = vector.broadcast %3 : vector<1x128xf32> to vector<16x128xf32>
    %23 = arith.addf %21, %22 : vector<16x128xf32>
    %c0_10 = arith.constant 0 : index
    %c0_11 = arith.constant 0 : index
    %24 = vector.load %arg4[%c0_10, %c0_11] : memref<128x384xf32, #tpu.memory_space<vmem>>, vector<128x384xf32>
    %cst_12 = arith.constant dense<0.000000e+00> : vector<16x384xf32>
    %25 = tpu.matmul %23, %24, %cst_12 {dimension_numbers = #tpu.dot_dimension_numbers<[1], [0], [0], [1], [0, 0, 1, 1], [], []>} : vector<16x128xf32>, vector<128x384xf32>, vector<16x384xf32> -> vector<16x384xf32>
    %26 = vector.extract_strided_slice %25 {offsets = [0, 0], sizes = [16, 32], strides = [1, 1]} : vector<16x384xf32> to vector<16x32xf32>
    %cst_13 = arith.constant 0.176776692 : f32
    %27 = vector.broadcast %cst_13 : f32 to vector<16x32xf32>
    %28 = arith.mulf %26, %27 : vector<16x32xf32>
    %29 = vector.extract_strided_slice %25 {offsets = [0, 128], sizes = [16, 32], strides = [1, 1]} : vector<16x384xf32> to vector<16x32xf32>
    %30 = vector.extract_strided_slice %25 {offsets = [0, 256], sizes = [16, 32], strides = [1, 1]} : vector<16x384xf32> to vector<16x32xf32>
    %cst_14 = arith.constant dense<0.000000e+00> : vector<16x16xf32>
    %31 = tpu.matmul %28, %29, %cst_14 {dimension_numbers = #tpu.dot_dimension_numbers<[1], [1], [0], [0], [0, 0, 1, 0], [], []>} : vector<16x32xf32>, vector<16x32xf32>, vector<16x16xf32> -> vector<16x16xf32>
    %cst_15 = arith.constant dense<0xFF800000> : vector<16xf32>
    %32 = vector.multi_reduction <maximumf>, %31, %cst_15 [1] : vector<16x16xf32> to vector<16xf32>
    %33 = vector.shape_cast %32 : vector<16xf32> to vector<16x1xf32>
    %34 = vector.broadcast %33 : vector<16x1xf32> to vector<16x16xf32>
    %35 = arith.subf %31, %34 : vector<16x16xf32>
    %36 = math.exp %35 : vector<16x16xf32>
    %cst_16 = arith.constant dense<0.000000e+00> : vector<16xf32>
    %37 = vector.multi_reduction <add>, %36, %cst_16 [1] : vector<16x16xf32> to vector<16xf32>
    %38 = vector.shape_cast %37 : vector<16xf32> to vector<16x1xf32>
    %39 = vector.broadcast %38 : vector<16x1xf32> to vector<16x16xf32>
    %40 = arith.divf %36, %39 : vector<16x16xf32>
    %cst_17 = arith.constant dense<0.000000e+00> : vector<16x32xf32>
    %41 = tpu.matmul %40, %30, %cst_17 {dimension_numbers = #tpu.dot_dimension_numbers<[1], [0], [0], [1], [0, 0, 1, 1], [], []>} : vector<16x16xf32>, vector<16x32xf32>, vector<16x32xf32> -> vector<16x32xf32>
    %42 = vector.extract_strided_slice %25 {offsets = [0, 32], sizes = [16, 32], strides = [1, 1]} : vector<16x384xf32> to vector<16x32xf32>
    %cst_18 = arith.constant 0.176776692 : f32
    %43 = vector.broadcast %cst_18 : f32 to vector<16x32xf32>
    %44 = arith.mulf %42, %43 : vector<16x32xf32>
    %45 = vector.extract_strided_slice %25 {offsets = [0, 160], sizes = [16, 32], strides = [1, 1]} : vector<16x384xf32> to vector<16x32xf32>
    %46 = vector.extract_strided_slice %25 {offsets = [0, 288], sizes = [16, 32], strides = [1, 1]} : vector<16x384xf32> to vector<16x32xf32>
    %cst_19 = arith.constant dense<0.000000e+00> : vector<16x16xf32>
    %47 = tpu.matmul %44, %45, %cst_19 {dimension_numbers = #tpu.dot_dimension_numbers<[1], [1], [0], [0], [0, 0, 1, 0], [], []>} : vector<16x32xf32>, vector<16x32xf32>, vector<16x16xf32> -> vector<16x16xf32>
    %cst_20 = arith.constant dense<0xFF800000> : vector<16xf32>
    %48 = vector.multi_reduction <maximumf>, %47, %cst_20 [1] : vector<16x16xf32> to vector<16xf32>
    %49 = vector.shape_cast %48 : vector<16xf32> to vector<16x1xf32>
    %50 = vector.broadcast %49 : vector<16x1xf32> to vector<16x16xf32>
    %51 = arith.subf %47, %50 : vector<16x16xf32>
    %52 = math.exp %51 : vector<16x16xf32>
    %cst_21 = arith.constant dense<0.000000e+00> : vector<16xf32>
    %53 = vector.multi_reduction <add>, %52, %cst_21 [1] : vector<16x16xf32> to vector<16xf32>
    %54 = vector.shape_cast %53 : vector<16xf32> to vector<16x1xf32>
    %55 = vector.broadcast %54 : vector<16x1xf32> to vector<16x16xf32>
    %56 = arith.divf %52, %55 : vector<16x16xf32>
    %cst_22 = arith.constant dense<0.000000e+00> : vector<16x32xf32>
    %57 = tpu.matmul %56, %46, %cst_22 {dimension_numbers = #tpu.dot_dimension_numbers<[1], [0], [0], [1], [0, 0, 1, 1], [], []>} : vector<16x16xf32>, vector<16x32xf32>, vector<16x32xf32> -> vector<16x32xf32>
    %58 = vector.extract_strided_slice %25 {offsets = [0, 64], sizes = [16, 32], strides = [1, 1]} : vector<16x384xf32> to vector<16x32xf32>
    %cst_23 = arith.constant 0.176776692 : f32
    %59 = vector.broadcast %cst_23 : f32 to vector<16x32xf32>
    %60 = arith.mulf %58, %59 : vector<16x32xf32>
    %61 = vector.extract_strided_slice %25 {offsets = [0, 192], sizes = [16, 32], strides = [1, 1]} : vector<16x384xf32> to vector<16x32xf32>
    %62 = vector.extract_strided_slice %25 {offsets = [0, 320], sizes = [16, 32], strides = [1, 1]} : vector<16x384xf32> to vector<16x32xf32>
    %cst_24 = arith.constant dense<0.000000e+00> : vector<16x16xf32>
    %63 = tpu.matmul %60, %61, %cst_24 {dimension_numbers = #tpu.dot_dimension_numbers<[1], [1], [0], [0], [0, 0, 1, 0], [], []>} : vector<16x32xf32>, vector<16x32xf32>, vector<16x16xf32> -> vector<16x16xf32>
    %cst_25 = arith.constant dense<0xFF800000> : vector<16xf32>
    %64 = vector.multi_reduction <maximumf>, %63, %cst_25 [1] : vector<16x16xf32> to vector<16xf32>
    %65 = vector.shape_cast %64 : vector<16xf32> to vector<16x1xf32>
    %66 = vector.broadcast %65 : vector<16x1xf32> to vector<16x16xf32>
    %67 = arith.subf %63, %66 : vector<16x16xf32>
    %68 = math.exp %67 : vector<16x16xf32>
    %cst_26 = arith.constant dense<0.000000e+00> : vector<16xf32>
    %69 = vector.multi_reduction <add>, %68, %cst_26 [1] : vector<16x16xf32> to vector<16xf32>
    %70 = vector.shape_cast %69 : vector<16xf32> to vector<16x1xf32>
    %71 = vector.broadcast %70 : vector<16x1xf32> to vector<16x16xf32>
    %72 = arith.divf %68, %71 : vector<16x16xf32>
    %cst_27 = arith.constant dense<0.000000e+00> : vector<16x32xf32>
    %73 = tpu.matmul %72, %62, %cst_27 {dimension_numbers = #tpu.dot_dimension_numbers<[1], [0], [0], [1], [0, 0, 1, 1], [], []>} : vector<16x16xf32>, vector<16x32xf32>, vector<16x32xf32> -> vector<16x32xf32>
    %74 = vector.extract_strided_slice %25 {offsets = [0, 96], sizes = [16, 32], strides = [1, 1]} : vector<16x384xf32> to vector<16x32xf32>
    %cst_28 = arith.constant 0.176776692 : f32
    %75 = vector.broadcast %cst_28 : f32 to vector<16x32xf32>
    %76 = arith.mulf %74, %75 : vector<16x32xf32>
    %77 = vector.extract_strided_slice %25 {offsets = [0, 224], sizes = [16, 32], strides = [1, 1]} : vector<16x384xf32> to vector<16x32xf32>
    %78 = vector.extract_strided_slice %25 {offsets = [0, 352], sizes = [16, 32], strides = [1, 1]} : vector<16x384xf32> to vector<16x32xf32>
    %cst_29 = arith.constant dense<0.000000e+00> : vector<16x16xf32>
    %79 = tpu.matmul %76, %77, %cst_29 {dimension_numbers = #tpu.dot_dimension_numbers<[1], [1], [0], [0], [0, 0, 1, 0], [], []>} : vector<16x32xf32>, vector<16x32xf32>, vector<16x16xf32> -> vector<16x16xf32>
    %cst_30 = arith.constant dense<0xFF800000> : vector<16xf32>
    %80 = vector.multi_reduction <maximumf>, %79, %cst_30 [1] : vector<16x16xf32> to vector<16xf32>
    %81 = vector.shape_cast %80 : vector<16xf32> to vector<16x1xf32>
    %82 = vector.broadcast %81 : vector<16x1xf32> to vector<16x16xf32>
    %83 = arith.subf %79, %82 : vector<16x16xf32>
    %84 = math.exp %83 : vector<16x16xf32>
    %cst_31 = arith.constant dense<0.000000e+00> : vector<16xf32>
    %85 = vector.multi_reduction <add>, %84, %cst_31 [1] : vector<16x16xf32> to vector<16xf32>
    %86 = vector.shape_cast %85 : vector<16xf32> to vector<16x1xf32>
    %87 = vector.broadcast %86 : vector<16x1xf32> to vector<16x16xf32>
    %88 = arith.divf %84, %87 : vector<16x16xf32>
    %cst_32 = arith.constant dense<0.000000e+00> : vector<16x32xf32>
    %89 = tpu.matmul %88, %78, %cst_32 {dimension_numbers = #tpu.dot_dimension_numbers<[1], [0], [0], [1], [0, 0, 1, 1], [], []>} : vector<16x16xf32>, vector<16x32xf32>, vector<16x32xf32> -> vector<16x32xf32>
    %90 = tpu.concatenate %41, %57, %73, %89 in 1 : vector<16x32xf32>, vector<16x32xf32>, vector<16x32xf32>, vector<16x32xf32> -> vector<16x128xf32>
    %c0_33 = arith.constant 0 : index
    %c0_34 = arith.constant 0 : index
    %91 = vector.load %arg5[%c0_33, %c0_34] : memref<128x128xf32, #tpu.memory_space<vmem>>, vector<128x128xf32>
    %cst_35 = arith.constant dense<0.000000e+00> : vector<16x128xf32>
    %92 = tpu.matmul %90, %91, %cst_35 {dimension_numbers = #tpu.dot_dimension_numbers<[1], [0], [0], [1], [0, 0, 1, 1], [], []>} : vector<16x128xf32>, vector<128x128xf32>, vector<16x128xf32> -> vector<16x128xf32>
    %c0_36 = arith.constant 0 : index
    %c0_37 = arith.constant 0 : index
    %93 = vector.load %arg6[%c0_36, %c0_37] : memref<1x128xf32, #tpu.memory_space<vmem>>, vector<1x128xf32>
    %94 = vector.broadcast %93 : vector<1x128xf32> to vector<16x128xf32>
    %95 = arith.addf %92, %94 : vector<16x128xf32>
    %96 = arith.addf %1, %95 : vector<16x128xf32>
    %c0_38 = arith.constant 0 : index
    %c0_39 = arith.constant 0 : index
    %97 = vector.load %arg7[%c0_38, %c0_39] : memref<1x128xf32, #tpu.memory_space<vmem>>, vector<1x128xf32>
    %c0_40 = arith.constant 0 : index
    %c0_41 = arith.constant 0 : index
    %98 = vector.load %arg8[%c0_40, %c0_41] : memref<1x128xf32, #tpu.memory_space<vmem>>, vector<1x128xf32>
    %cst_42 = arith.constant dense<0.000000e+00> : vector<16xf32>
    %99 = vector.multi_reduction <add>, %96, %cst_42 [1] : vector<16x128xf32> to vector<16xf32>
    %100 = vector.shape_cast %99 : vector<16xf32> to vector<16x1xf32>
    %cst_43 = arith.constant 1.280000e+02 : f32
    %101 = vector.broadcast %cst_43 : f32 to vector<16x1xf32>
    %102 = arith.divf %100, %101 : vector<16x1xf32>
    %103 = vector.broadcast %102 : vector<16x1xf32> to vector<16x128xf32>
    %104 = arith.subf %96, %103 : vector<16x128xf32>
    %105 = arith.mulf %104, %104 : vector<16x128xf32>
    %cst_44 = arith.constant dense<0.000000e+00> : vector<16xf32>
    %106 = vector.multi_reduction <add>, %105, %cst_44 [1] : vector<16x128xf32> to vector<16xf32>
    %107 = vector.shape_cast %106 : vector<16xf32> to vector<16x1xf32>
    %cst_45 = arith.constant 1.280000e+02 : f32
    %108 = vector.broadcast %cst_45 : f32 to vector<16x1xf32>
    %109 = arith.divf %107, %108 : vector<16x1xf32>
    %cst_46 = arith.constant 9.99999974E-6 : f32
    %110 = vector.broadcast %cst_46 : f32 to vector<16x1xf32>
    %111 = arith.addf %109, %110 : vector<16x1xf32>
    %112 = math.rsqrt %111 : vector<16x1xf32>
    %113 = vector.broadcast %112 : vector<16x1xf32> to vector<16x128xf32>
    %114 = arith.mulf %104, %113 : vector<16x128xf32>
    %115 = vector.broadcast %97 : vector<1x128xf32> to vector<16x128xf32>
    %116 = arith.mulf %114, %115 : vector<16x128xf32>
    %117 = vector.broadcast %98 : vector<1x128xf32> to vector<16x128xf32>
    %118 = arith.addf %116, %117 : vector<16x128xf32>
    %c0_47 = arith.constant 0 : index
    %c0_48 = arith.constant 0 : index
    %119 = vector.load %arg9[%c0_47, %c0_48] : memref<128x512xf32, #tpu.memory_space<vmem>>, vector<128x512xf32>
    %cst_49 = arith.constant dense<0.000000e+00> : vector<16x512xf32>
    %120 = tpu.matmul %118, %119, %cst_49 {dimension_numbers = #tpu.dot_dimension_numbers<[1], [0], [0], [1], [0, 0, 1, 1], [], []>} : vector<16x128xf32>, vector<128x512xf32>, vector<16x512xf32> -> vector<16x512xf32>
    %c0_50 = arith.constant 0 : index
    %c0_51 = arith.constant 0 : index
    %121 = vector.load %arg10[%c0_50, %c0_51] : memref<1x512xf32, #tpu.memory_space<vmem>>, vector<1x512xf32>
    %122 = vector.broadcast %121 : vector<1x512xf32> to vector<16x512xf32>
    %123 = arith.addf %120, %122 : vector<16x512xf32>
    %cst_52 = arith.constant 5.000000e-01 : f32
    %124 = vector.broadcast %cst_52 : f32 to vector<16x512xf32>
    %125 = arith.mulf %124, %123 : vector<16x512xf32>
    %cst_53 = arith.constant 0.707106769 : f32
    %126 = vector.broadcast %cst_53 : f32 to vector<16x512xf32>
    %127 = arith.mulf %123, %126 : vector<16x512xf32>
    %cst_54 = arith.constant 0.000000e+00 : f32
    %128 = vector.broadcast %cst_54 : f32 to vector<16x512xf32>
    %129 = arith.cmpf oge, %127, %128 : vector<16x512xf32>
    %cst_55 = arith.constant 1.000000e+00 : f32
    %cst_56 = arith.constant -1.000000e+00 : f32
    %130 = vector.broadcast %cst_55 : f32 to vector<16x512xf32>
    %131 = vector.broadcast %cst_56 : f32 to vector<16x512xf32>
    %132 = arith.select %129, %130, %131 : vector<16x512xi1>, vector<16x512xf32>
    %133 = math.absf %127 : vector<16x512xf32>
    %cst_57 = arith.constant 0.327591091 : f32
    %134 = vector.broadcast %cst_57 : f32 to vector<16x512xf32>
    %135 = arith.mulf %134, %133 : vector<16x512xf32>
    %cst_58 = arith.constant 1.000000e+00 : f32
    %136 = vector.broadcast %cst_58 : f32 to vector<16x512xf32>
    %137 = arith.addf %136, %135 : vector<16x512xf32>
    %cst_59 = arith.constant 1.000000e+00 : f32
    %138 = vector.broadcast %cst_59 : f32 to vector<16x512xf32>
    %139 = arith.divf %138, %137 : vector<16x512xf32>
    %cst_60 = arith.constant 1.06140542 : f32
    %140 = vector.broadcast %cst_60 : f32 to vector<16x512xf32>
    %141 = arith.mulf %140, %139 : vector<16x512xf32>
    %cst_61 = arith.constant -1.45315206 : f32
    %142 = vector.broadcast %cst_61 : f32 to vector<16x512xf32>
    %143 = arith.addf %141, %142 : vector<16x512xf32>
    %144 = arith.mulf %143, %139 : vector<16x512xf32>
    %cst_62 = arith.constant 1.42141378 : f32
    %145 = vector.broadcast %cst_62 : f32 to vector<16x512xf32>
    %146 = arith.addf %144, %145 : vector<16x512xf32>
    %147 = arith.mulf %146, %139 : vector<16x512xf32>
    %cst_63 = arith.constant -0.284496725 : f32
    %148 = vector.broadcast %cst_63 : f32 to vector<16x512xf32>
    %149 = arith.addf %147, %148 : vector<16x512xf32>
    %150 = arith.mulf %149, %139 : vector<16x512xf32>
    %cst_64 = arith.constant 0.254829586 : f32
    %151 = vector.broadcast %cst_64 : f32 to vector<16x512xf32>
    %152 = arith.addf %150, %151 : vector<16x512xf32>
    %153 = arith.mulf %152, %139 : vector<16x512xf32>
    %cst_65 = arith.constant 0.000000e+00 : f32
    %154 = vector.broadcast %cst_65 : f32 to vector<16x512xf32>
    %155 = arith.subf %154, %133 : vector<16x512xf32>
    %156 = arith.mulf %155, %133 : vector<16x512xf32>
    %157 = math.exp %156 : vector<16x512xf32>
    %158 = arith.mulf %153, %157 : vector<16x512xf32>
    %cst_66 = arith.constant 1.000000e+00 : f32
    %159 = vector.broadcast %cst_66 : f32 to vector<16x512xf32>
    %160 = arith.subf %159, %158 : vector<16x512xf32>
    %161 = arith.mulf %132, %160 : vector<16x512xf32>
    %cst_67 = arith.constant 1.000000e+00 : f32
    %162 = vector.broadcast %cst_67 : f32 to vector<16x512xf32>
    %163 = arith.addf %162, %161 : vector<16x512xf32>
    %164 = arith.mulf %125, %163 : vector<16x512xf32>
    %c0_68 = arith.constant 0 : index
    %c0_69 = arith.constant 0 : index
    %165 = vector.load %arg11[%c0_68, %c0_69] : memref<512x128xf32, #tpu.memory_space<vmem>>, vector<512x128xf32>
    %cst_70 = arith.constant dense<0.000000e+00> : vector<16x128xf32>
    %166 = tpu.matmul %164, %165, %cst_70 {dimension_numbers = #tpu.dot_dimension_numbers<[1], [0], [0], [1], [0, 0, 1, 1], [], []>} : vector<16x512xf32>, vector<512x128xf32>, vector<16x128xf32> -> vector<16x128xf32>
    %c0_71 = arith.constant 0 : index
    %c0_72 = arith.constant 0 : index
    %167 = vector.load %arg12[%c0_71, %c0_72] : memref<1x128xf32, #tpu.memory_space<vmem>>, vector<1x128xf32>
    %168 = vector.broadcast %167 : vector<1x128xf32> to vector<16x128xf32>
    %169 = arith.addf %166, %168 : vector<16x128xf32>
    %170 = arith.addf %96, %169 : vector<16x128xf32>
    %c0_73 = arith.constant 0 : index
    %c0_74 = arith.constant 0 : index
    %c0_75 = arith.constant 0 : index
    %171 = vector.load %arg13[%c0_73, %c0_74, %c0_75] : memref<1x16x128xf32, #tpu.memory_space<vmem>>, vector<1x16x128xf32>
    %172 = vector.shape_cast %171 : vector<1x16x128xf32> to vector<16x128xf32>
    %173 = vector.shape_cast %170 : vector<16x128xf32> to vector<1x16x128xf32>
    tpu.vector_store %arg13[%c0_73, %c0_74, %c0_75], %173 {strides = array<i32>} : memref<1x16x128xf32, #tpu.memory_space<vmem>>, vector<1x16x128xf32>,
    return
  }
  func.func @transform_0(%arg0: i32) -> (i32, i32, i32) {
    %c0_i32 = arith.constant 0 : i32
    %c0_i32_0 = arith.constant 0 : i32
    %c0_i32_1 = arith.constant 0 : i32
    return %arg0, %c0_i32, %c0_i32_0 : i32, i32, i32
  }
  func.func @transform_1(%arg0: i32) -> (i32, i32) {
    %c0_i32 = arith.constant 0 : i32
    %c0_i32_0 = arith.constant 0 : i32
    %c0_i32_1 = arith.constant 0 : i32
    return %c0_i32, %c0_i32_0 : i32, i32
  }
  func.func @transform_2(%arg0: i32) -> (i32, i32) {
    %c0_i32 = arith.constant 0 : i32
    %c0_i32_0 = arith.constant 0 : i32
    %c0_i32_1 = arith.constant 0 : i32
    return %c0_i32, %c0_i32_0 : i32, i32
  }
  func.func @transform_3(%arg0: i32) -> (i32, i32) {
    %c0_i32 = arith.constant 0 : i32
    %c0_i32_0 = arith.constant 0 : i32
    %c0_i32_1 = arith.constant 0 : i32
    return %c0_i32, %c0_i32_0 : i32, i32
  }
  func.func @transform_4(%arg0: i32) -> (i32, i32) {
    %c0_i32 = arith.constant 0 : i32
    %c0_i32_0 = arith.constant 0 : i32
    %c0_i32_1 = arith.constant 0 : i32
    return %c0_i32, %c0_i32_0 : i32, i32
  }
  func.func @transform_5(%arg0: i32) -> (i32, i32) {
    %c0_i32 = arith.constant 0 : i32
    %c0_i32_0 = arith.constant 0 : i32
    %c0_i32_1 = arith.constant 0 : i32
    return %c0_i32, %c0_i32_0 : i32, i32
  }
  func.func @transform_6(%arg0: i32) -> (i32, i32) {
    %c0_i32 = arith.constant 0 : i32
    %c0_i32_0 = arith.constant 0 : i32
    %c0_i32_1 = arith.constant 0 : i32
    return %c0_i32, %c0_i32_0 : i32, i32
  }
  func.func @transform_7(%arg0: i32) -> (i32, i32) {
    %c0_i32 = arith.constant 0 : i32
    %c0_i32_0 = arith.constant 0 : i32
    %c0_i32_1 = arith.constant 0 : i32
    return %c0_i32, %c0_i32_0 : i32, i32
  }
  func.func @transform_8(%arg0: i32) -> (i32, i32) {
    %c0_i32 = arith.constant 0 : i32
    %c0_i32_0 = arith.constant 0 : i32
    %c0_i32_1 = arith.constant 0 : i32
    return %c0_i32, %c0_i32_0 : i32, i32
  }
  func.func @transform_9(%arg0: i32) -> (i32, i32) {
    %c0_i32 = arith.constant 0 : i32
    %c0_i32_0 = arith.constant 0 : i32
    %c0_i32_1 = arith.constant 0 : i32
    return %c0_i32, %c0_i32_0 : i32, i32
  }
  func.func @transform_10(%arg0: i32) -> (i32, i32) {
    %c0_i32 = arith.constant 0 : i32
    %c0_i32_0 = arith.constant 0 : i32
    %c0_i32_1 = arith.constant 0 : i32
    return %c0_i32, %c0_i32_0 : i32, i32
  }
  func.func @transform_11(%arg0: i32) -> (i32, i32) {
    %c0_i32 = arith.constant 0 : i32
    %c0_i32_0 = arith.constant 0 : i32
    %c0_i32_1 = arith.constant 0 : i32
    return %c0_i32, %c0_i32_0 : i32, i32
  }
  func.func @transform_12(%arg0: i32) -> (i32, i32, i32) {
    %c0_i32 = arith.constant 0 : i32
    %c0_i32_0 = arith.constant 0 : i32
    %c0_i32_1 = arith.constant 0 : i32
    return %arg0, %c0_i32, %c0_i32_0 : i32, i32, i32
  }
}

module attributes {stable_mosaic.version = 11 : i64} {
  func.func @_final_norm_mean_kernel(%arg0: i32, %arg1: memref<1x16x128xf32, #tpu.memory_space<vmem>>, %arg2: memref<1x128xf32, #tpu.memory_space<vmem>>, %arg3: memref<1x128xf32, #tpu.memory_space<vmem>>, %arg4: memref<1x1x128xf32, #tpu.memory_space<vmem>>) attributes {dimension_semantics = [#tpu.dimension_semantics<parallel>], iteration_bounds = array<i64: 2>, scalar_prefetch = 0 : i64, scratch_operands = 0 : i64, tpu.core_type = #tpu.core_type<tc>, window_params = [{transform_indices = @transform_0, window_bounds = array<i64: 1, 16, 128>}, {pipeline_mode = #tpu.pipeline_mode<synchronous>, transform_indices = @transform_1, window_bounds = array<i64: 1, 128>}, {pipeline_mode = #tpu.pipeline_mode<synchronous>, transform_indices = @transform_2, window_bounds = array<i64: 1, 128>}, {transform_indices = @transform_3, window_bounds = array<i64: 1, 1, 128>}]} {
    %c0 = arith.constant 0 : index
    %c0_0 = arith.constant 0 : index
    %c0_1 = arith.constant 0 : index
    %0 = vector.load %arg1[%c0, %c0_0, %c0_1] : memref<1x16x128xf32, #tpu.memory_space<vmem>>, vector<1x16x128xf32>
    %1 = vector.shape_cast %0 : vector<1x16x128xf32> to vector<16x128xf32>
    %c0_2 = arith.constant 0 : index
    %c0_3 = arith.constant 0 : index
    %2 = vector.load %arg2[%c0_2, %c0_3] : memref<1x128xf32, #tpu.memory_space<vmem>>, vector<1x128xf32>
    %c0_4 = arith.constant 0 : index
    %c0_5 = arith.constant 0 : index
    %3 = vector.load %arg3[%c0_4, %c0_5] : memref<1x128xf32, #tpu.memory_space<vmem>>, vector<1x128xf32>
    %cst = arith.constant dense<0.000000e+00> : vector<16xf32>
    %4 = vector.multi_reduction <add>, %1, %cst [1] : vector<16x128xf32> to vector<16xf32>
    %5 = vector.shape_cast %4 : vector<16xf32> to vector<16x1xf32>
    %cst_6 = arith.constant 1.280000e+02 : f32
    %6 = vector.broadcast %cst_6 : f32 to vector<16x1xf32>
    %7 = arith.divf %5, %6 : vector<16x1xf32>
    %8 = vector.broadcast %7 : vector<16x1xf32> to vector<16x128xf32>
    %9 = arith.subf %1, %8 : vector<16x128xf32>
    %10 = arith.mulf %9, %9 : vector<16x128xf32>
    %cst_7 = arith.constant dense<0.000000e+00> : vector<16xf32>
    %11 = vector.multi_reduction <add>, %10, %cst_7 [1] : vector<16x128xf32> to vector<16xf32>
    %12 = vector.shape_cast %11 : vector<16xf32> to vector<16x1xf32>
    %cst_8 = arith.constant 1.280000e+02 : f32
    %13 = vector.broadcast %cst_8 : f32 to vector<16x1xf32>
    %14 = arith.divf %12, %13 : vector<16x1xf32>
    %cst_9 = arith.constant 9.99999974E-6 : f32
    %15 = vector.broadcast %cst_9 : f32 to vector<16x1xf32>
    %16 = arith.addf %14, %15 : vector<16x1xf32>
    %17 = math.rsqrt %16 : vector<16x1xf32>
    %18 = vector.broadcast %17 : vector<16x1xf32> to vector<16x128xf32>
    %19 = arith.mulf %9, %18 : vector<16x128xf32>
    %20 = vector.broadcast %2 : vector<1x128xf32> to vector<16x128xf32>
    %21 = arith.mulf %19, %20 : vector<16x128xf32>
    %22 = vector.broadcast %3 : vector<1x128xf32> to vector<16x128xf32>
    %23 = arith.addf %21, %22 : vector<16x128xf32>
    %cst_10 = arith.constant dense<0.000000e+00> : vector<128xf32>
    %24 = vector.multi_reduction <add>, %23, %cst_10 [0] : vector<16x128xf32> to vector<128xf32>
    %25 = vector.shape_cast %24 : vector<128xf32> to vector<1x128xf32>
    %cst_11 = arith.constant 6.250000e-02 : f32
    %26 = vector.broadcast %cst_11 : f32 to vector<1x128xf32>
    %27 = arith.mulf %25, %26 : vector<1x128xf32>
    %c0_12 = arith.constant 0 : index
    %c0_13 = arith.constant 0 : index
    %c0_14 = arith.constant 0 : index
    %28 = vector.load %arg4[%c0_12, %c0_13, %c0_14] : memref<1x1x128xf32, #tpu.memory_space<vmem>>, vector<1x1x128xf32>
    %29 = vector.shape_cast %28 : vector<1x1x128xf32> to vector<1x128xf32>
    %30 = vector.shape_cast %27 : vector<1x128xf32> to vector<1x1x128xf32>
    tpu.vector_store %arg4[%c0_12, %c0_13, %c0_14], %30 {strides = array<i32>} : memref<1x1x128xf32, #tpu.memory_space<vmem>>, vector<1x1x128xf32>,
    return
  }
  func.func @transform_0(%arg0: i32) -> (i32, i32, i32) {
    %c0_i32 = arith.constant 0 : i32
    %c0_i32_0 = arith.constant 0 : i32
    %c0_i32_1 = arith.constant 0 : i32
    return %arg0, %c0_i32, %c0_i32_0 : i32, i32, i32
  }
  func.func @transform_1(%arg0: i32) -> (i32, i32) {
    %c0_i32 = arith.constant 0 : i32
    %c0_i32_0 = arith.constant 0 : i32
    %c0_i32_1 = arith.constant 0 : i32
    return %c0_i32, %c0_i32_0 : i32, i32
  }
  func.func @transform_2(%arg0: i32) -> (i32, i32) {
    %c0_i32 = arith.constant 0 : i32
    %c0_i32_0 = arith.constant 0 : i32
    %c0_i32_1 = arith.constant 0 : i32
    return %c0_i32, %c0_i32_0 : i32, i32
  }
  func.func @transform_3(%arg0: i32) -> (i32, i32, i32) {
    %c0_i32 = arith.constant 0 : i32
    %c0_i32_0 = arith.constant 0 : i32
    %c0_i32_1 = arith.constant 0 : i32
    return %arg0, %c0_i32, %c0_i32_0 : i32, i32, i32
  }
}

</mosaic_0001>

<llo_original>
// kernel: _vit_forward.4
$region0: #{_vit_forward.4}
  #allocation0 [shape = 'u32[]', space=smem, size = 0x4, offset = 0x4, fixed_abs, tag = 'smem constant byte address 0x4 - core index']
  #allocation1 [shape = 'u32[144,128]{1,0:T(1,128)}', space=vmem, size = 0x12000, scoped, tag = 'internal scratch']
  %s0 = inlined_call_operand.vmem [shape: f32[2,16,64], index: 0, kind: input, shape index: {}]
  %s1 = inlined_call_operand.vmem [shape: f32[64,128], index: 1, kind: input, shape index: {}]
  %s2 = inlined_call_operand.vmem [shape: f32[1,128], index: 2, kind: input, shape index: {}]
  %s3 = inlined_call_operand.vmem [shape: f32[16,128], index: 3, kind: input, shape index: {}]
  %s4 = inlined_call_operand.vmem [shape: f32[2,16,128], index: 4, kind: output, shape index: {}]
  %s5 = sld [smem:[#allocation0]]
  $region49: #{_vit_forward.4} parent=0
    _
  %s7 = ssub.s32 1, %s5
  %s8 = scalar_select 0, %s7, %s5
  loop: start=0, step=1, limit=4
  $region2: #{_vit_forward.4} parent=0 // loop_pre_header
    _
  $region3: #{_vit_forward.4} parent=0 // loop_header
    %s10 = sphi 0, %s14
    %p11 = scmp.ge.s32.totalorder %s10, 4
    %s20 = sphi 0, %s22
    %s23 = sphi 0, %s20
    %s24 = sphi 0, %s23
    %s40 = sphi 0, %s24
    %s44 = sphi 0, %s44
    %s46 = sphi 0, %s44
    %s47 = sphi 0, %s46
    %s61 = sphi 0, %s47
    %s65 = sphi 0, %s65
    %s67 = sphi 0, %s65
    %s68 = sphi 0, %s67
    %s82 = sphi 0, %s68
    %s86 = sphi 0, %s86
    %s88 = sphi 0, %s86
    %s89 = sphi 0, %s88
    %s103 = sphi 0, %s89
    %s109 = sphi 0, %s111
    %s112 = sphi 0, %s109
    %s113 = sphi 0, %s112
    %s129 = sphi 0, %s113
  $region4: #{_vit_forward.4} parent=0 // loop_header_branch
    %13 = sbr.rel (%p11) target = $region8
  $region5: #{_vit_forward.4} parent=0 // loop_body
    %s15 = ssub.s32 %s10, 1
    %s16 = ssub.s32 %s10, 2
    %s17 = sadd.s32 %s10, 1
    %s18 = ssub.s32 %s10, %s17
    %p19 = scmp.eq.s32.totalorder %s18, 0
    %s21 = sadd.s32 %s20, 1
    %s22 = scalar_select %p19, %s20, %s21
    %p25 = pneg %p19
    %p26 = scmp.eq.s32.totalorder %s10, 1
    %p27 = por %p25, %p26
    %p28 = scmp.ne.s32.totalorder %s20, %s23
    %p29 = scmp.eq.s32.totalorder %s10, 0
    %p30 = por %p28, %p29
    %p31 = scmp.ne.s32.totalorder %s20, %s23
    %p32 = scmp.eq.s32.totalorder %s15, 1
    %p33 = por %p31, %p32
    %p34 = scmp.ne.s32.totalorder %s23, %s24
    %p35 = scmp.eq.s32.totalorder %s15, 0
    %p36 = por %p34, %p35
    %p37 = scmp.ne.s32.totalorder %s23, %s24
    %p38 = scmp.eq.s32.totalorder %s16, 1
    %p39 = por %p37, %p38
    %p41 = scmp.ne.s32.totalorder %s24, %s40
    %p42 = scmp.eq.s32.totalorder %s16, 0
    %p43 = por %p41, %p42
    %s45 = sadd.s32 %s44, 1
    %p48 = scmp.eq.s32.totalorder %s10, 1
    %p49 = scmp.ne.s32.totalorder %s44, %s46
    %p50 = scmp.eq.s32.totalorder %s10, 0
    %p51 = por %p49, %p50
    %p52 = scmp.ne.s32.totalorder %s44, %s46
    %p53 = scmp.eq.s32.totalorder %s15, 1
    %p54 = por %p52, %p53
    %p55 = scmp.ne.s32.totalorder %s46, %s47
    %p56 = scmp.eq.s32.totalorder %s15, 0
    %p57 = por %p55, %p56
    %p58 = scmp.ne.s32.totalorder %s46, %s47
    %p59 = scmp.eq.s32.totalorder %s16, 1
    %p60 = por %p58, %p59
    %p62 = scmp.ne.s32.totalorder %s47, %s61
    %p63 = scmp.eq.s32.totalorder %s16, 0
    %p64 = por %p62, %p63
    %s66 = sadd.s32 %s65, 1
    %p69 = scmp.eq.s32.totalorder %s10, 1
    %p70 = scmp.ne.s32.totalorder %s65, %s67
    %p71 = scmp.eq.s32.totalorder %s10, 0
    %p72 = por %p70, %p71
    %p73 = scmp.ne.s32.totalorder %s65, %s67
    %p74 = scmp.eq.s32.totalorder %s15, 1
    %p75 = por %p73, %p74
    %p76 = scmp.ne.s32.totalorder %s67, %s68
    %p77 = scmp.eq.s32.totalorder %s15, 0
    %p78 = por %p76, %p77
    %p79 = scmp.ne.s32.totalorder %s67, %s68
    %p80 = scmp.eq.s32.totalorder %s16, 1
    %p81 = por %p79, %p80
    %p83 = scmp.ne.s32.totalorder %s68, %s82
    %p84 = scmp.eq.s32.totalorder %s16, 0
    %p85 = por %p83, %p84
    %s87 = sadd.s32 %s86, 1
    %p90 = scmp.eq.s32.totalorder %s10, 1
    %p91 = scmp.ne.s32.totalorder %s86, %s88
    %p92 = scmp.eq.s32.totalorder %s10, 0
    %p93 = por %p91, %p92
    %p94 = scmp.ne.s32.totalorder %s86, %s88
    %p95 = scmp.eq.s32.totalorder %s15, 1
    %p96 = por %p94, %p95
    %p97 = scmp.ne.s32.totalorder %s88, %s89
    %p98 = scmp.eq.s32.totalorder %s15, 0
    %p99 = por %p97, %p98
    %p100 = scmp.ne.s32.totalorder %s88, %s89
    %p101 = scmp.eq.s32.totalorder %s16, 1
    %p102 = por %p100, %p101
    %p104 = scmp.ne.s32.totalorder %s89, %s103
    %p105 = scmp.eq.s32.totalorder %s16, 0
    %p106 = por %p104, %p105
    %s107 = ssub.s32 %s10, %s17
    %p108 = scmp.eq.s32.totalorder %s107, 0
    %s110 = sadd.s32 %s109, 1
    %s111 = scalar_select %p108, %s109, %s110
    %p114 = pneg %p108
    %p115 = scmp.eq.s32.totalorder %s10, 1
    %p116 = por %p114, %p115
    %p117 = scmp.ne.s32.totalorder %s109, %s112
    %p118 = scmp.eq.s32.totalorder %s10, 0
    %p119 = por %p117, %p118
    %p120 = scmp.ne.s32.totalorder %s109, %s112
    %p121 = scmp.eq.s32.totalorder %s15, 1
    %p122 = por %p120, %p121
    %p123 = scmp.ne.s32.totalorder %s112, %s113
    %p124 = scmp.eq.s32.totalorder %s15, 0
    %p125 = por %p123, %p124
    %p126 = scmp.ne.s32.totalorder %s112, %s113
    %p127 = scmp.eq.s32.totalorder %s16, 1
    %p128 = por %p126, %p127
    %p130 = scmp.ne.s32.totalorder %s113, %s129
    %p131 = scmp.eq.s32.totalorder %s16, 0
    %p132 = por %p130, %p131
    %p133 = scmp.le.s32.totalorder 1, %s10
    %p134 = scmp.lt.s32.totalorder %s10, 3
    %p135 = pnand %p133, %p134
    %p136 = pneg %p135
    // Predicated region
    $region9: #{_vit_forward.4} parent=5 // pred_check
      _
    $region10: #{_vit_forward.4} parent=5 // pred_check_branch
      %138 = sbr.rel (%p135) target = $region12
    $region11: #{_vit_forward.4} parent=5 // pred_region
      %s139 = ssub.s32 %s10, 1
      // Predicated region
      $region13: #{_vit_forward.4} parent=11 // pred_check
        %p140 = pneg %p57
      $region14: #{_vit_forward.4} parent=11 // pred_check_branch
        %142 = sbr.rel (%p140) target = $region16
      $region15: #{_vit_forward.4} parent=11 // pred_region
        _
      $region16: #{_vit_forward.4} parent=11 // pred_fallthru
        _
      // Predicated region
      $region17: #{_vit_forward.4} parent=11 // pred_check
        %p143 = pneg %p78
      $region18: #{_vit_forward.4} parent=11 // pred_check_branch
        %145 = sbr.rel (%p143) target = $region20
      $region19: #{_vit_forward.4} parent=11 // pred_region
        _
      $region20: #{_vit_forward.4} parent=11 // pred_fallthru
        _
      // Predicated region
      $region21: #{_vit_forward.4} parent=11 // pred_check
        %p146 = pneg %p99
      $region22: #{_vit_forward.4} parent=11 // pred_check_branch
        %148 = sbr.rel (%p146) target = $region24
      $region23: #{_vit_forward.4} parent=11 // pred_region
        _
      $region24: #{_vit_forward.4} parent=11 // pred_fallthru
        _
    $region12: #{_vit_forward.4} parent=5 // pred_fallthru
      _
    %p149 = scmp.lt.s32.totalorder %s10, 2
    // Predicated region
    $region25: #{_vit_forward.4} parent=5 // pred_check
      %p150 = pneg %p149
    $region26: #{_vit_forward.4} parent=5 // pred_check_branch
      %152 = sbr.rel (%p150) target = $region28
    $region27: #{_vit_forward.4} parent=5 // pred_region
      // Predicated region
      $region29: #{_vit_forward.4} parent=27 // pred_check
        %p153 = pneg %p30
      $region30: #{_vit_forward.4} parent=27 // pred_check_branch
        %155 = sbr.rel (%p153) target = $region32
      $region31: #{_vit_forward.4} parent=27 // pred_region
        %p156 = scmp.lt.s32.totalorder %s10, 1
        %s157 = scalar_select %p156, %s10, 1
        %s158 = smul.addr %s157, 2
        %s159 = smul.addr %s158, 8
        %s160 = scalar_lea.vmem %s0, %s159
      $region32: #{_vit_forward.4} parent=27 // pred_fallthru
        _
    $region28: #{_vit_forward.4} parent=5 // pred_fallthru
      _
    %p161 = scmp.le.s32.totalorder 1, %s10
    %p162 = scmp.lt.s32.totalorder %s10, 3
    %p163 = pnand %p161, %p162
    %p164 = pneg %p163
    // Predicated region
    $region33: #{_vit_forward.4} parent=5 // pred_check
      _
    $region34: #{_vit_forward.4} parent=5 // pred_check_branch
      %166 = sbr.rel (%p163) target = $region36
    $region35: #{_vit_forward.4} parent=5 // pred_region
      %s167 = ssub.s32 %s10, 1
      %p168 = scmp.lt.s32.totalorder %s15, 1
      %s169 = scalar_select %p168, %s15, 1
      %s170 = smul.addr %s169, 2
      %s171 = smul.addr %s170, 8
      %s172 = scalar_lea.vmem %s0, %s171
      %p173 = pneg %p36
      %p174 = pneg %p33
      %p175 = pneg %p57
      %p176 = pneg %p54
      %p177 = pneg %p78
      %p178 = pneg %p75
      %p179 = pneg %p99
      %p180 = pneg %p96
      %p181 = pneg %p125
      %p182 = pneg %p122
      %p183 = scmp.lt.s32.totalorder %s15, 1
      %s184 = scalar_select %p183, %s15, 1
      %s185 = smul.addr %s184, 2
      %s186 = smul.addr %s185, 8
      %s187 = scalar_lea.vmem %s4, %s186
      %p188 = scmp.lt.s32.totalorder %s15, 1
      %s189 = scalar_select %p188, %s15, 1
      %s190 = smul.addr %s189, 2
      %s191 = smul.addr %s190, 8
      %s192 = scalar_lea.vmem %s0, %s191
      %p193 = scmp.lt.s32.totalorder %s15, 1
      %s194 = scalar_select %p193, %s15, 1
      %s195 = smul.addr %s194, 2
      %s196 = smul.addr %s195, 8
      %s197 = scalar_lea.vmem %s4, %s196
      %v198 = vld [vmem:[%s192] sm:$0xff]
      %v199 = vld [vmem:[%s192 + $0x8] sm:$0xff]
      %v200 = vmul.f32 %v198, 0.003921569
      %v201 = vmul.f32 %v199, 0.003921569
      %v202 = vld [vmem:[%s1] sm:$0xff]
      %v203 = vld [vmem:[%s1 + $0x8] sm:$0xff]
      %v204 = vld [vmem:[%s1 + $0x10] sm:$0xff]
      %v205 = vld [vmem:[%s1 + $0x18] sm:$0xff]
      %v206 = vld [vmem:[%s1 + $0x20] sm:$0xff]
      %v207 = vld [vmem:[%s1 + $0x28] sm:$0xff]
      %v208 = vld [vmem:[%s1 + $0x30] sm:$0xff]
      %v209 = vld [vmem:[%s1 + $0x38] sm:$0xff]
      %v210 = vld [vmem:[%s2] sm:$0x1]
      %v212 = vlaneseq
      %v213 = vshrl.u32 %v212, 7
      %v214 = vsub.s32 0, %v213
      %v215 = vrot.slane %v210, %v214
      %vm217 = vcmask 523264
      %v219 = vsel %vm217, %v200, 0
      %v222 = vsel %vm217, %v201, 0
      %224 = vmatprep.subr.mxu0 0.0
      %225 = vmatpush1.msra.mxu0 %v202
      %226 = vmatprep.subr.mxu0 0.0
      %227 = vmatpush1.msra.mxu0 %v203
      %228 = vmatprep.subr.mxu0 0.0
      %229 = vmatpush1.msra.mxu0 %v204
      %230 = vmatprep.subr.mxu0 0.0
      %231 = vmatpush1.msra.mxu0 %v205
      %232 = vmatprep.subr.mxu0 0.0
      %233 = vmatpush1.msra.mxu0 %v206
      %234 = vmatprep.subr.mxu0 0.0
      %235 = vmatpush1.msra.mxu0 %v207
      %236 = vmatprep.subr.mxu0 0.0
      %237 = vmatpush1.msra.mxu0 %v208
      %238 = vmatprep.subr.mxu0 0.0
      %239 = vmatpush1.msra.mxu0 %v209
      %240 = vmatprep.subr.mxu0 0.0
      %241 = vmatpush1.msra.mxu0 0.0
      %242 = vmatprep.subr.mxu0 0.0
      %243 = vmatpush1.msra.mxu0 0.0
      %244 = vmatprep.subr.mxu0 0.0
      %245 = vmatpush1.msra.mxu0 0.0
      %246 = vmatprep.subr.mxu0 0.0
      %247 = vmatpush1.msra.mxu0 0.0
      %248 = vmatprep.subr.mxu0 0.0
      %249 = vmatpush1.msra.mxu0 0.0
      %250 = vmatprep.subr.mxu0 0.0
      %251 = vmatpush1.msra.mxu0 0.0
      %252 = vmatprep.subr.mxu0 0.0
      %253 = vmatpush1.msra.mxu0 0.0
      %254 = vmatprep.subr.mxu0 0.0
      %255 = vmatpush1.msra.mxu0 0.0
      %256 = vmatprep.subr.mxu0 0.0
      %257 = vmatpush1.msra.mxu0 0.0
      %258 = vmatprep.subr.mxu0 0.0
      %259 = vmatpush1.msra.mxu0 0.0
      %260 = vmatprep.subr.mxu0 0.0
      %261 = vmatpush1.msra.mxu0 0.0
      %262 = vmatprep.subr.mxu0 0.0
      %263 = vmatpush1.msra.mxu0 0.0
      %264 = vmatprep.subr.mxu0 0.0
      %265 = vmatpush1.msra.mxu0 0.0
      %266 = vmatprep.subr.mxu0 0.0
      %267 = vmatpush1.msra.mxu0 0.0
      %268 = vmatprep.subr.mxu0 0.0
      %269 = vmatpush1.msra.mxu0 0.0
      %270 = vmatprep.subr.mxu0 0.0
      %271 = vmatpush1.msra.mxu0 0.0
      %272 = vmatprep.subr.mxu0 0.0
      %273 = vmatpush1.msra.mxu0 0.0
      %274 = vmatprep.subr.mxu0 0.0
      %275 = vmatpush1.msra.mxu0 0.0
      %276 = vmatprep.subr.mxu0 0.0
      %277 = vmatpush1.msra.mxu0 0.0
      %278 = vmatprep.subr.mxu0 0.0
      %279 = vmatpush1.msra.mxu0 0.0
      %280 = vmatprep.subr.mxu0 0.0
      %281 = vmatpush1.msra.mxu0 0.0
      %282 = vmatprep.subr.mxu0 0.0
      %283 = vmatpush1.msra.mxu0 0.0
      %284 = vmatprep.subr.mxu0 0.0
      %285 = vmatpush1.msra.mxu0 0.0
      %286 = vmatprep.subr.mxu0 0.0
      %287 = vmatpush1.msra.mxu0 0.0
      %288 = vmatprep.mubr.f32.mxu0 0.0
      %289 = vmatmul.mubr.f32.gmra.mrb[0].mxu0 %v219
      %v290 = vpop.f32.mrb[0].mxu0
      %v291 = vadd.f32 %v215, %v290
      %v292 = vpop.f32.mrb[0].mxu0
      %293 = vmatprep.mubr.f32.mxu0 0.0
      %294 = vmatmul.mubr.f32.gmra.mrb[0].mxu0 %v222
      %v295 = vpop.f32.mrb[0].mxu0
      %v296 = vadd.f32 %v215, %v295
      %v297 = vpop.f32.mrb[0].mxu0
      %298 = vdwg.mxu0
      %v299 = vld [vmem:[%s3] sm:$0xff]
      %v300 = vld [vmem:[%s3 + $0x8] sm:$0xff]
      %v301 = vadd.f32 %v291, %v299
      %v302 = vadd.f32 %v296, %v300
      %303 = vst [vmem:[%s197] sm:$0xff] %v301
      %304 = vst [vmem:[%s197 + $0x8] sm:$0xff] %v302
      %p305 = scmp.lt.s32.totalorder %s15, 1
      %s306 = scalar_select %p305, %s15, 1
      %s307 = smul.addr %s306, 2
      %s308 = smul.addr %s307, 8
      %s309 = scalar_lea.vmem %s4, %s308
      // Predicated region
      $region37: #{_vit_forward.4} parent=35 // pred_check
        %p310 = pneg %p122
      $region38: #{_vit_forward.4} parent=35 // pred_check_branch
        %312 = sbr.rel (%p310) target = $region40
      $region39: #{_vit_forward.4} parent=35 // pred_region
        _
      $region40: #{_vit_forward.4} parent=35 // pred_fallthru
        _
    $region36: #{_vit_forward.4} parent=5 // pred_fallthru
      _
    %p313 = scmp.le.s32.totalorder 2, %s10
    // Predicated region
    $region41: #{_vit_forward.4} parent=5 // pred_check
      %p314 = pneg %p313
    $region42: #{_vit_forward.4} parent=5 // pred_check_branch
      %316 = sbr.rel (%p314) target = $region44
    $region43: #{_vit_forward.4} parent=5 // pred_region
      %s317 = ssub.s32 %s10, 2
      // Predicated region
      $region45: #{_vit_forward.4} parent=43 // pred_check
        %p318 = pneg %p128
      $region46: #{_vit_forward.4} parent=43 // pred_check_branch
        %320 = sbr.rel (%p318) target = $region48
      $region47: #{_vit_forward.4} parent=43 // pred_region
        %p321 = scmp.lt.s32.totalorder %s16, 1
        %s322 = scalar_select %p321, %s16, 1
        %s323 = smul.addr %s322, 2
        %s324 = smul.addr %s323, 8
        %s325 = scalar_lea.vmem %s4, %s324
      $region48: #{_vit_forward.4} parent=43 // pred_fallthru
        _
    $region44: #{_vit_forward.4} parent=5 // pred_fallthru
      _
  $region6: #{_vit_forward.4} parent=0 // loop_footer
    %s14 = sadd.s32 1, %s10
  $region7: #{_vit_forward.4} parent=0 // loop_footer_branch
    %9 = sbr.rel target = $region3
  $region8: #{_vit_forward.4} parent=0 // loop_exit
    _

// kernel: _vit_forward.7
$region0: #{_vit_forward.7}
  #allocation0 [shape = 'u32[]', space=smem, size = 0x4, offset = 0x4, fixed_abs, tag = 'smem constant byte address 0x4 - core index']
  #allocation1 [shape = 'u32[144,128]{1,0:T(1,128)}', space=vmem, size = 0x12000, scoped, tag = 'internal scratch']
  %s0 = inlined_call_operand.vmem [shape: f32[2,16,128], index: 0, kind: input, shape index: {}]
  %s1 = inlined_call_operand.vmem [shape: f32[1,128], index: 1, kind: input, shape index: {}]
  %s2 = inlined_call_operand.vmem [shape: f32[1,128], index: 2, kind: input, shape index: {}]
  %s3 = inlined_call_operand.hbm [shape: f32[2,1,128], index: 3, kind: output, shape index: {}]
  %s4 = sld [smem:[#allocation0]]
  $region45: #{_vit_forward.7} parent=0
    _
  %s6 = ssub.s32 1, %s4
  %s7 = scalar_select 0, %s6, %s4
  $region1: #{_vit_forward.7} parent=0
    #allocation2 [shape = 'u8[1024]{0}', space=vmem, size = 0x400, scoped, tag = 'output window, operand 0']
    #allocation3 [shape = 's32[2]{0}', space=sflag, size = 0x8, scoped, tag = 'scoped memory for _vit_forward.7']
    %8 = vsyncpa [#allocation3], 0
    %s9 = scalar_lea.sflag [#allocation3], 1
    %10 = vsyncpa %s9, 0
    loop: start=0, step=1, limit=4
    $region2: #{_vit_forward.7} parent=1 // loop_pre_header
      _
    $region3: #{_vit_forward.7} parent=1 // loop_header
      %s12 = sphi 0, %s16
      %p13 = scmp.ge.s32.totalorder %s12, 4
      %s22 = sphi 0, %s24
      %s25 = sphi 0, %s22
      %s26 = sphi 0, %s25
      %s42 = sphi 0, %s26
      %s46 = sphi 0, %s46
      %s48 = sphi 0, %s46
      %s49 = sphi 0, %s48
      %s63 = sphi 0, %s49
      %s67 = sphi 0, %s67
      %s69 = sphi 0, %s67
      %s70 = sphi 0, %s69
      %s84 = sphi 0, %s70
      %s90 = sphi 0, %s92
      %s93 = sphi 0, %s90
      %s94 = sphi 0, %s93
      %s110 = sphi 0, %s94
    $region4: #{_vit_forward.7} parent=1 // loop_header_branch
      %15 = sbr.rel (%p13) target = $region8
    $region5: #{_vit_forward.7} parent=1 // loop_body
      %s17 = ssub.s32 %s12, 1
      %s18 = ssub.s32 %s12, 2
      %s19 = sadd.s32 %s12, 1
      %s20 = ssub.s32 %s12, %s19
      %p21 = scmp.eq.s32.totalorder %s20, 0
      %s23 = sadd.s32 %s22, 1
      %s24 = scalar_select %p21, %s22, %s23
      %p27 = pneg %p21
      %p28 = scmp.eq.s32.totalorder %s12, 1
      %p29 = por %p27, %p28
      %p30 = scmp.ne.s32.totalorder %s22, %s25
      %p31 = scmp.eq.s32.totalorder %s12, 0
      %p32 = por %p30, %p31
      %p33 = scmp.ne.s32.totalorder %s22, %s25
      %p34 = scmp.eq.s32.totalorder %s17, 1
      %p35 = por %p33, %p34
      %p36 = scmp.ne.s32.totalorder %s25, %s26
      %p37 = scmp.eq.s32.totalorder %s17, 0
      %p38 = por %p36, %p37
      %p39 = scmp.ne.s32.totalorder %s25, %s26
      %p40 = scmp.eq.s32.totalorder %s18, 1
      %p41 = por %p39, %p40
      %p43 = scmp.ne.s32.totalorder %s26, %s42
      %p44 = scmp.eq.s32.totalorder %s18, 0
      %p45 = por %p43, %p44
      %s47 = sadd.s32 %s46, 1
      %p50 = scmp.eq.s32.totalorder %s12, 1
      %p51 = scmp.ne.s32.totalorder %s46, %s48
      %p52 = scmp.eq.s32.totalorder %s12, 0
      %p53 = por %p51, %p52
      %p54 = scmp.ne.s32.totalorder %s46, %s48
      %p55 = scmp.eq.s32.totalorder %s17, 1
      %p56 = por %p54, %p55
      %p57 = scmp.ne.s32.totalorder %s48, %s49
      %p58 = scmp.eq.s32.totalorder %s17, 0
      %p59 = por %p57, %p58
      %p60 = scmp.ne.s32.totalorder %s48, %s49
      %p61 = scmp.eq.s32.totalorder %s18, 1
      %p62 = por %p60, %p61
      %p64 = scmp.ne.s32.totalorder %s49, %s63
      %p65 = scmp.eq.s32.totalorder %s18, 0
      %p66 = por %p64, %p65
      %s68 = sadd.s32 %s67, 1
      %p71 = scmp.eq.s32.totalorder %s12, 1
      %p72 = scmp.ne.s32.totalorder %s67, %s69
      %p73 = scmp.eq.s32.totalorder %s12, 0
      %p74 = por %p72, %p73
      %p75 = scmp.ne.s32.totalorder %s67, %s69
      %p76 = scmp.eq.s32.totalorder %s17, 1
      %p77 = por %p75, %p76
      %p78 = scmp.ne.s32.totalorder %s69, %s70
      %p79 = scmp.eq.s32.totalorder %s17, 0
      %p80 = por %p78, %p79
      %p81 = scmp.ne.s32.totalorder %s69, %s70
      %p82 = scmp.eq.s32.totalorder %s18, 1
      %p83 = por %p81, %p82
      %p85 = scmp.ne.s32.totalorder %s70, %s84
      %p86 = scmp.eq.s32.totalorder %s18, 0
      %p87 = por %p85, %p86
      %s88 = ssub.s32 %s12, %s19
      %p89 = scmp.eq.s32.totalorder %s88, 0
      %s91 = sadd.s32 %s90, 1
      %s92 = scalar_select %p89, %s90, %s91
      %p95 = pneg %p89
      %p96 = scmp.eq.s32.totalorder %s12, 1
      %p97 = por %p95, %p96
      %p98 = scmp.ne.s32.totalorder %s90, %s93
      %p99 = scmp.eq.s32.totalorder %s12, 0
      %p100 = por %p98, %p99
      %p101 = scmp.ne.s32.totalorder %s90, %s93
      %p102 = scmp.eq.s32.totalorder %s17, 1
      %p103 = por %p101, %p102
      %p104 = scmp.ne.s32.totalorder %s93, %s94
      %p105 = scmp.eq.s32.totalorder %s17, 0
      %p106 = por %p104, %p105
      %p107 = scmp.ne.s32.totalorder %s93, %s94
      %p108 = scmp.eq.s32.totalorder %s18, 1
      %p109 = por %p107, %p108
      %p111 = scmp.ne.s32.totalorder %s94, %s110
      %p112 = scmp.eq.s32.totalorder %s18, 0
      %p113 = por %p111, %p112
      %p114 = scmp.le.s32.totalorder 1, %s12
      %p115 = scmp.lt.s32.totalorder %s12, 3
      %p116 = pnand %p114, %p115
      %p117 = pneg %p116
      // Predicated region
      $region9: #{_vit_forward.7} parent=5 // pred_check
        _
      $region10: #{_vit_forward.7} parent=5 // pred_check_branch
        %119 = sbr.rel (%p116) target = $region12
      $region11: #{_vit_forward.7} parent=5 // pred_region
        %s120 = ssub.s32 %s12, 1
        // Predicated region
        $region13: #{_vit_forward.7} parent=11 // pred_check
          %p121 = pneg %p59
        $region14: #{_vit_forward.7} parent=11 // pred_check_branch
          %123 = sbr.rel (%p121) target = $region16
        $region15: #{_vit_forward.7} parent=11 // pred_region
          _
        $region16: #{_vit_forward.7} parent=11 // pred_fallthru
          _
        // Predicated region
        $region17: #{_vit_forward.7} parent=11 // pred_check
          %p124 = pneg %p80
        $region18: #{_vit_forward.7} parent=11 // pred_check_branch
          %126 = sbr.rel (%p124) target = $region20
        $region19: #{_vit_forward.7} parent=11 // pred_region
          _
        $region20: #{_vit_forward.7} parent=11 // pred_fallthru
          _
      $region12: #{_vit_forward.7} parent=5 // pred_fallthru
        _
      %p127 = scmp.lt.s32.totalorder %s12, 2
      // Predicated region
      $region21: #{_vit_forward.7} parent=5 // pred_check
        %p128 = pneg %p127
      $region22: #{_vit_forward.7} parent=5 // pred_check_branch
        %130 = sbr.rel (%p128) target = $region24
      $region23: #{_vit_forward.7} parent=5 // pred_region
        // Predicated region
        $region25: #{_vit_forward.7} parent=23 // pred_check
          %p131 = pneg %p32
        $region26: #{_vit_forward.7} parent=23 // pred_check_branch
          %133 = sbr.rel (%p131) target = $region28
        $region27: #{_vit_forward.7} parent=23 // pred_region
          %p134 = scmp.lt.s32.totalorder %s12, 1
          %s135 = scalar_select %p134, %s12, 1
          %s136 = smul.addr %s135, 2
          %s137 = smul.addr %s136, 8
          %s138 = scalar_lea.vmem %s0, %s137
        $region28: #{_vit_forward.7} parent=23 // pred_fallthru
          _
      $region24: #{_vit_forward.7} parent=5 // pred_fallthru
        _
      %p139 = scmp.le.s32.totalorder 1, %s12
      %p140 = scmp.lt.s32.totalorder %s12, 3
      %p141 = pnand %p139, %p140
      %p142 = pneg %p141
      // Predicated region
      $region29: #{_vit_forward.7} parent=5 // pred_check
        _
      $region30: #{_vit_forward.7} parent=5 // pred_check_branch
        %144 = sbr.rel (%p141) target = $region32
      $region31: #{_vit_forward.7} parent=5 // pred_region
        %s145 = ssub.s32 %s12, 1
        %p146 = scmp.lt.s32.totalorder %s17, 1
        %s147 = scalar_select %p146, %s17, 1
        %s148 = smul.addr %s147, 2
        %s149 = smul.addr %s148, 8
        %s150 = scalar_lea.vmem %s0, %s149
        %p151 = pneg %p38
        %p152 = pneg %p35
        %p153 = pneg %p59
        %p154 = pneg %p56
        %p155 = pneg %p80
        %p156 = pneg %p77
        %p157 = pneg %p106
        %p158 = pneg %p103
        %s159 = sand.u32 %s93, 1
        %s160 = scalar_lea.sflag [#allocation3], %s159
        %s161 = sand.u32 %s93, 1
        %s162 = scalar_lea.vmem [#allocation2], %s161
        %p163 = scmp.lt.s32.totalorder %s17, 1
        %s164 = scalar_select %p163, %s17, 1
        %s165 = smul.addr %s164, 2
        %s166 = smul.addr %s165, 8
        %s167 = scalar_lea.vmem %s0, %s166
        %v168 = vld [vmem:[%s167] sm:$0xff]
        %v169 = vld [vmem:[%s167 + $0x8] sm:$0xff]
        %v170 = vld [vmem:[%s1] sm:$0x1]
        %v171 = vld [vmem:[%s2] sm:$0x1]
        %172 = vadd.xlane.f32.xlu0 %v168
        %v173 = vpop.xlane.xlu0 %172
        %174 = vadd.xlane.f32.xlu0 %v169
        %v175 = vpop.xlane.xlu0 %174
        %v176 = vrcp.pop 128.0
        %v177 = vmul.f32 %v173, %v176
        %v178 = vmul.f32 %v175, %v176
        %v179 = vsub.f32 %v168, %v177
        %v180 = vsub.f32 %v169, %v178
        %v181 = vmul.f32 %v179, %v179
        %v182 = vmul.f32 %v180, %v180
        %183 = vadd.xlane.f32.xlu0 %v181
        %v184 = vpop.xlane.xlu0 %183
        %185 = vadd.xlane.f32.xlu0 %v182
        %v186 = vpop.xlane.xlu0 %185
        %v187 = vmul.f32 %v184, %v176
        %v188 = vmul.f32 %v186, %v176
        %v189 = vadd.f32 %v187, 1e-05
        %v190 = vadd.f32 %v188, 1e-05
        %v191 = vrsqrt.pop %v189
        %v192 = vrsqrt.pop %v190
        %v193 = vmul.f32 %v179, %v191
        %v194 = vmul.f32 %v180, %v192
        %v196 = vlaneseq
        %v197 = vshrl.u32 %v196, 7
        %v198 = vsub.s32 0, %v197
        %v199 = vrot.slane %v170, %v198
        %v201 = vmul.f32 %v193, %v199
        %v202 = vmul.f32 %v194, %v199
        %v204 = vlaneseq
        %v205 = vshrl.u32 %v204, 7
        %v206 = vsub.s32 0, %v205
        %v207 = vrot.slane %v171, %v206
        %v209 = vadd.f32 %v201, %v207
        %v210 = vadd.f32 %v202, %v207
        %v211 = vadd.f32 %v209, %v210
        %v212 = vrot.slane %v211, 4
        %v213 = vadd.f32 %v211, %v212
        %v214 = vrot.slane %v213, 2
        %v215 = vadd.f32 %v213, %v214
        %v216 = vrot.slane %v215, 1
        %v217 = vadd.f32 %v215, %v216
        %v218 = vmul.f32 %v217, 0.0625
        %219 = vst [vmem:[%s162] sm:$0x1] %v218
        %s220 = sand.u32 %s93, 1
        %s221 = scalar_lea.sflag [#allocation3], %s220
        %s222 = sand.u32 %s93, 1
        %s223 = scalar_lea.vmem [#allocation2], %s222
        // Predicated region
        $region33: #{_vit_forward.7} parent=31 // pred_check
          %p224 = pneg %p103
        $region34: #{_vit_forward.7} parent=31 // pred_check_branch
          %226 = sbr.rel (%p224) target = $region36
        $region35: #{_vit_forward.7} parent=31 // pred_region
          %s228 = ssub.s32 16, 16
          %229 = vsyncadd %s221, %s228
          %s230 = smul.addr %s17, 16
          %s231 = scalar_lea.hbm %s3, %s230
          %s233 = sshll.u32 %s223, 4
          %s234 = int_to_ptr.vmem [resolvable:$true] %s233
          %236 = dma.vmem_to_hbm [thread:$0]  %s234, 16, %s231, %s221
        $region36: #{_vit_forward.7} parent=31 // pred_fallthru
          _
      $region32: #{_vit_forward.7} parent=5 // pred_fallthru
        _
      %p237 = scmp.le.s32.totalorder 2, %s12
      // Predicated region
      $region37: #{_vit_forward.7} parent=5 // pred_check
        %p238 = pneg %p237
      $region38: #{_vit_forward.7} parent=5 // pred_check_branch
        %240 = sbr.rel (%p238) target = $region40
      $region39: #{_vit_forward.7} parent=5 // pred_region
        %s241 = ssub.s32 %s12, 2
        // Predicated region
        $region41: #{_vit_forward.7} parent=39 // pred_check
          %p242 = pneg %p109
        $region42: #{_vit_forward.7} parent=39 // pred_check_branch
          %244 = sbr.rel (%p242) target = $region44
        $region43: #{_vit_forward.7} parent=39 // pred_region
          %s245 = sand.u32 %s94, 1
          %s246 = scalar_lea.sflag [#allocation3], %s245
          %s247 = sand.u32 %s94, 1
          %s248 = scalar_lea.vmem [#allocation2], %s247
          %249 = dma.done %s246, 16
        $region44: #{_vit_forward.7} parent=39 // pred_fallthru
          _
      $region40: #{_vit_forward.7} parent=5 // pred_fallthru
        _
    $region6: #{_vit_forward.7} parent=1 // loop_footer
      %s16 = sadd.s32 1, %s12
    $region7: #{_vit_forward.7} parent=1 // loop_footer_branch
      %11 = sbr.rel target = $region3
    $region8: #{_vit_forward.7} parent=1 // loop_exit
      _
    %250 = vsyncpa [#allocation3], 1
    %s251 = scalar_lea.sflag [#allocation3], 1
    %252 = vsyncpa %s251, 1

// kernel: _vit_forward.5
$region0: #{_vit_forward.5}
  #allocation0 [shape = 'u32[]', space=smem, size = 0x4, offset = 0x4, fixed_abs, tag = 'smem constant byte address 0x4 - core index']
  #allocation1 [shape = 'u32[144,128]{1,0:T(1,128)}', space=vmem, size = 0x12000, scoped, tag = 'internal scratch']
  %s0 = inlined_call_operand.vmem [shape: f32[2,16,128], index: 0, kind: input, shape index: {}, may-alias: {0,12}]
  %s1 = inlined_call_operand.vmem [shape: f32[1,128], index: 1, kind: input, shape index: {}]
  %s2 = inlined_call_operand.vmem [shape: f32[1,128], index: 2, kind: input, shape index: {}]
  %s3 = inlined_call_operand.vmem [shape: f32[128,384], index: 3, kind: input, shape index: {}]
  %s4 = inlined_call_operand.vmem [shape: f32[128,128], index: 4, kind: input, shape index: {}]
  %s5 = inlined_call_operand.vmem [shape: f32[1,128], index: 5, kind: input, shape index: {}]
  %s6 = inlined_call_operand.vmem [shape: f32[1,128], index: 6, kind: input, shape index: {}]
  %s7 = inlined_call_operand.vmem [shape: f32[1,128], index: 7, kind: input, shape index: {}]
  %s8 = inlined_call_operand.vmem [shape: f32[128,512], index: 8, kind: input, shape index: {}]
  %s9 = inlined_call_operand.vmem [shape: f32[1,512], index: 9, kind: input, shape index: {}]
  %s10 = inlined_call_operand.vmem [shape: f32[512,128], index: 10, kind: input, shape index: {}]
  %s11 = inlined_call_operand.vmem [shape: f32[1,128], index: 11, kind: input, shape index: {}]
  %s12 = inlined_call_operand.vmem [shape: f32[2,16,128], index: 12, kind: output, shape index: {}, may-alias: {0,12}]
  %s13 = sld [smem:[#allocation0]]
  $region81: #{_vit_forward.5} parent=0
    _
  %s15 = ssub.s32 1, %s13
  %s16 = scalar_select 0, %s15, %s13
  loop: start=0, step=1, limit=4
  $region2: #{_vit_forward.5} parent=0 // loop_pre_header
    _
  $region3: #{_vit_forward.5} parent=0 // loop_header
    %s18 = sphi 0, %s22
    %p19 = scmp.ge.s32.totalorder %s18, 4
    %s28 = sphi 0, %s30
    %s31 = sphi 0, %s28
    %s32 = sphi 0, %s31
    %s48 = sphi 0, %s32
    %s52 = sphi 0, %s52
    %s54 = sphi 0, %s52
    %s55 = sphi 0, %s54
    %s69 = sphi 0, %s55
    %s73 = sphi 0, %s73
    %s75 = sphi 0, %s73
    %s76 = sphi 0, %s75
    %s90 = sphi 0, %s76
    %s94 = sphi 0, %s94
    %s96 = sphi 0, %s94
    %s97 = sphi 0, %s96
    %s111 = sphi 0, %s97
    %s115 = sphi 0, %s115
    %s117 = sphi 0, %s115
    %s118 = sphi 0, %s117
    %s132 = sphi 0, %s118
    %s136 = sphi 0, %s136
    %s138 = sphi 0, %s136
    %s139 = sphi 0, %s138
    %s153 = sphi 0, %s139
    %s157 = sphi 0, %s157
    %s159 = sphi 0, %s157
    %s160 = sphi 0, %s159
    %s174 = sphi 0, %s160
    %s178 = sphi 0, %s178
    %s180 = sphi 0, %s178
    %s181 = sphi 0, %s180
    %s195 = sphi 0, %s181
    %s199 = sphi 0, %s199
    %s201 = sphi 0, %s199
    %s202 = sphi 0, %s201
    %s216 = sphi 0, %s202
    %s220 = sphi 0, %s220
    %s222 = sphi 0, %s220
    %s223 = sphi 0, %s222
    %s237 = sphi 0, %s223
    %s241 = sphi 0, %s241
    %s243 = sphi 0, %s241
    %s244 = sphi 0, %s243
    %s258 = sphi 0, %s244
    %s262 = sphi 0, %s262
    %s264 = sphi 0, %s262
    %s265 = sphi 0, %s264
    %s279 = sphi 0, %s265
    %s285 = sphi 0, %s287
    %s288 = sphi 0, %s285
    %s289 = sphi 0, %s288
    %s305 = sphi 0, %s289
  $region4: #{_vit_forward.5} parent=0 // loop_header_branch
    %21 = sbr.rel (%p19) target = $region8
  $region5: #{_vit_forward.5} parent=0 // loop_body
    %s23 = ssub.s32 %s18, 1
    %s24 = ssub.s32 %s18, 2
    %s25 = sadd.s32 %s18, 1
    %s26 = ssub.s32 %s18, %s25
    %p27 = scmp.eq.s32.totalorder %s26, 0
    %s29 = sadd.s32 %s28, 1
    %s30 = scalar_select %p27, %s28, %s29
    %p33 = pneg %p27
    %p34 = scmp.eq.s32.totalorder %s18, 1
    %p35 = por %p33, %p34
    %p36 = scmp.ne.s32.totalorder %s28, %s31
    %p37 = scmp.eq.s32.totalorder %s18, 0
    %p38 = por %p36, %p37
    %p39 = scmp.ne.s32.totalorder %s28, %s31
    %p40 = scmp.eq.s32.totalorder %s23, 1
    %p41 = por %p39, %p40
    %p42 = scmp.ne.s32.totalorder %s31, %s32
    %p43 = scmp.eq.s32.totalorder %s23, 0
    %p44 = por %p42, %p43
    %p45 = scmp.ne.s32.totalorder %s31, %s32
    %p46 = scmp.eq.s32.totalorder %s24, 1
    %p47 = por %p45, %p46
    %p49 = scmp.ne.s32.totalorder %s32, %s48
    %p50 = scmp.eq.s32.totalorder %s24, 0
    %p51 = por %p49, %p50
    %s53 = sadd.s32 %s52, 1
    %p56 = scmp.eq.s32.totalorder %s18, 1
    %p57 = scmp.ne.s32.totalorder %s52, %s54
    %p58 = scmp.eq.s32.totalorder %s18, 0
    %p59 = por %p57, %p58
    %p60 = scmp.ne.s32.totalorder %s52, %s54
    %p61 = scmp.eq.s32.totalorder %s23, 1
    %p62 = por %p60, %p61
    %p63 = scmp.ne.s32.totalorder %s54, %s55
    %p64 = scmp.eq.s32.totalorder %s23, 0
    %p65 = por %p63, %p64
    %p66 = scmp.ne.s32.totalorder %s54, %s55
    %p67 = scmp.eq.s32.totalorder %s24, 1
    %p68 = por %p66, %p67
    %p70 = scmp.ne.s32.totalorder %s55, %s69
    %p71 = scmp.eq.s32.totalorder %s24, 0
    %p72 = por %p70, %p71
    %s74 = sadd.s32 %s73, 1
    %p77 = scmp.eq.s32.totalorder %s18, 1
    %p78 = scmp.ne.s32.totalorder %s73, %s75
    %p79 = scmp.eq.s32.totalorder %s18, 0
    %p80 = por %p78, %p79
    %p81 = scmp.ne.s32.totalorder %s73, %s75
    %p82 = scmp.eq.s32.totalorder %s23, 1
    %p83 = por %p81, %p82
    %p84 = scmp.ne.s32.totalorder %s75, %s76
    %p85 = scmp.eq.s32.totalorder %s23, 0
    %p86 = por %p84, %p85
    %p87 = scmp.ne.s32.totalorder %s75, %s76
    %p88 = scmp.eq.s32.totalorder %s24, 1
    %p89 = por %p87, %p88
    %p91 = scmp.ne.s32.totalorder %s76, %s90
    %p92 = scmp.eq.s32.totalorder %s24, 0
    %p93 = por %p91, %p92
    %s95 = sadd.s32 %s94, 1
    %p98 = scmp.eq.s32.totalorder %s18, 1
    %p99 = scmp.ne.s32.totalorder %s94, %s96
    %p100 = scmp.eq.s32.totalorder %s18, 0
    %p101 = por %p99, %p100
    %p102 = scmp.ne.s32.totalorder %s94, %s96
    %p103 = scmp.eq.s32.totalorder %s23, 1
    %p104 = por %p102, %p103
    %p105 = scmp.ne.s32.totalorder %s96, %s97
    %p106 = scmp.eq.s32.totalorder %s23, 0
    %p107 = por %p105, %p106
    %p108 = scmp.ne.s32.totalorder %s96, %s97
    %p109 = scmp.eq.s32.totalorder %s24, 1
    %p110 = por %p108, %p109
    %p112 = scmp.ne.s32.totalorder %s97, %s111
    %p113 = scmp.eq.s32.totalorder %s24, 0
    %p114 = por %p112, %p113
    %s116 = sadd.s32 %s115, 1
    %p119 = scmp.eq.s32.totalorder %s18, 1
    %p120 = scmp.ne.s32.totalorder %s115, %s117
    %p121 = scmp.eq.s32.totalorder %s18, 0
    %p122 = por %p120, %p121
    %p123 = scmp.ne.s32.totalorder %s115, %s117
    %p124 = scmp.eq.s32.totalorder %s23, 1
    %p125 = por %p123, %p124
    %p126 = scmp.ne.s32.totalorder %s117, %s118
    %p127 = scmp.eq.s32.totalorder %s23, 0
    %p128 = por %p126, %p127
    %p129 = scmp.ne.s32.totalorder %s117, %s118
    %p130 = scmp.eq.s32.totalorder %s24, 1
    %p131 = por %p129, %p130
    %p133 = scmp.ne.s32.totalorder %s118, %s132
    %p134 = scmp.eq.s32.totalorder %s24, 0
    %p135 = por %p133, %p134
    %s137 = sadd.s32 %s136, 1
    %p140 = scmp.eq.s32.totalorder %s18, 1
    %p141 = scmp.ne.s32.totalorder %s136, %s138
    %p142 = scmp.eq.s32.totalorder %s18, 0
    %p143 = por %p141, %p142
    %p144 = scmp.ne.s32.totalorder %s136, %s138
    %p145 = scmp.eq.s32.totalorder %s23, 1
    %p146 = por %p144, %p145
    %p147 = scmp.ne.s32.totalorder %s138, %s139
    %p148 = scmp.eq.s32.totalorder %s23, 0
    %p149 = por %p147, %p148
    %p150 = scmp.ne.s32.totalorder %s138, %s139
    %p151 = scmp.eq.s32.totalorder %s24, 1
    %p152 = por %p150, %p151
    %p154 = scmp.ne.s32.totalorder %s139, %s153
    %p155 = scmp.eq.s32.totalorder %s24, 0
    %p156 = por %p154, %p155
    %s158 = sadd.s32 %s157, 1
    %p161 = scmp.eq.s32.totalorder %s18, 1
    %p162 = scmp.ne.s32.totalorder %s157, %s159
    %p163 = scmp.eq.s32.totalorder %s18, 0
    %p164 = por %p162, %p163
    %p165 = scmp.ne.s32.totalorder %s157, %s159
    %p166 = scmp.eq.s32.totalorder %s23, 1
    %p167 = por %p165, %p166
    %p168 = scmp.ne.s32.totalorder %s159, %s160
    %p169 = scmp.eq.s32.totalorder %s23, 0
    %p170 = por %p168, %p169
    %p171 = scmp.ne.s32.totalorder %s159, %s160
    %p172 = scmp.eq.s32.totalorder %s24, 1
    %p173 = por %p171, %p172
    %p175 = scmp.ne.s32.totalorder %s160, %s174
    %p176 = scmp.eq.s32.totalorder %s24, 0
    %p177 = por %p175, %p176
    %s179 = sadd.s32 %s178, 1
    %p182 = scmp.eq.s32.totalorder %s18, 1
    %p183 = scmp.ne.s32.totalorder %s178, %s180
    %p184 = scmp.eq.s32.totalorder %s18, 0
    %p185 = por %p183, %p184
    %p186 = scmp.ne.s32.totalorder %s178, %s180
    %p187 = scmp.eq.s32.totalorder %s23, 1
    %p188 = por %p186, %p187
    %p189 = scmp.ne.s32.totalorder %s180, %s181
    %p190 = scmp.eq.s32.totalorder %s23, 0
    %p191 = por %p189, %p190
    %p192 = scmp.ne.s32.totalorder %s180, %s181
    %p193 = scmp.eq.s32.totalorder %s24, 1
    %p194 = por %p192, %p193
    %p196 = scmp.ne.s32.totalorder %s181, %s195
    %p197 = scmp.eq.s32.totalorder %s24, 0
    %p198 = por %p196, %p197
    %s200 = sadd.s32 %s199, 1
    %p203 = scmp.eq.s32.totalorder %s18, 1
    %p204 = scmp.ne.s32.totalorder %s199, %s201
    %p205 = scmp.eq.s32.totalorder %s18, 0
    %p206 = por %p204, %p205
    %p207 = scmp.ne.s32.totalorder %s199, %s201
    %p208 = scmp.eq.s32.totalorder %s23, 1
    %p209 = por %p207, %p208
    %p210 = scmp.ne.s32.totalorder %s201, %s202
    %p211 = scmp.eq.s32.totalorder %s23, 0
    %p212 = por %p210, %p211
    %p213 = scmp.ne.s32.totalorder %s201, %s202
    %p214 = scmp.eq.s32.totalorder %s24, 1
    %p215 = por %p213, %p214
    %p217 = scmp.ne.s32.totalorder %s202, %s216
    %p218 = scmp.eq.s32.totalorder %s24, 0
    %p219 = por %p217, %p218
    %s221 = sadd.s32 %s220, 1
    %p224 = scmp.eq.s32.totalorder %s18, 1
    %p225 = scmp.ne.s32.totalorder %s220, %s222
    %p226 = scmp.eq.s32.totalorder %s18, 0
    %p227 = por %p225, %p226
    %p228 = scmp.ne.s32.totalorder %s220, %s222
    %p229 = scmp.eq.s32.totalorder %s23, 1
    %p230 = por %p228, %p229
    %p231 = scmp.ne.s32.totalorder %s222, %s223
    %p232 = scmp.eq.s32.totalorder %s23, 0
    %p233 = por %p231, %p232
    %p234 = scmp.ne.s32.totalorder %s222, %s223
    %p235 = scmp.eq.s32.totalorder %s24, 1
    %p236 = por %p234, %p235
    %p238 = scmp.ne.s32.totalorder %s223, %s237
    %p239 = scmp.eq.s32.totalorder %s24, 0
    %p240 = por %p238, %p239
    %s242 = sadd.s32 %s241, 1
    %p245 = scmp.eq.s32.totalorder %s18, 1
    %p246 = scmp.ne.s32.totalorder %s241, %s243
    %p247 = scmp.eq.s32.totalorder %s18, 0
    %p248 = por %p246, %p247
    %p249 = scmp.ne.s32.totalorder %s241, %s243
    %p250 = scmp.eq.s32.totalorder %s23, 1
    %p251 = por %p249, %p250
    %p252 = scmp.ne.s32.totalorder %s243, %s244
    %p253 = scmp.eq.s32.totalorder %s23, 0
    %p254 = por %p252, %p253
    %p255 = scmp.ne.s32.totalorder %s243, %s244
    %p256 = scmp.eq.s32.totalorder %s24, 1
    %p257 = por %p255, %p256
    %p259 = scmp.ne.s32.totalorder %s244, %s258
    %p260 = scmp.eq.s32.totalorder %s24, 0
    %p261 = por %p259, %p260
    %s263 = sadd.s32 %s262, 1
    %p266 = scmp.eq.s32.totalorder %s18, 1
    %p267 = scmp.ne.s32.totalorder %s262, %s264
    %p268 = scmp.eq.s32.totalorder %s18, 0
    %p269 = por %p267, %p268
    %p270 = scmp.ne.s32.totalorder %s262, %s264
    %p271 = scmp.eq.s32.totalorder %s23, 1
    %p272 = por %p270, %p271
    %p273 = scmp.ne.s32.totalorder %s264, %s265
    %p274 = scmp.eq.s32.totalorder %s23, 0
    %p275 = por %p273, %p274
    %p276 = scmp.ne.s32.totalorder %s264, %s265
    %p277 = scmp.eq.s32.totalorder %s24, 1
    %p278 = por %p276, %p277
    %p280 = scmp.ne.s32.totalorder %s265, %s279
    %p281 = scmp.eq.s32.totalorder %s24, 0
    %p282 = por %p280, %p281
    %s283 = ssub.s32 %s18, %s25
    %p284 = scmp.eq.s32.totalorder %s283, 0
    %s286 = sadd.s32 %s285, 1
    %s287 = scalar_select %p284, %s285, %s286
    %p290 = pneg %p284
    %p291 = scmp.eq.s32.totalorder %s18, 1
    %p292 = por %p290, %p291
    %p293 = scmp.ne.s32.totalorder %s285, %s288
    %p294 = scmp.eq.s32.totalorder %s18, 0
    %p295 = por %p293, %p294
    %p296 = scmp.ne.s32.totalorder %s285, %s288
    %p297 = scmp.eq.s32.totalorder %s23, 1
    %p298 = por %p296, %p297
    %p299 = scmp.ne.s32.totalorder %s288, %s289
    %p300 = scmp.eq.s32.totalorder %s23, 0
    %p301 = por %p299, %p300
    %p302 = scmp.ne.s32.totalorder %s288, %s289
    %p303 = scmp.eq.s32.totalorder %s24, 1
    %p304 = por %p302, %p303
    %p306 = scmp.ne.s32.totalorder %s289, %s305
    %p307 = scmp.eq.s32.totalorder %s24, 0
    %p308 = por %p306, %p307
    %p309 = scmp.le.s32.totalorder 1, %s18
    %p310 = scmp.lt.s32.totalorder %s18, 3
    %p311 = pnand %p309, %p310
    %p312 = pneg %p311
    // Predicated region
    $region9: #{_vit_forward.5} parent=5 // pred_check
      _
    $region10: #{_vit_forward.5} parent=5 // pred_check_branch
      %314 = sbr.rel (%p311) target = $region12
    $region11: #{_vit_forward.5} parent=5 // pred_region
      %s315 = ssub.s32 %s18, 1
      // Predicated region
      $region13: #{_vit_forward.5} parent=11 // pred_check
        %p316 = pneg %p65
      $region14: #{_vit_forward.5} parent=11 // pred_check_branch
        %318 = sbr.rel (%p316) target = $region16
      $region15: #{_vit_forward.5} parent=11 // pred_region
        _
      $region16: #{_vit_forward.5} parent=11 // pred_fallthru
        _
      // Predicated region
      $region17: #{_vit_forward.5} parent=11 // pred_check
        %p319 = pneg %p86
      $region18: #{_vit_forward.5} parent=11 // pred_check_branch
        %321 = sbr.rel (%p319) target = $region20
      $region19: #{_vit_forward.5} parent=11 // pred_region
        _
      $region20: #{_vit_forward.5} parent=11 // pred_fallthru
        _
      // Predicated region
      $region21: #{_vit_forward.5} parent=11 // pred_check
        %p322 = pneg %p107
      $region22: #{_vit_forward.5} parent=11 // pred_check_branch
        %324 = sbr.rel (%p322) target = $region24
      $region23: #{_vit_forward.5} parent=11 // pred_region
        _
      $region24: #{_vit_forward.5} parent=11 // pred_fallthru
        _
      // Predicated region
      $region25: #{_vit_forward.5} parent=11 // pred_check
        %p325 = pneg %p128
      $region26: #{_vit_forward.5} parent=11 // pred_check_branch
        %327 = sbr.rel (%p325) target = $region28
      $region27: #{_vit_forward.5} parent=11 // pred_region
        _
      $region28: #{_vit_forward.5} parent=11 // pred_fallthru
        _
      // Predicated region
      $region29: #{_vit_forward.5} parent=11 // pred_check
        %p328 = pneg %p149
      $region30: #{_vit_forward.5} parent=11 // pred_check_branch
        %330 = sbr.rel (%p328) target = $region32
      $region31: #{_vit_forward.5} parent=11 // pred_region
        _
      $region32: #{_vit_forward.5} parent=11 // pred_fallthru
        _
      // Predicated region
      $region33: #{_vit_forward.5} parent=11 // pred_check
        %p331 = pneg %p170
      $region34: #{_vit_forward.5} parent=11 // pred_check_branch
        %333 = sbr.rel (%p331) target = $region36
      $region35: #{_vit_forward.5} parent=11 // pred_region
        _
      $region36: #{_vit_forward.5} parent=11 // pred_fallthru
        _
      // Predicated region
      $region37: #{_vit_forward.5} parent=11 // pred_check
        %p334 = pneg %p191
      $region38: #{_vit_forward.5} parent=11 // pred_check_branch
        %336 = sbr.rel (%p334) target = $region40
      $region39: #{_vit_forward.5} parent=11 // pred_region
        _
      $region40: #{_vit_forward.5} parent=11 // pred_fallthru
        _
      // Predicated region
      $region41: #{_vit_forward.5} parent=11 // pred_check
        %p337 = pneg %p212
      $region42: #{_vit_forward.5} parent=11 // pred_check_branch
        %339 = sbr.rel (%p337) target = $region44
      $region43: #{_vit_forward.5} parent=11 // pred_region
        _
      $region44: #{_vit_forward.5} parent=11 // pred_fallthru
        _
      // Predicated region
      $region45: #{_vit_forward.5} parent=11 // pred_check
        %p340 = pneg %p233
      $region46: #{_vit_forward.5} parent=11 // pred_check_branch
        %342 = sbr.rel (%p340) target = $region48
      $region47: #{_vit_forward.5} parent=11 // pred_region
        _
      $region48: #{_vit_forward.5} parent=11 // pred_fallthru
        _
      // Predicated region
      $region49: #{_vit_forward.5} parent=11 // pred_check
        %p343 = pneg %p254
      $region50: #{_vit_forward.5} parent=11 // pred_check_branch
        %345 = sbr.rel (%p343) target = $region52
      $region51: #{_vit_forward.5} parent=11 // pred_region
        _
      $region52: #{_vit_forward.5} parent=11 // pred_fallthru
        _
      // Predicated region
      $region53: #{_vit_forward.5} parent=11 // pred_check
        %p346 = pneg %p275
      $region54: #{_vit_forward.5} parent=11 // pred_check_branch
        %348 = sbr.rel (%p346) target = $region56
      $region55: #{_vit_forward.5} parent=11 // pred_region
        _
      $region56: #{_vit_forward.5} parent=11 // pred_fallthru
        _
    $region12: #{_vit_forward.5} parent=5 // pred_fallthru
      _
    %p349 = scmp.lt.s32.totalorder %s18, 2
    // Predicated region
    $region57: #{_vit_forward.5} parent=5 // pred_check
      %p350 = pneg %p349
    $region58: #{_vit_forward.5} parent=5 // pred_check_branch
      %352 = sbr.rel (%p350) target = $region60
    $region59: #{_vit_forward.5} parent=5 // pred_region
      // Predicated region
      $region61: #{_vit_forward.5} parent=59 // pred_check
        %p353 = pneg %p38
      $region62: #{_vit_forward.5} parent=59 // pred_check_branch
        %355 = sbr.rel (%p353) target = $region64
      $region63: #{_vit_forward.5} parent=59 // pred_region
        %p356 = scmp.lt.s32.totalorder %s18, 1
        %s357 = scalar_select %p356, %s18, 1
        %s358 = smul.addr %s357, 2
        %s359 = smul.addr %s358, 8
        %s360 = scalar_lea.vmem %s0, %s359
      $region64: #{_vit_forward.5} parent=59 // pred_fallthru
        _
    $region60: #{_vit_forward.5} parent=5 // pred_fallthru
      _
    %p361 = scmp.le.s32.totalorder 1, %s18
    %p362 = scmp.lt.s32.totalorder %s18, 3
    %p363 = pnand %p361, %p362
    %p364 = pneg %p363
    // Predicated region
    $region65: #{_vit_forward.5} parent=5 // pred_check
      _
    $region66: #{_vit_forward.5} parent=5 // pred_check_branch
      %366 = sbr.rel (%p363) target = $region68
    $region67: #{_vit_forward.5} parent=5 // pred_region
      %s367 = ssub.s32 %s18, 1
      %p368 = scmp.lt.s32.totalorder %s23, 1
      %s369 = scalar_select %p368, %s23, 1
      %s370 = smul.addr %s369, 2
      %s371 = smul.addr %s370, 8
      %s372 = scalar_lea.vmem %s0, %s371
      %p373 = pneg %p44
      %p374 = pneg %p41
      %p375 = pneg %p65
      %p376 = pneg %p62
      %p377 = pneg %p86
      %p378 = pneg %p83
      %p379 = pneg %p107
      %p380 = pneg %p104
      %p381 = pneg %p128
      %p382 = pneg %p125
      %p383 = pneg %p149
      %p384 = pneg %p146
      %p385 = pneg %p170
      %p386 = pneg %p167
      %p387 = pneg %p191
      %p388 = pneg %p188
      %p389 = pneg %p212
      %p390 = pneg %p209
      %p391 = pneg %p233
      %p392 = pneg %p230
      %p393 = pneg %p254
      %p394 = pneg %p251
      %p395 = pneg %p275
      %p396 = pneg %p272
      %p397 = pneg %p301
      %p398 = pneg %p298
      %p399 = scmp.lt.s32.totalorder %s23, 1
      %s400 = scalar_select %p399, %s23, 1
      %s401 = smul.addr %s400, 2
      %s402 = smul.addr %s401, 8
      %s403 = scalar_lea.vmem %s12, %s402
      %p404 = scmp.lt.s32.totalorder %s23, 1
      %s405 = scalar_select %p404, %s23, 1
      %s406 = smul.addr %s405, 2
      %s407 = smul.addr %s406, 8
      %s408 = scalar_lea.vmem %s0, %s407
      %p409 = scmp.lt.s32.totalorder %s23, 1
      %s410 = scalar_select %p409, %s23, 1
      %s411 = smul.addr %s410, 2
      %s412 = smul.addr %s411, 8
      %s413 = scalar_lea.vmem %s12, %s412
      %v414 = vld [vmem:[%s408] sm:$0xff]
      %v415 = vld [vmem:[%s408 + $0x8] sm:$0xff]
      %v416 = vld [vmem:[%s1] sm:$0x1]
      %v417 = vld [vmem:[%s2] sm:$0x1]
      %418 = vadd.xlane.f32.xlu0 %v414
      %v419 = vpop.xlane.xlu0 %418
      %420 = vadd.xlane.f32.xlu0 %v415
      %v421 = vpop.xlane.xlu0 %420
      %v422 = vrcp.pop 128.0
      %v423 = vmul.f32 %v419, %v422
      %v424 = vmul.f32 %v421, %v422
      %v425 = vsub.f32 %v414, %v423
      %v426 = vsub.f32 %v415, %v424
      %v427 = vmul.f32 %v425, %v425
      %v428 = vmul.f32 %v426, %v426
      %429 = vadd.xlane.f32.xlu0 %v427
      %v430 = vpop.xlane.xlu0 %429
      %431 = vadd.xlane.f32.xlu0 %v428
      %v432 = vpop.xlane.xlu0 %431
      %v433 = vmul.f32 %v430, %v422
      %v434 = vmul.f32 %v432, %v422
      %v435 = vadd.f32 %v433, 1e-05
      %v436 = vadd.f32 %v434, 1e-05
      %v437 = vrsqrt.pop %v435
      %v438 = vrsqrt.pop %v436
      %v439 = vmul.f32 %v425, %v437
      %v440 = vmul.f32 %v426, %v438
      %v442 = vlaneseq
      %v443 = vshrl.u32 %v442, 7
      %v444 = vsub.s32 0, %v443
      %v445 = vrot.slane %v416, %v444
      %v447 = vmul.f32 %v439, %v445
      %v448 = vmul.f32 %v440, %v445
      %v450 = vlaneseq
      %v451 = vshrl.u32 %v450, 7
      %v452 = vsub.s32 0, %v451
      %v453 = vrot.slane %v417, %v452
      %v455 = vadd.f32 %v447, %v453
      %v456 = vadd.f32 %v448, %v453
      %v457 = vld [vmem:[%s3] sm:$0xff]
      %v458 = vld [vmem:[%s3 + $0x8] sm:$0xff]
      %v459 = vld [vmem:[%s3 + $0x10] sm:$0xff]
      %v460 = vld [vmem:[%s3 + $0x18] sm:$0xff]
      %v461 = vld [vmem:[%s3 + $0x20] sm:$0xff]
      %v462 = vld [vmem:[%s3 + $0x28] sm:$0xff]
      %v463 = vld [vmem:[%s3 + $0x30] sm:$0xff]
      %v464 = vld [vmem:[%s3 + $0x38] sm:$0xff]
      %v465 = vld [vmem:[%s3 + $0x40] sm:$0xff]
      %v466 = vld [vmem:[%s3 + $0x48] sm:$0xff]
      %v467 = vld [vmem:[%s3 + $0x50] sm:$0xff]
      %v468 = vld [vmem:[%s3 + $0x58] sm:$0xff]
      %v469 = vld [vmem:[%s3 + $0x60] sm:$0xff]
      %v470 = vld [vmem:[%s3 + $0x68] sm:$0xff]
      %v471 = vld [vmem:[%s3 + $0x70] sm:$0xff]
      %v472 = vld [vmem:[%s3 + $0x78] sm:$0xff]
      %v473 = vld [vmem:[%s3 + $0x80] sm:$0xff]
      %v474 = vld [vmem:[%s3 + $0x88] sm:$0xff]
      %v475 = vld [vmem:[%s3 + $0x90] sm:$0xff]
      %v476 = vld [vmem:[%s3 + $0x98] sm:$0xff]
      %v477 = vld [vmem:[%s3 + $0xa0] sm:$0xff]
      %v478 = vld [vmem:[%s3 + $0xa8] sm:$0xff]
      %v479 = vld [vmem:[%s3 + $0xb0] sm:$0xff]
      %v480 = vld [vmem:[%s3 + $0xb8] sm:$0xff]
      %v481 = vld [vmem:[%s3 + $0xc0] sm:$0xff]
      %v482 = vld [vmem:[%s3 + $0xc8] sm:$0xff]
      %v483 = vld [vmem:[%s3 + $0xd0] sm:$0xff]
      %v484 = vld [vmem:[%s3 + $0xd8] sm:$0xff]
      %v485 = vld [vmem:[%s3 + $0xe0] sm:$0xff]
      %v486 = vld [vmem:[%s3 + $0xe8] sm:$0xff]
      %v487 = vld [vmem:[%s3 + $0xf0] sm:$0xff]
      %v488 = vld [vmem:[%s3 + $0xf8] sm:$0xff]
      %v489 = vld [vmem:[%s3 + $0x100] sm:$0xff]
      %v490 = vld [vmem:[%s3 + $0x108] sm:$0xff]
      %v491 = vld [vmem:[%s3 + $0x110] sm:$0xff]
      %v492 = vld [vmem:[%s3 + $0x118] sm:$0xff]
      %v493 = vld [vmem:[%s3 + $0x120] sm:$0xff]
      %v494 = vld [vmem:[%s3 + $0x128] sm:$0xff]
      %v495 = vld [vmem:[%s3 + $0x130] sm:$0xff]
      %v496 = vld [vmem:[%s3 + $0x138] sm:$0xff]
      %v497 = vld [vmem:[%s3 + $0x140] sm:$0xff]
      %v498 = vld [vmem:[%s3 + $0x148] sm:$0xff]
      %v499 = vld [vmem:[%s3 + $0x150] sm:$0xff]
      %v500 = vld [vmem:[%s3 + $0x158] sm:$0xff]
      %v501 = vld [vmem:[%s3 + $0x160] sm:$0xff]
      %v502 = vld [vmem:[%s3 + $0x168] sm:$0xff]
      %v503 = vld [vmem:[%s3 + $0x170] sm:$0xff]
      %v504 = vld [vmem:[%s3 + $0x178] sm:$0xff]
      %505 = vmatprep.subr.mxu0 %v458
      %506 = vmatpush1.msra.mxu0 %v457
      %507 = vmatprep.subr.mxu0 %v461
      %508 = vmatpush1.msra.mxu0 %v460
      %509 = vmatprep.subr.mxu0 %v464
      %510 = vmatpush1.msra.mxu0 %v463
      %511 = vmatprep.subr.mxu0 %v467
      %512 = vmatpush1.msra.mxu0 %v466
      %513 = vmatprep.subr.mxu0 %v470
      %514 = vmatpush1.msra.mxu0 %v469
      %515 = vmatprep.subr.mxu0 %v473
      %516 = vmatpush1.msra.mxu0 %v472
      %517 = vmatprep.subr.mxu0 %v476
      %518 = vmatpush1.msra.mxu0 %v475
      %519 = vmatprep.subr.mxu0 %v479
      %520 = vmatpush1.msra.mxu0 %v478
      %521 = vmatprep.subr.mxu0 %v482
      %522 = vmatpush1.msra.mxu0 %v481
      %523 = vmatprep.subr.mxu0 %v485
      %524 = vmatpush1.msra.mxu0 %v484
      %525 = vmatprep.subr.mxu0 %v488
      %526 = vmatpush1.msra.mxu0 %v487
      %527 = vmatprep.subr.mxu0 %v491
      %528 = vmatpush1.msra.mxu0 %v490
      %529 = vmatprep.subr.mxu0 %v494
      %530 = vmatpush1.msra.mxu0 %v493
      %531 = vmatprep.subr.mxu0 %v497
      %532 = vmatpush1.msra.mxu0 %v496
      %533 = vmatprep.subr.mxu0 %v500
      %534 = vmatpush1.msra.mxu0 %v499
      %535 = vmatprep.subr.mxu0 %v503
      %536 = vmatpush1.msra.mxu0 %v502
      %537 = vmatprep.subr.mxu0 0.0
      %538 = vmatpush1.msra.mxu0 0.0
      %539 = vmatprep.subr.mxu0 0.0
      %540 = vmatpush1.msra.mxu0 0.0
      %541 = vmatprep.subr.mxu0 0.0
      %542 = vmatpush1.msra.mxu0 0.0
      %543 = vmatprep.subr.mxu0 0.0
      %544 = vmatpush1.msra.mxu0 0.0
      %545 = vmatprep.subr.mxu0 0.0
      %546 = vmatpush1.msra.mxu0 0.0
      %547 = vmatprep.subr.mxu0 0.0
      %548 = vmatpush1.msra.mxu0 0.0
      %549 = vmatprep.subr.mxu0 0.0
      %550 = vmatpush1.msra.mxu0 0.0
      %551 = vmatprep.subr.mxu0 0.0
      %552 = vmatpush1.msra.mxu0 0.0
      %553 = vmatprep.subr.mxu0 0.0
      %554 = vmatpush1.msra.mxu0 0.0
      %555 = vmatprep.subr.mxu0 0.0
      %556 = vmatpush1.msra.mxu0 0.0
      %557 = vmatprep.subr.mxu0 0.0
      %558 = vmatpush1.msra.mxu0 0.0
      %559 = vmatprep.subr.mxu0 0.0
      %560 = vmatpush1.msra.mxu0 0.0
      %561 = vmatprep.subr.mxu0 0.0
      %562 = vmatpush1.msra.mxu0 0.0
      %563 = vmatprep.subr.mxu0 0.0
      %564 = vmatpush1.msra.mxu0 0.0
      %565 = vmatprep.subr.mxu0 0.0
      %566 = vmatpush1.msra.mxu0 0.0
      %567 = vmatprep.subr.mxu0 0.0
      %568 = vmatpush1.msra.mxu0 0.0
      %569 = vmatprep.mubr.f32.mxu0 0.0
      %570 = vmatmul.mubr.f32.gmra.mrb[0].mxu0 %v455
      %v571 = vpop.f32.mrb[0].mxu0
      %v572 = vadd.f32 0.0, %v571
      %v573 = vpop.f32.mrb[0].mxu0
      %v574 = vadd.f32 0.0, %v573
      %575 = vmatprep.mubr.f32.mxu0 0.0
      %576 = vmatmul.mubr.f32.gmra.mrb[0].mxu0 %v456
      %v577 = vpop.f32.mrb[0].mxu0
      %v578 = vadd.f32 0.0, %v577
      %v579 = vpop.f32.mrb[0].mxu0
      %v580 = vadd.f32 0.0, %v579
      %581 = vdwg.mxu0
      %582 = vmatprep.subr.mxu0 0.0
      %583 = vmatpush1.msra.mxu0 %v459
      %584 = vmatprep.subr.mxu0 0.0
      %585 = vmatpush1.msra.mxu0 %v462
      %586 = vmatprep.subr.mxu0 0.0
      %587 = vmatpush1.msra.mxu0 %v465
      %588 = vmatprep.subr.mxu0 0.0
      %589 = vmatpush1.msra.mxu0 %v468
      %590 = vmatprep.subr.mxu0 0.0
      %591 = vmatpush1.msra.mxu0 %v471
      %592 = vmatprep.subr.mxu0 0.0
      %593 = vmatpush1.msra.mxu0 %v474
      %594 = vmatprep.subr.mxu0 0.0
      %595 = vmatpush1.msra.mxu0 %v477
      %596 = vmatprep.subr.mxu0 0.0
      %597 = vmatpush1.msra.mxu0 %v480
      %598 = vmatprep.subr.mxu0 0.0
      %599 = vmatpush1.msra.mxu0 %v483
      %600 = vmatprep.subr.mxu0 0.0
      %601 = vmatpush1.msra.mxu0 %v486
      %602 = vmatprep.subr.mxu0 0.0
      %603 = vmatpush1.msra.mxu0 %v489
      %604 = vmatprep.subr.mxu0 0.0
      %605 = vmatpush1.msra.mxu0 %v492
      %606 = vmatprep.subr.mxu0 0.0
      %607 = vmatpush1.msra.mxu0 %v495
      %608 = vmatprep.subr.mxu0 0.0
      %609 = vmatpush1.msra.mxu0 %v498
      %610 = vmatprep.subr.mxu0 0.0
      %611 = vmatpush1.msra.mxu0 %v501
      %612 = vmatprep.subr.mxu0 0.0
      %613 = vmatpush1.msra.mxu0 %v504
      %614 = vmatprep.subr.mxu0 0.0
      %615 = vmatpush1.msra.mxu0 0.0
      %616 = vmatprep.subr.mxu0 0.0
      %617 = vmatpush1.msra.mxu0 0.0
      %618 = vmatprep.subr.mxu0 0.0
      %619 = vmatpush1.msra.mxu0 0.0
      %620 = vmatprep.subr.mxu0 0.0
      %621 = vmatpush1.msra.mxu0 0.0
      %622 = vmatprep.subr.mxu0 0.0
      %623 = vmatpush1.msra.mxu0 0.0
      %624 = vmatprep.subr.mxu0 0.0
      %625 = vmatpush1.msra.mxu0 0.0
      %626 = vmatprep.subr.mxu0 0.0
      %627 = vmatpush1.msra.mxu0 0.0
      %628 = vmatprep.subr.mxu0 0.0
      %629 = vmatpush1.msra.mxu0 0.0
      %630 = vmatprep.subr.mxu0 0.0
      %631 = vmatpush1.msra.mxu0 0.0
      %632 = vmatprep.subr.mxu0 0.0
      %633 = vmatpush1.msra.mxu0 0.0
      %634 = vmatprep.subr.mxu0 0.0
      %635 = vmatpush1.msra.mxu0 0.0
      %636 = vmatprep.subr.mxu0 0.0
      %637 = vmatpush1.msra.mxu0 0.0
      %638 = vmatprep.subr.mxu0 0.0
      %639 = vmatpush1.msra.mxu0 0.0
      %640 = vmatprep.subr.mxu0 0.0
      %641 = vmatpush1.msra.mxu0 0.0
      %642 = vmatprep.subr.mxu0 0.0
      %643 = vmatpush1.msra.mxu0 0.0
      %644 = vmatprep.subr.mxu0 0.0
      %645 = vmatpush1.msra.mxu0 0.0
      %646 = vmatprep.mubr.f32.mxu0 0.0
      %647 = vmatmul.mubr.f32.gmra.mrb[0].mxu0 %v455
      %v648 = vpop.f32.mrb[0].mxu0
      %v649 = vadd.f32 0.0, %v648
      %v650 = vpop.f32.mrb[0].mxu0
      %651 = vmatprep.mubr.f32.mxu0 0.0
      %652 = vmatmul.mubr.f32.gmra.mrb[0].mxu0 %v456
      %v653 = vpop.f32.mrb[0].mxu0
      %v654 = vadd.f32 0.0, %v653
      %v655 = vpop.f32.mrb[0].mxu0
      %656 = vdwg.mxu0
      %v657 = vmul.f32 %v572, 0.17677669
      %v658 = vmul.f32 %v578, 0.17677669
      %vm659 = vcmask 261120
      %v661 = vsel %vm659, %v657, 0
      %v664 = vsel %vm659, %v658, 0
      %v667 = vsel %vm659, %v574, 0
      %v670 = vsel %vm659, %v580, 0
      %672 = vmatprep.subr.mxu0 0.0
      %673 = vmatpush1.xpose.msra.mxu0 %v667
      %674 = vmatprep.subr.mxu0 0.0
      %675 = vmatpush1.xpose.msra.mxu0 %v670
      %676 = vmatprep.subr.mxu0 0.0
      %677 = vmatpush1.xpose.msra.mxu0 0.0
      %678 = vmatprep.subr.mxu0 0.0
      %679 = vmatpush1.xpose.msra.mxu0 0.0
      %680 = vmatprep.subr.mxu0 0.0
      %681 = vmatpush1.xpose.msra.mxu0 0.0
      %682 = vmatprep.subr.mxu0 0.0
      %683 = vmatpush1.xpose.msra.mxu0 0.0
      %684 = vmatprep.subr.mxu0 0.0
      %685 = vmatpush1.xpose.msra.mxu0 0.0
      %686 = vmatprep.subr.mxu0 0.0
      %687 = vmatpush1.xpose.msra.mxu0 0.0
      %688 = vmatprep.subr.mxu0 0.0
      %689 = vmatpush1.xpose.msra.mxu0 0.0
      %690 = vmatprep.subr.mxu0 0.0
      %691 = vmatpush1.xpose.msra.mxu0 0.0
      %692 = vmatprep.subr.mxu0 0.0
      %693 = vmatpush1.xpose.msra.mxu0 0.0
      %694 = vmatprep.subr.mxu0 0.0
      %695 = vmatpush1.xpose.msra.mxu0 0.0
      %696 = vmatprep.subr.mxu0 0.0
      %697 = vmatpush1.xpose.msra.mxu0 0.0
      %698 = vmatprep.subr.mxu0 0.0
      %699 = vmatpush1.xpose.msra.mxu0 0.0
      %700 = vmatprep.subr.mxu0 0.0
      %701 = vmatpush1.xpose.msra.mxu0 0.0
      %702 = vmatprep.subr.mxu0 0.0
      %703 = vmatpush1.xpose.msra.mxu0 0.0
      %704 = vmatprep.subr.mxu0 0.0
      %705 = vmatpush1.xpose.msra.mxu0 0.0
      %706 = vmatprep.subr.mxu0 0.0
      %707 = vmatpush1.xpose.msra.mxu0 0.0
      %708 = vmatprep.subr.mxu0 0.0
      %709 = vmatpush1.xpose.msra.mxu0 0.0
      %710 = vmatprep.subr.mxu0 0.0
      %711 = vmatpush1.xpose.msra.mxu0 0.0
      %712 = vmatprep.subr.mxu0 0.0
      %713 = vmatpush1.xpose.msra.mxu0 0.0
      %714 = vmatprep.subr.mxu0 0.0
      %715 = vmatpush1.xpose.msra.mxu0 0.0
      %716 = vmatprep.subr.mxu0 0.0
      %717 = vmatpush1.xpose.msra.mxu0 0.0
      %718 = vmatprep.subr.mxu0 0.0
      %719 = vmatpush1.xpose.msra.mxu0 0.0
      %720 = vmatprep.subr.mxu0 0.0
      %721 = vmatpush1.xpose.msra.mxu0 0.0
      %722 = vmatprep.subr.mxu0 0.0
      %723 = vmatpush1.xpose.msra.mxu0 0.0
      %724 = vmatprep.subr.mxu0 0.0
      %725 = vmatpush1.xpose.msra.mxu0 0.0
      %726 = vmatprep.subr.mxu0 0.0
      %727 = vmatpush1.xpose.msra.mxu0 0.0
      %728 = vmatprep.subr.mxu0 0.0
      %729 = vmatpush1.xpose.msra.mxu0 0.0
      %730 = vmatprep.subr.mxu0 0.0
      %731 = vmatpush1.xpose.msra.mxu0 0.0
      %732 = vmatprep.subr.mxu0 0.0
      %733 = vmatpush1.xpose.msra.mxu0 0.0
      %734 = vmatprep.subr.mxu0 0.0
      %735 = vmatpush1.xpose.msra.mxu0 0.0
      %736 = vmatprep.mubr.f32.mxu0 0.0
      %737 = vmatmul.mubr.f32.gmra.mrb[0].mxu0 %v661
      %v738 = vpop.f32.mrb[0].mxu0
      %v739 = vadd.f32 0.0, %v738
      %v740 = vpop.f32.mrb[0].mxu0
      %741 = vmatprep.mubr.f32.mxu0 0.0
      %742 = vmatmul.mubr.f32.gmra.mrb[0].mxu0 %v664
      %v743 = vpop.f32.mrb[0].mxu0
      %v744 = vadd.f32 0.0, %v743
      %v745 = vpop.f32.mrb[0].mxu0
      %746 = vdwg.mxu0
      %vm747 = vcmask 130048
      %v748 = vsel %vm747, %v739, -inf
      %749 = vmax.xlane.f32.xlu0 %v748
      %v750 = vpop.xlane.xlu0 %749
      %v751 = vsel %vm747, %v744, -inf
      %752 = vmax.xlane.f32.xlu0 %v751
      %v753 = vpop.xlane.xlu0 %752
      %v754 = vsub.f32 %v739, %v750
      %v755 = vsub.f32 %v744, %v753
      %v756 = vmul.f32 %v754, 1.442695
      %v757 = vpow.pop %v756
      %v758 = vmul.f32 %v755, 1.442695
      %v759 = vpow.pop %v758
      %v760 = vsel %vm747, %v757, 0.0
      %761 = vadd.xlane.f32.xlu0 %v760
      %v762 = vpop.xlane.xlu0 %761
      %v763 = vsel %vm747, %v759, 0.0
      %764 = vadd.xlane.f32.xlu0 %v763
      %v765 = vpop.xlane.xlu0 %764
      %v766 = vrcp.pop %v762
      %v767 = vmul.f32 %v757, %v766
      %v768 = vrcp.pop %v765
      %v769 = vmul.f32 %v759, %v768
      %v771 = vsel %vm747, %v767, 0
      %v774 = vsel %vm747, %v769, 0
      %776 = vmatprep.subr.mxu0 0.0
      %777 = vmatpush1.msra.mxu0 %v649
      %778 = vmatprep.subr.mxu0 0.0
      %779 = vmatpush1.msra.mxu0 %v654
      %780 = vmatprep.subr.mxu0 0.0
      %781 = vmatpush1.msra.mxu0 0.0
      %782 = vmatprep.subr.mxu0 0.0
      %783 = vmatpush1.msra.mxu0 0.0
      %784 = vmatprep.subr.mxu0 0.0
      %785 = vmatpush1.msra.mxu0 0.0
      %786 = vmatprep.subr.mxu0 0.0
      %787 = vmatpush1.msra.mxu0 0.0
      %788 = vmatprep.subr.mxu0 0.0
      %789 = vmatpush1.msra.mxu0 0.0
      %790 = vmatprep.subr.mxu0 0.0
      %791 = vmatpush1.msra.mxu0 0.0
      %792 = vmatprep.subr.mxu0 0.0
      %793 = vmatpush1.msra.mxu0 0.0
      %794 = vmatprep.subr.mxu0 0.0
      %795 = vmatpush1.msra.mxu0 0.0
      %796 = vmatprep.subr.mxu0 0.0
      %797 = vmatpush1.msra.mxu0 0.0
      %798 = vmatprep.subr.mxu0 0.0
      %799 = vmatpush1.msra.mxu0 0.0
      %800 = vmatprep.subr.mxu0 0.0
      %801 = vmatpush1.msra.mxu0 0.0
      %802 = vmatprep.subr.mxu0 0.0
      %803 = vmatpush1.msra.mxu0 0.0
      %804 = vmatprep.subr.mxu0 0.0
      %805 = vmatpush1.msra.mxu0 0.0
      %806 = vmatprep.subr.mxu0 0.0
      %807 = vmatpush1.msra.mxu0 0.0
      %808 = vmatprep.subr.mxu0 0.0
      %809 = vmatpush1.msra.mxu0 0.0
      %810 = vmatprep.subr.mxu0 0.0
      %811 = vmatpush1.msra.mxu0 0.0
      %812 = vmatprep.subr.mxu0 0.0
      %813 = vmatpush1.msra.mxu0 0.0
      %814 = vmatprep.subr.mxu0 0.0
      %815 = vmatpush1.msra.mxu0 0.0
      %816 = vmatprep.subr.mxu0 0.0
      %817 = vmatpush1.msra.mxu0 0.0
      %818 = vmatprep.subr.mxu0 0.0
      %819 = vmatpush1.msra.mxu0 0.0
      %820 = vmatprep.subr.mxu0 0.0
      %821 = vmatpush1.msra.mxu0 0.0
      %822 = vmatprep.subr.mxu0 0.0
      %823 = vmatpush1.msra.mxu0 0.0
      %824 = vmatprep.subr.mxu0 0.0
      %825 = vmatpush1.msra.mxu0 0.0
      %826 = vmatprep.subr.mxu0 0.0
      %827 = vmatpush1.msra.mxu0 0.0
      %828 = vmatprep.subr.mxu0 0.0
      %829 = vmatpush1.msra.mxu0 0.0
      %830 = vmatprep.subr.mxu0 0.0
      %831 = vmatpush1.msra.mxu0 0.0
      %832 = vmatprep.subr.mxu0 0.0
      %833 = vmatpush1.msra.mxu0 0.0
      %834 = vmatprep.subr.mxu0 0.0
      %835 = vmatpush1.msra.mxu0 0.0
      %836 = vmatprep.subr.mxu0 0.0
      %837 = vmatpush1.msra.mxu0 0.0
      %838 = vmatprep.subr.mxu0 0.0
      %839 = vmatpush1.msra.mxu0 0.0
      %840 = vmatprep.mubr.f32.mxu0 0.0
      %841 = vmatmul.mubr.f32.gmra.mrb[0].mxu0 %v771
      %v842 = vpop.f32.mrb[0].mxu0
      %v843 = vadd.f32 0.0, %v842
      %v844 = vpop.f32.mrb[0].mxu0
      %845 = vmatprep.mubr.f32.mxu0 0.0
      %846 = vmatmul.mubr.f32.gmra.mrb[0].mxu0 %v774
      %v847 = vpop.f32.mrb[0].mxu0
      %v848 = vadd.f32 0.0, %v847
      %v849 = vpop.f32.mrb[0].mxu0
      %850 = vdwg.mxu0
      %851 = vrot.lane.b32.xlu0 %v657, 96
      %v852 = vpop.permute.xlu0 %851
      %853 = vrot.lane.b32.xlu0 %v658, 96
      %v854 = vpop.permute.xlu0 %853
      %855 = vrot.lane.b32.xlu0 %v574, 96
      %v856 = vpop.permute.xlu0 %855
      %857 = vrot.lane.b32.xlu0 %v580, 96
      %v858 = vpop.permute.xlu0 %857
      %v859 = vsel %vm659, %v852, 0
      %v861 = vsel %vm659, %v854, 0
      %v863 = vsel %vm659, %v856, 0
      %v865 = vsel %vm659, %v858, 0
      %867 = vmatprep.subr.mxu0 0.0
      %868 = vmatpush1.xpose.msra.mxu0 %v863
      %869 = vmatprep.subr.mxu0 0.0
      %870 = vmatpush1.xpose.msra.mxu0 %v865
      %871 = vmatprep.subr.mxu0 0.0
      %872 = vmatpush1.xpose.msra.mxu0 0.0
      %873 = vmatprep.subr.mxu0 0.0
      %874 = vmatpush1.xpose.msra.mxu0 0.0
      %875 = vmatprep.subr.mxu0 0.0
      %876 = vmatpush1.xpose.msra.mxu0 0.0
      %877 = vmatprep.subr.mxu0 0.0
      %878 = vmatpush1.xpose.msra.mxu0 0.0
      %879 = vmatprep.subr.mxu0 0.0
      %880 = vmatpush1.xpose.msra.mxu0 0.0
      %881 = vmatprep.subr.mxu0 0.0
      %882 = vmatpush1.xpose.msra.mxu0 0.0
      %883 = vmatprep.subr.mxu0 0.0
      %884 = vmatpush1.xpose.msra.mxu0 0.0
      %885 = vmatprep.subr.mxu0 0.0
      %886 = vmatpush1.xpose.msra.mxu0 0.0
      %887 = vmatprep.subr.mxu0 0.0
      %888 = vmatpush1.xpose.msra.mxu0 0.0
      %889 = vmatprep.subr.mxu0 0.0
      %890 = vmatpush1.xpose.msra.mxu0 0.0
      %891 = vmatprep.subr.mxu0 0.0
      %892 = vmatpush1.xpose.msra.mxu0 0.0
      %893 = vmatprep.subr.mxu0 0.0
      %894 = vmatpush1.xpose.msra.mxu0 0.0
      %895 = vmatprep.subr.mxu0 0.0
      %896 = vmatpush1.xpose.msra.mxu0 0.0
      %897 = vmatprep.subr.mxu0 0.0
      %898 = vmatpush1.xpose.msra.mxu0 0.0
      %899 = vmatprep.subr.mxu0 0.0
      %900 = vmatpush1.xpose.msra.mxu0 0.0
      %901 = vmatprep.subr.mxu0 0.0
      %902 = vmatpush1.xpose.msra.mxu0 0.0
      %903 = vmatprep.subr.mxu0 0.0
      %904 = vmatpush1.xpose.msra.mxu0 0.0
      %905 = vmatprep.subr.mxu0 0.0
      %906 = vmatpush1.xpose.msra.mxu0 0.0
      %907 = vmatprep.subr.mxu0 0.0
      %908 = vmatpush1.xpose.msra.mxu0 0.0
      %909 = vmatprep.subr.mxu0 0.0
      %910 = vmatpush1.xpose.msra.mxu0 0.0
      %911 = vmatprep.subr.mxu0 0.0
      %912 = vmatpush1.xpose.msra.mxu0 0.0
      %913 = vmatprep.subr.mxu0 0.0
      %914 = vmatpush1.xpose.msra.mxu0 0.0
      %915 = vmatprep.subr.mxu0 0.0
      %916 = vmatpush1.xpose.msra.mxu0 0.0
      %917 = vmatprep.subr.mxu0 0.0
      %918 = vmatpush1.xpose.msra.mxu0 0.0
      %919 = vmatprep.subr.mxu0 0.0
      %920 = vmatpush1.xpose.msra.mxu0 0.0
      %921 = vmatprep.subr.mxu0 0.0
      %922 = vmatpush1.xpose.msra.mxu0 0.0
      %923 = vmatprep.subr.mxu0 0.0
      %924 = vmatpush1.xpose.msra.mxu0 0.0
      %925 = vmatprep.subr.mxu0 0.0
      %926 = vmatpush1.xpose.msra.mxu0 0.0
      %927 = vmatprep.subr.mxu0 0.0
      %928 = vmatpush1.xpose.msra.mxu0 0.0
      %929 = vmatprep.subr.mxu0 0.0
      %930 = vmatpush1.xpose.msra.mxu0 0.0
      %931 = vmatprep.mubr.f32.mxu0 0.0
      %932 = vmatmul.mubr.f32.gmra.mrb[0].mxu0 %v859
      %v933 = vpop.f32.mrb[0].mxu0
      %v934 = vadd.f32 0.0, %v933
      %v935 = vpop.f32.mrb[0].mxu0
      %936 = vmatprep.mubr.f32.mxu0 0.0
      %937 = vmatmul.mubr.f32.gmra.mrb[0].mxu0 %v861
      %v938 = vpop.f32.mrb[0].mxu0
      %v939 = vadd.f32 0.0, %v938
      %v940 = vpop.f32.mrb[0].mxu0
      %941 = vdwg.mxu0
      %v942 = vsel %vm747, %v934, -inf
      %943 = vmax.xlane.f32.xlu0 %v942
      %v944 = vpop.xlane.xlu0 %943
      %v945 = vsel %vm747, %v939, -inf
      %946 = vmax.xlane.f32.xlu0 %v945
      %v947 = vpop.xlane.xlu0 %946
      %v948 = vsub.f32 %v934, %v944
      %v949 = vsub.f32 %v939, %v947
      %v950 = vmul.f32 %v948, 1.442695
      %v951 = vpow.pop %v950
      %v952 = vmul.f32 %v949, 1.442695
      %v953 = vpow.pop %v952
      %v954 = vsel %vm747, %v951, 0.0
      %955 = vadd.xlane.f32.xlu0 %v954
      %v956 = vpop.xlane.xlu0 %955
      %v957 = vsel %vm747, %v953, 0.0
      %958 = vadd.xlane.f32.xlu0 %v957
      %v959 = vpop.xlane.xlu0 %958
      %v960 = vrcp.pop %v956
      %v961 = vmul.f32 %v951, %v960
      %v962 = vrcp.pop %v959
      %v963 = vmul.f32 %v953, %v962
      %966 = vrot.lane.b32.xlu0 %v649, 96
      %v967 = vpop.permute.xlu0 %966
      %968 = vrot.lane.b32.xlu0 %v654, 96
      %v969 = vpop.permute.xlu0 %968
      %v973 = vsel %vm747, %v961, 0
      %v976 = vsel %vm747, %v963, 0
      %978 = vmatprep.subr.mxu0 0.0
      %979 = vmatpush1.msra.mxu0 %v967
      %980 = vmatprep.subr.mxu0 0.0
      %981 = vmatpush1.msra.mxu0 %v969
      %982 = vmatprep.subr.mxu0 0.0
      %983 = vmatpush1.msra.mxu0 0.0
      %984 = vmatprep.subr.mxu0 0.0
      %985 = vmatpush1.msra.mxu0 0.0
      %986 = vmatprep.subr.mxu0 0.0
      %987 = vmatpush1.msra.mxu0 0.0
      %988 = vmatprep.subr.mxu0 0.0
      %989 = vmatpush1.msra.mxu0 0.0
      %990 = vmatprep.subr.mxu0 0.0
      %991 = vmatpush1.msra.mxu0 0.0
      %992 = vmatprep.subr.mxu0 0.0
      %993 = vmatpush1.msra.mxu0 0.0
      %994 = vmatprep.subr.mxu0 0.0
      %995 = vmatpush1.msra.mxu0 0.0
      %996 = vmatprep.subr.mxu0 0.0
      %997 = vmatpush1.msra.mxu0 0.0
      %998 = vmatprep.subr.mxu0 0.0
      %999 = vmatpush1.msra.mxu0 0.0
      %1000 = vmatprep.subr.mxu0 0.0
      %1001 = vmatpush1.msra.mxu0 0.0
      %1002 = vmatprep.subr.mxu0 0.0
      %1003 = vmatpush1.msra.mxu0 0.0
      %1004 = vmatprep.subr.mxu0 0.0
      %1005 = vmatpush1.msra.mxu0 0.0
      %1006 = vmatprep.subr.mxu0 0.0
      %1007 = vmatpush1.msra.mxu0 0.0
      %1008 = vmatprep.subr.mxu0 0.0
      %1009 = vmatpush1.msra.mxu0 0.0
      %1010 = vmatprep.subr.mxu0 0.0
      %1011 = vmatpush1.msra.mxu0 0.0
      %1012 = vmatprep.subr.mxu0 0.0
      %1013 = vmatpush1.msra.mxu0 0.0
      %1014 = vmatprep.subr.mxu0 0.0
      %1015 = vmatpush1.msra.mxu0 0.0
      %1016 = vmatprep.subr.mxu0 0.0
      %1017 = vmatpush1.msra.mxu0 0.0
      %1018 = vmatprep.subr.mxu0 0.0
      %1019 = vmatpush1.msra.mxu0 0.0
      %1020 = vmatprep.subr.mxu0 0.0
      %1021 = vmatpush1.msra.mxu0 0.0
      %1022 = vmatprep.subr.mxu0 0.0
      %1023 = vmatpush1.msra.mxu0 0.0
      %1024 = vmatprep.subr.mxu0 0.0
      %1025 = vmatpush1.msra.mxu0 0.0
      %1026 = vmatprep.subr.mxu0 0.0
      %1027 = vmatpush1.msra.mxu0 0.0
      %1028 = vmatprep.subr.mxu0 0.0
      %1029 = vmatpush1.msra.mxu0 0.0
      %1030 = vmatprep.subr.mxu0 0.0
      %1031 = vmatpush1.msra.mxu0 0.0
      %1032 = vmatprep.subr.mxu0 0.0
      %1033 = vmatpush1.msra.mxu0 0.0
      %1034 = vmatprep.subr.mxu0 0.0
      %1035 = vmatpush1.msra.mxu0 0.0
      %1036 = vmatprep.subr.mxu0 0.0
      %1037 = vmatpush1.msra.mxu0 0.0
      %1038 = vmatprep.subr.mxu0 0.0
      %1039 = vmatpush1.msra.mxu0 0.0
      %1040 = vmatprep.subr.mxu0 0.0
      %1041 = vmatpush1.msra.mxu0 0.0
      %1042 = vmatprep.mubr.f32.mxu0 0.0
      %1043 = vmatmul.mubr.f32.gmra.mrb[0].mxu0 %v973
      %v1044 = vpop.f32.mrb[0].mxu0
      %v1045 = vadd.f32 0.0, %v1044
      %v1046 = vpop.f32.mrb[0].mxu0
      %1047 = vmatprep.mubr.f32.mxu0 0.0
      %1048 = vmatmul.mubr.f32.gmra.mrb[0].mxu0 %v976
      %v1049 = vpop.f32.mrb[0].mxu0
      %v1050 = vadd.f32 0.0, %v1049
      %v1051 = vpop.f32.mrb[0].mxu0
      %1052 = vdwg.mxu0
      %1053 = vrot.lane.b32.xlu0 %v657, 64
      %v1054 = vpop.permute.xlu0 %1053
      %1055 = vrot.lane.b32.xlu0 %v658, 64
      %v1056 = vpop.permute.xlu0 %1055
      %1057 = vrot.lane.b32.xlu0 %v574, 64
      %v1058 = vpop.permute.xlu0 %1057
      %1059 = vrot.lane.b32.xlu0 %v580, 64
      %v1060 = vpop.permute.xlu0 %1059
      %v1061 = vsel %vm659, %v1054, 0
      %v1063 = vsel %vm659, %v1056, 0
      %v1065 = vsel %vm659, %v1058, 0
      %v1067 = vsel %vm659, %v1060, 0
      %1069 = vmatprep.subr.mxu0 0.0
      %1070 = vmatpush1.xpose.msra.mxu0 %v1065
      %1071 = vmatprep.subr.mxu0 0.0
      %1072 = vmatpush1.xpose.msra.mxu0 %v1067
      %1073 = vmatprep.subr.mxu0 0.0
      %1074 = vmatpush1.xpose.msra.mxu0 0.0
      %1075 = vmatprep.subr.mxu0 0.0
      %1076 = vmatpush1.xpose.msra.mxu0 0.0
      %1077 = vmatprep.subr.mxu0 0.0
      %1078 = vmatpush1.xpose.msra.mxu0 0.0
      %1079 = vmatprep.subr.mxu0 0.0
      %1080 = vmatpush1.xpose.msra.mxu0 0.0
      %1081 = vmatprep.subr.mxu0 0.0
      %1082 = vmatpush1.xpose.msra.mxu0 0.0
      %1083 = vmatprep.subr.mxu0 0.0
      %1084 = vmatpush1.xpose.msra.mxu0 0.0
      %1085 = vmatprep.subr.mxu0 0.0
      %1086 = vmatpush1.xpose.msra.mxu0 0.0
      %1087 = vmatprep.subr.mxu0 0.0
      %1088 = vmatpush1.xpose.msra.mxu0 0.0
      %1089 = vmatprep.subr.mxu0 0.0
      %1090 = vmatpush1.xpose.msra.mxu0 0.0
      %1091 = vmatprep.subr.mxu0 0.0
      %1092 = vmatpush1.xpose.msra.mxu0 0.0
      %1093 = vmatprep.subr.mxu0 0.0
      %1094 = vmatpush1.xpose.msra.mxu0 0.0
      %1095 = vmatprep.subr.mxu0 0.0
      %1096 = vmatpush1.xpose.msra.mxu0 0.0
      %1097 = vmatprep.subr.mxu0 0.0
      %1098 = vmatpush1.xpose.msra.mxu0 0.0
      %1099 = vmatprep.subr.mxu0 0.0
      %1100 = vmatpush1.xpose.msra.mxu0 0.0
      %1101 = vmatprep.subr.mxu0 0.0
      %1102 = vmatpush1.xpose.msra.mxu0 0.0
      %1103 = vmatprep.subr.mxu0 0.0
      %1104 = vmatpush1.xpose.msra.mxu0 0.0
      %1105 = vmatprep.subr.mxu0 0.0
      %1106 = vmatpush1.xpose.msra.mxu0 0.0
      %1107 = vmatprep.subr.mxu0 0.0
      %1108 = vmatpush1.xpose.msra.mxu0 0.0
      %1109 = vmatprep.subr.mxu0 0.0
      %1110 = vmatpush1.xpose.msra.mxu0 0.0
      %1111 = vmatprep.subr.mxu0 0.0
      %1112 = vmatpush1.xpose.msra.mxu0 0.0
      %1113 = vmatprep.subr.mxu0 0.0
      %1114 = vmatpush1.xpose.msra.mxu0 0.0
      %1115 = vmatprep.subr.mxu0 0.0
      %1116 = vmatpush1.xpose.msra.mxu0 0.0
      %1117 = vmatprep.subr.mxu0 0.0
      %1118 = vmatpush1.xpose.msra.mxu0 0.0
      %1119 = vmatprep.subr.mxu0 0.0
      %1120 = vmatpush1.xpose.msra.mxu0 0.0
      %1121 = vmatprep.subr.mxu0 0.0
      %1122 = vmatpush1.xpose.msra.mxu0 0.0
      %1123 = vmatprep.subr.mxu0 0.0
      %1124 = vmatpush1.xpose.msra.mxu0 0.0
      %1125 = vmatprep.subr.mxu0 0.0
      %1126 = vmatpush1.xpose.msra.mxu0 0.0
      %1127 = vmatprep.subr.mxu0 0.0
      %1128 = vmatpush1.xpose.msra.mxu0 0.0
      %1129 = vmatprep.subr.mxu0 0.0
      %1130 = vmatpush1.xpose.msra.mxu0 0.0
      %1131 = vmatprep.subr.mxu0 0.0
      %1132 = vmatpush1.xpose.msra.mxu0 0.0
      %1133 = vmatprep.mubr.f32.mxu0 0.0
      %1134 = vmatmul.mubr.f32.gmra.mrb[0].mxu0 %v1061
      %v1135 = vpop.f32.mrb[0].mxu0
      %v1136 = vadd.f32 0.0, %v1135
      %v1137 = vpop.f32.mrb[0].mxu0
      %1138 = vmatprep.mubr.f32.mxu0 0.0
      %1139 = vmatmul.mubr.f32.gmra.mrb[0].mxu0 %v1063
      %v1140 = vpop.f32.mrb[0].mxu0
      %v1141 = vadd.f32 0.0, %v1140
      %v1142 = vpop.f32.mrb[0].mxu0
      %1143 = vdwg.mxu0
      %v1144 = vsel %vm747, %v1136, -inf
      %1145 = vmax.xlane.f32.xlu0 %v1144
      %v1146 = vpop.xlane.xlu0 %1145
      %v1147 = vsel %vm747, %v1141, -inf
      %1148 = vmax.xlane.f32.xlu0 %v1147
      %v1149 = vpop.xlane.xlu0 %1148
      %v1150 = vsub.f32 %v1136, %v1146
      %v1151 = vsub.f32 %v1141, %v1149
      %v1152 = vmul.f32 %v1150, 1.442695
      %v1153 = vpow.pop %v1152
      %v1154 = vmul.f32 %v1151, 1.442695
      %v1155 = vpow.pop %v1154
      %v1156 = vsel %vm747, %v1153, 0.0
      %1157 = vadd.xlane.f32.xlu0 %v1156
      %v1158 = vpop.xlane.xlu0 %1157
      %v1159 = vsel %vm747, %v1155, 0.0
      %1160 = vadd.xlane.f32.xlu0 %v1159
      %v1161 = vpop.xlane.xlu0 %1160
      %v1162 = vrcp.pop %v1158
      %v1163 = vmul.f32 %v1153, %v1162
      %v1164 = vrcp.pop %v1161
      %v1165 = vmul.f32 %v1155, %v1164
      %1166 = vrot.lane.b32.xlu0 %v649, 64
      %v1167 = vpop.permute.xlu0 %1166
      %1168 = vrot.lane.b32.xlu0 %v654, 64
      %v1169 = vpop.permute.xlu0 %1168
      %v1173 = vsel %vm747, %v1163, 0
      %v1176 = vsel %vm747, %v1165, 0
      %1178 = vmatprep.subr.mxu0 0.0
      %1179 = vmatpush1.msra.mxu0 %v1167
      %1180 = vmatprep.subr.mxu0 0.0
      %1181 = vmatpush1.msra.mxu0 %v1169
      %1182 = vmatprep.subr.mxu0 0.0
      %1183 = vmatpush1.msra.mxu0 0.0
      %1184 = vmatprep.subr.mxu0 0.0
      %1185 = vmatpush1.msra.mxu0 0.0
      %1186 = vmatprep.subr.mxu0 0.0
      %1187 = vmatpush1.msra.mxu0 0.0
      %1188 = vmatprep.subr.mxu0 0.0
      %1189 = vmatpush1.msra.mxu0 0.0
      %1190 = vmatprep.subr.mxu0 0.0
      %1191 = vmatpush1.msra.mxu0 0.0
      %1192 = vmatprep.subr.mxu0 0.0
      %1193 = vmatpush1.msra.mxu0 0.0
      %1194 = vmatprep.subr.mxu0 0.0
      %1195 = vmatpush1.msra.mxu0 0.0
      %1196 = vmatprep.subr.mxu0 0.0
      %1197 = vmatpush1.msra.mxu0 0.0
      %1198 = vmatprep.subr.mxu0 0.0
      %1199 = vmatpush1.msra.mxu0 0.0
      %1200 = vmatprep.subr.mxu0 0.0
      %1201 = vmatpush1.msra.mxu0 0.0
      %1202 = vmatprep.subr.mxu0 0.0
      %1203 = vmatpush1.msra.mxu0 0.0
      %1204 = vmatprep.subr.mxu0 0.0
      %1205 = vmatpush1.msra.mxu0 0.0
      %1206 = vmatprep.subr.mxu0 0.0
      %1207 = vmatpush1.msra.mxu0 0.0
      %1208 = vmatprep.subr.mxu0 0.0
      %1209 = vmatpush1.msra.mxu0 0.0
      %1210 = vmatprep.subr.mxu0 0.0
      %1211 = vmatpush1.msra.mxu0 0.0
      %1212 = vmatprep.subr.mxu0 0.0
      %1213 = vmatpush1.msra.mxu0 0.0
      %1214 = vmatprep.subr.mxu0 0.0
      %1215 = vmatpush1.msra.mxu0 0.0
      %1216 = vmatprep.subr.mxu0 0.0
      %1217 = vmatpush1.msra.mxu0 0.0
      %1218 = vmatprep.subr.mxu0 0.0
      %1219 = vmatpush1.msra.mxu0 0.0
      %1220 = vmatprep.subr.mxu0 0.0
      %1221 = vmatpush1.msra.mxu0 0.0
      %1222 = vmatprep.subr.mxu0 0.0
      %1223 = vmatpush1.msra.mxu0 0.0
      %1224 = vmatprep.subr.mxu0 0.0
      %1225 = vmatpush1.msra.mxu0 0.0
      %1226 = vmatprep.subr.mxu0 0.0
      %1227 = vmatpush1.msra.mxu0 0.0
      %1228 = vmatprep.subr.mxu0 0.0
      %1229 = vmatpush1.msra.mxu0 0.0
      %1230 = vmatprep.subr.mxu0 0.0
      %1231 = vmatpush1.msra.mxu0 0.0
      %1232 = vmatprep.subr.mxu0 0.0
      %1233 = vmatpush1.msra.mxu0 0.0
      %1234 = vmatprep.subr.mxu0 0.0
      %1235 = vmatpush1.msra.mxu0 0.0
      %1236 = vmatprep.subr.mxu0 0.0
      %1237 = vmatpush1.msra.mxu0 0.0
      %1238 = vmatprep.subr.mxu0 0.0
      %1239 = vmatpush1.msra.mxu0 0.0
      %1240 = vmatprep.subr.mxu0 0.0
      %1241 = vmatpush1.msra.mxu0 0.0
      %1242 = vmatprep.mubr.f32.mxu0 0.0
      %1243 = vmatmul.mubr.f32.gmra.mrb[0].mxu0 %v1173
      %v1244 = vpop.f32.mrb[0].mxu0
      %v1245 = vadd.f32 0.0, %v1244
      %v1246 = vpop.f32.mrb[0].mxu0
      %1247 = vmatprep.mubr.f32.mxu0 0.0
      %1248 = vmatmul.mubr.f32.gmra.mrb[0].mxu0 %v1176
      %v1249 = vpop.f32.mrb[0].mxu0
      %v1250 = vadd.f32 0.0, %v1249
      %v1251 = vpop.f32.mrb[0].mxu0
      %1252 = vdwg.mxu0
      %1253 = vrot.lane.b32.xlu0 %v657, 32
      %v1254 = vpop.permute.xlu0 %1253
      %1255 = vrot.lane.b32.xlu0 %v658, 32
      %v1256 = vpop.permute.xlu0 %1255
      %1257 = vrot.lane.b32.xlu0 %v574, 32
      %v1258 = vpop.permute.xlu0 %1257
      %1259 = vrot.lane.b32.xlu0 %v580, 32
      %v1260 = vpop.permute.xlu0 %1259
      %v1261 = vsel %vm659, %v1254, 0
      %v1263 = vsel %vm659, %v1256, 0
      %v1265 = vsel %vm659, %v1258, 0
      %v1267 = vsel %vm659, %v1260, 0
      %1269 = vmatprep.subr.mxu0 0.0
      %1270 = vmatpush1.xpose.msra.mxu0 %v1265
      %1271 = vmatprep.subr.mxu0 0.0
      %1272 = vmatpush1.xpose.msra.mxu0 %v1267
      %1273 = vmatprep.subr.mxu0 0.0
      %1274 = vmatpush1.xpose.msra.mxu0 0.0
      %1275 = vmatprep.subr.mxu0 0.0
      %1276 = vmatpush1.xpose.msra.mxu0 0.0
      %1277 = vmatprep.subr.mxu0 0.0
      %1278 = vmatpush1.xpose.msra.mxu0 0.0
      %1279 = vmatprep.subr.mxu0 0.0
      %1280 = vmatpush1.xpose.msra.mxu0 0.0
      %1281 = vmatprep.subr.mxu0 0.0
      %1282 = vmatpush1.xpose.msra.mxu0 0.0
      %1283 = vmatprep.subr.mxu0 0.0
      %1284 = vmatpush1.xpose.msra.mxu0 0.0
      %1285 = vmatprep.subr.mxu0 0.0
      %1286 = vmatpush1.xpose.msra.mxu0 0.0
      %1287 = vmatprep.subr.mxu0 0.0
      %1288 = vmatpush1.xpose.msra.mxu0 0.0
      %1289 = vmatprep.subr.mxu0 0.0
      %1290 = vmatpush1.xpose.msra.mxu0 0.0
      %1291 = vmatprep.subr.mxu0 0.0
      %1292 = vmatpush1.xpose.msra.mxu0 0.0
      %1293 = vmatprep.subr.mxu0 0.0
      %1294 = vmatpush1.xpose.msra.mxu0 0.0
      %1295 = vmatprep.subr.mxu0 0.0
      %1296 = vmatpush1.xpose.msra.mxu0 0.0
      %1297 = vmatprep.subr.mxu0 0.0
      %1298 = vmatpush1.xpose.msra.mxu0 0.0
      %1299 = vmatprep.subr.mxu0 0.0
      %1300 = vmatpush1.xpose.msra.mxu0 0.0
      %1301 = vmatprep.subr.mxu0 0.0
      %1302 = vmatpush1.xpose.msra.mxu0 0.0
      %1303 = vmatprep.subr.mxu0 0.0
      %1304 = vmatpush1.xpose.msra.mxu0 0.0
      %1305 = vmatprep.subr.mxu0 0.0
      %1306 = vmatpush1.xpose.msra.mxu0 0.0
      %1307 = vmatprep.subr.mxu0 0.0
      %1308 = vmatpush1.xpose.msra.mxu0 0.0
      %1309 = vmatprep.subr.mxu0 0.0
      %1310 = vmatpush1.xpose.msra.mxu0 0.0
      %1311 = vmatprep.subr.mxu0 0.0
      %1312 = vmatpush1.xpose.msra.mxu0 0.0
      %1313 = vmatprep.subr.mxu0 0.0
      %1314 = vmatpush1.xpose.msra.mxu0 0.0
      %1315 = vmatprep.subr.mxu0 0.0
      %1316 = vmatpush1.xpose.msra.mxu0 0.0
      %1317 = vmatprep.subr.mxu0 0.0
      %1318 = vmatpush1.xpose.msra.mxu0 0.0
      %1319 = vmatprep.subr.mxu0 0.0
      %1320 = vmatpush1.xpose.msra.mxu0 0.0
      %1321 = vmatprep.subr.mxu0 0.0
      %1322 = vmatpush1.xpose.msra.mxu0 0.0
      %1323 = vmatprep.subr.mxu0 0.0
      %1324 = vmatpush1.xpose.msra.mxu0 0.0
      %1325 = vmatprep.subr.mxu0 0.0
      %1326 = vmatpush1.xpose.msra.mxu0 0.0
      %1327 = vmatprep.subr.mxu0 0.0
      %1328 = vmatpush1.xpose.msra.mxu0 0.0
      %1329 = vmatprep.subr.mxu0 0.0
      %1330 = vmatpush1.xpose.msra.mxu0 0.0
      %1331 = vmatprep.subr.mxu0 0.0
      %1332 = vmatpush1.xpose.msra.mxu0 0.0
      %1333 = vmatprep.mubr.f32.mxu0 0.0
      %1334 = vmatmul.mubr.f32.gmra.mrb[0].mxu0 %v1261
      %v1335 = vpop.f32.mrb[0].mxu0
      %v1336 = vadd.f32 0.0, %v1335
      %v1337 = vpop.f32.mrb[0].mxu0
      %1338 = vmatprep.mubr.f32.mxu0 0.0
      %1339 = vmatmul.mubr.f32.gmra.mrb[0].mxu0 %v1263
      %v1340 = vpop.f32.mrb[0].mxu0
      %v1341 = vadd.f32 0.0, %v1340
      %v1342 = vpop.f32.mrb[0].mxu0
      %1343 = vdwg.mxu0
      %v1344 = vsel %vm747, %v1336, -inf
      %1345 = vmax.xlane.f32.xlu0 %v1344
      %v1346 = vpop.xlane.xlu0 %1345
      %v1347 = vsel %vm747, %v1341, -inf
      %1348 = vmax.xlane.f32.xlu0 %v1347
      %v1349 = vpop.xlane.xlu0 %1348
      %v1350 = vsub.f32 %v1336, %v1346
      %v1351 = vsub.f32 %v1341, %v1349
      %v1352 = vmul.f32 %v1350, 1.442695
      %v1353 = vpow.pop %v1352
      %v1354 = vmul.f32 %v1351, 1.442695
      %v1355 = vpow.pop %v1354
      %v1356 = vsel %vm747, %v1353, 0.0
      %1357 = vadd.xlane.f32.xlu0 %v1356
      %v1358 = vpop.xlane.xlu0 %1357
      %v1359 = vsel %vm747, %v1355, 0.0
      %1360 = vadd.xlane.f32.xlu0 %v1359
      %v1361 = vpop.xlane.xlu0 %1360
      %v1362 = vrcp.pop %v1358
      %v1363 = vmul.f32 %v1353, %v1362
      %v1364 = vrcp.pop %v1361
      %v1365 = vmul.f32 %v1355, %v1364
      %1366 = vrot.lane.b32.xlu0 %v649, 32
      %v1367 = vpop.permute.xlu0 %1366
      %1368 = vrot.lane.b32.xlu0 %v654, 32
      %v1369 = vpop.permute.xlu0 %1368
      %v1373 = vsel %vm747, %v1363, 0
      %v1376 = vsel %vm747, %v1365, 0
      %1378 = vmatprep.subr.mxu0 0.0
      %1379 = vmatpush1.msra.mxu0 %v1367
      %1380 = vmatprep.subr.mxu0 0.0
      %1381 = vmatpush1.msra.mxu0 %v1369
      %1382 = vmatprep.subr.mxu0 0.0
      %1383 = vmatpush1.msra.mxu0 0.0
      %1384 = vmatprep.subr.mxu0 0.0
      %1385 = vmatpush1.msra.mxu0 0.0
      %1386 = vmatprep.subr.mxu0 0.0
      %1387 = vmatpush1.msra.mxu0 0.0
      %1388 = vmatprep.subr.mxu0 0.0
      %1389 = vmatpush1.msra.mxu0 0.0
      %1390 = vmatprep.subr.mxu0 0.0
      %1391 = vmatpush1.msra.mxu0 0.0
      %1392 = vmatprep.subr.mxu0 0.0
      %1393 = vmatpush1.msra.mxu0 0.0
      %1394 = vmatprep.subr.mxu0 0.0
      %1395 = vmatpush1.msra.mxu0 0.0
      %1396 = vmatprep.subr.mxu0 0.0
      %1397 = vmatpush1.msra.mxu0 0.0
      %1398 = vmatprep.subr.mxu0 0.0
      %1399 = vmatpush1.msra.mxu0 0.0
      %1400 = vmatprep.subr.mxu0 0.0
      %1401 = vmatpush1.msra.mxu0 0.0
      %1402 = vmatprep.subr.mxu0 0.0
      %1403 = vmatpush1.msra.mxu0 0.0
      %1404 = vmatprep.subr.mxu0 0.0
      %1405 = vmatpush1.msra.mxu0 0.0
      %1406 = vmatprep.subr.mxu0 0.0
      %1407 = vmatpush1.msra.mxu0 0.0
      %1408 = vmatprep.subr.mxu0 0.0
      %1409 = vmatpush1.msra.mxu0 0.0
      %1410 = vmatprep.subr.mxu0 0.0
      %1411 = vmatpush1.msra.mxu0 0.0
      %1412 = vmatprep.subr.mxu0 0.0
      %1413 = vmatpush1.msra.mxu0 0.0
      %1414 = vmatprep.subr.mxu0 0.0
      %1415 = vmatpush1.msra.mxu0 0.0
      %1416 = vmatprep.subr.mxu0 0.0
      %1417 = vmatpush1.msra.mxu0 0.0
      %1418 = vmatprep.subr.mxu0 0.0
      %1419 = vmatpush1.msra.mxu0 0.0
      %1420 = vmatprep.subr.mxu0 0.0
      %1421 = vmatpush1.msra.mxu0 0.0
      %1422 = vmatprep.subr.mxu0 0.0
      %1423 = vmatpush1.msra.mxu0 0.0
      %1424 = vmatprep.subr.mxu0 0.0
      %1425 = vmatpush1.msra.mxu0 0.0
      %1426 = vmatprep.subr.mxu0 0.0
      %1427 = vmatpush1.msra.mxu0 0.0
      %1428 = vmatprep.subr.mxu0 0.0
      %1429 = vmatpush1.msra.mxu0 0.0
      %1430 = vmatprep.subr.mxu0 0.0
      %1431 = vmatpush1.msra.mxu0 0.0
      %1432 = vmatprep.subr.mxu0 0.0
      %1433 = vmatpush1.msra.mxu0 0.0
      %1434 = vmatprep.subr.mxu0 0.0
      %1435 = vmatpush1.msra.mxu0 0.0
      %1436 = vmatprep.subr.mxu0 0.0
      %1437 = vmatpush1.msra.mxu0 0.0
      %1438 = vmatprep.subr.mxu0 0.0
      %1439 = vmatpush1.msra.mxu0 0.0
      %1440 = vmatprep.subr.mxu0 0.0
      %1441 = vmatpush1.msra.mxu0 0.0
      %1442 = vmatprep.mubr.f32.mxu0 0.0
      %1443 = vmatmul.mubr.f32.gmra.mrb[0].mxu0 %v1373
      %v1444 = vpop.f32.mrb[0].mxu0
      %v1445 = vadd.f32 0.0, %v1444
      %v1446 = vpop.f32.mrb[0].mxu0
      %1447 = vmatprep.mubr.f32.mxu0 0.0
      %1448 = vmatmul.mubr.f32.gmra.mrb[0].mxu0 %v1376
      %v1449 = vpop.f32.mrb[0].mxu0
      %v1450 = vadd.f32 0.0, %v1449
      %v1451 = vpop.f32.mrb[0].mxu0
      %1452 = vdwg.mxu0
      %1455 = vrot.lane.b32.xlu0 %v1045, 32
      %v1456 = vpop.permute.xlu0 %1455
      %1457 = vrot.lane.b32.xlu0 %v1050, 32
      %v1458 = vpop.permute.xlu0 %1457
      %1463 = vrot.lane.b32.xlu0 %v1245, 64
      %v1464 = vpop.permute.xlu0 %1463
      %1465 = vrot.lane.b32.xlu0 %v1250, 64
      %v1466 = vpop.permute.xlu0 %1465
      %1471 = vrot.lane.b32.xlu0 %v1445, 96
      %v1472 = vpop.permute.xlu0 %1471
      %1473 = vrot.lane.b32.xlu0 %v1450, 96
      %v1474 = vpop.permute.xlu0 %1473
      %v1477 = vsel %vm659, %v843, %v1456
      %v1478 = vsel %vm659, %v848, %v1458
      %vm1479 = vcmask 523264
      %v1480 = vsel %vm1479, %v1477, %v1464
      %v1481 = vsel %vm1479, %v1478, %v1466
      %vm1482 = vcmask 785408
      %v1483 = vsel %vm1482, %v1480, %v1472
      %v1484 = vsel %vm1482, %v1481, %v1474
      %v1485 = vld [vmem:[%s4] sm:$0xff]
      %v1486 = vld [vmem:[%s4 + $0x8] sm:$0xff]
      %v1487 = vld [vmem:[%s4 + $0x10] sm:$0xff]
      %v1488 = vld [vmem:[%s4 + $0x18] sm:$0xff]
      %v1489 = vld [vmem:[%s4 + $0x20] sm:$0xff]
      %v1490 = vld [vmem:[%s4 + $0x28] sm:$0xff]
      %v1491 = vld [vmem:[%s4 + $0x30] sm:$0xff]
      %v1492 = vld [vmem:[%s4 + $0x38] sm:$0xff]
      %v1493 = vld [vmem:[%s4 + $0x40] sm:$0xff]
      %v1494 = vld [vmem:[%s4 + $0x48] sm:$0xff]
      %v1495 = vld [vmem:[%s4 + $0x50] sm:$0xff]
      %v1496 = vld [vmem:[%s4 + $0x58] sm:$0xff]
      %v1497 = vld [vmem:[%s4 + $0x60] sm:$0xff]
      %v1498 = vld [vmem:[%s4 + $0x68] sm:$0xff]
      %v1499 = vld [vmem:[%s4 + $0x70] sm:$0xff]
      %v1500 = vld [vmem:[%s4 + $0x78] sm:$0xff]
      %v1501 = vld [vmem:[%s5] sm:$0x1]
      %v1503 = vlaneseq
      %v1504 = vshrl.u32 %v1503, 7
      %v1505 = vsub.s32 0, %v1504
      %v1506 = vrot.slane %v1501, %v1505
      %1508 = vmatprep.subr.mxu0 0.0
      %1509 = vmatpush1.msra.mxu0 %v1485
      %1510 = vmatprep.subr.mxu0 0.0
      %1511 = vmatpush1.msra.mxu0 %v1486
      %1512 = vmatprep.subr.mxu0 0.0
      %1513 = vmatpush1.msra.mxu0 %v1487
      %1514 = vmatprep.subr.mxu0 0.0
      %1515 = vmatpush1.msra.mxu0 %v1488
      %1516 = vmatprep.subr.mxu0 0.0
      %1517 = vmatpush1.msra.mxu0 %v1489
      %1518 = vmatprep.subr.mxu0 0.0
      %1519 = vmatpush1.msra.mxu0 %v1490
      %1520 = vmatprep.subr.mxu0 0.0
      %1521 = vmatpush1.msra.mxu0 %v1491
      %1522 = vmatprep.subr.mxu0 0.0
      %1523 = vmatpush1.msra.mxu0 %v1492
      %1524 = vmatprep.subr.mxu0 0.0
      %1525 = vmatpush1.msra.mxu0 %v1493
      %1526 = vmatprep.subr.mxu0 0.0
      %1527 = vmatpush1.msra.mxu0 %v1494
      %1528 = vmatprep.subr.mxu0 0.0
      %1529 = vmatpush1.msra.mxu0 %v1495
      %1530 = vmatprep.subr.mxu0 0.0
      %1531 = vmatpush1.msra.mxu0 %v1496
      %1532 = vmatprep.subr.mxu0 0.0
      %1533 = vmatpush1.msra.mxu0 %v1497
      %1534 = vmatprep.subr.mxu0 0.0
      %1535 = vmatpush1.msra.mxu0 %v1498
      %1536 = vmatprep.subr.mxu0 0.0
      %1537 = vmatpush1.msra.mxu0 %v1499
      %1538 = vmatprep.subr.mxu0 0.0
      %1539 = vmatpush1.msra.mxu0 %v1500
      %1540 = vmatprep.subr.mxu0 0.0
      %1541 = vmatpush1.msra.mxu0 0.0
      %1542 = vmatprep.subr.mxu0 0.0
      %1543 = vmatpush1.msra.mxu0 0.0
      %1544 = vmatprep.subr.mxu0 0.0
      %1545 = vmatpush1.msra.mxu0 0.0
      %1546 = vmatprep.subr.mxu0 0.0
      %1547 = vmatpush1.msra.mxu0 0.0
      %1548 = vmatprep.subr.mxu0 0.0
      %1549 = vmatpush1.msra.mxu0 0.0
      %1550 = vmatprep.subr.mxu0 0.0
      %1551 = vmatpush1.msra.mxu0 0.0
      %1552 = vmatprep.subr.mxu0 0.0
      %1553 = vmatpush1.msra.mxu0 0.0
      %1554 = vmatprep.subr.mxu0 0.0
      %1555 = vmatpush1.msra.mxu0 0.0
      %1556 = vmatprep.subr.mxu0 0.0
      %1557 = vmatpush1.msra.mxu0 0.0
      %1558 = vmatprep.subr.mxu0 0.0
      %1559 = vmatpush1.msra.mxu0 0.0
      %1560 = vmatprep.subr.mxu0 0.0
      %1561 = vmatpush1.msra.mxu0 0.0
      %1562 = vmatprep.subr.mxu0 0.0
      %1563 = vmatpush1.msra.mxu0 0.0
      %1564 = vmatprep.subr.mxu0 0.0
      %1565 = vmatpush1.msra.mxu0 0.0
      %1566 = vmatprep.subr.mxu0 0.0
      %1567 = vmatpush1.msra.mxu0 0.0
      %1568 = vmatprep.subr.mxu0 0.0
      %1569 = vmatpush1.msra.mxu0 0.0
      %1570 = vmatprep.subr.mxu0 0.0
      %1571 = vmatpush1.msra.mxu0 0.0
      %1572 = vmatprep.mubr.f32.mxu0 0.0
      %1573 = vmatmul.mubr.f32.gmra.mrb[0].mxu0 %v1483
      %v1574 = vpop.f32.mrb[0].mxu0
      %v1575 = vadd.f32 %v1506, %v1574
      %v1576 = vpop.f32.mrb[0].mxu0
      %1577 = vmatprep.mubr.f32.mxu0 0.0
      %1578 = vmatmul.mubr.f32.gmra.mrb[0].mxu0 %v1484
      %v1579 = vpop.f32.mrb[0].mxu0
      %v1580 = vadd.f32 %v1506, %v1579
      %v1581 = vpop.f32.mrb[0].mxu0
      %1582 = vdwg.mxu0
      %v1583 = vadd.f32 %v414, %v1575
      %v1584 = vadd.f32 %v415, %v1580
      %v1585 = vld [vmem:[%s6] sm:$0x1]
      %v1586 = vld [vmem:[%s7] sm:$0x1]
      %1587 = vadd.xlane.f32.xlu0 %v1583
      %v1588 = vpop.xlane.xlu0 %1587
      %1589 = vadd.xlane.f32.xlu0 %v1584
      %v1590 = vpop.xlane.xlu0 %1589
      %v1591 = vmul.f32 %v1588, %v422
      %v1592 = vmul.f32 %v1590, %v422
      %v1593 = vsub.f32 %v1583, %v1591
      %v1594 = vsub.f32 %v1584, %v1592
      %v1595 = vmul.f32 %v1593, %v1593
      %v1596 = vmul.f32 %v1594, %v1594
      %1597 = vadd.xlane.f32.xlu0 %v1595
      %v1598 = vpop.xlane.xlu0 %1597
      %1599 = vadd.xlane.f32.xlu0 %v1596
      %v1600 = vpop.xlane.xlu0 %1599
      %v1601 = vmul.f32 %v1598, %v422
      %v1602 = vmul.f32 %v1600, %v422
      %v1603 = vadd.f32 %v1601, 1e-05
      %v1604 = vadd.f32 %v1602, 1e-05
      %v1605 = vrsqrt.pop %v1603
      %v1606 = vrsqrt.pop %v1604
      %v1607 = vmul.f32 %v1593, %v1605
      %v1608 = vmul.f32 %v1594, %v1606
      %v1610 = vlaneseq
      %v1611 = vshrl.u32 %v1610, 7
      %v1612 = vsub.s32 0, %v1611
      %v1613 = vrot.slane %v1585, %v1612
      %v1615 = vmul.f32 %v1607, %v1613
      %v1616 = vmul.f32 %v1608, %v1613
      %v1618 = vlaneseq
      %v1619 = vshrl.u32 %v1618, 7
      %v1620 = vsub.s32 0, %v1619
      %v1621 = vrot.slane %v1586, %v1620
      %v1623 = vadd.f32 %v1615, %v1621
      %v1624 = vadd.f32 %v1616, %v1621
      %v1625 = vld [vmem:[%s8] sm:$0xff]
      %v1626 = vld [vmem:[%s8 + $0x8] sm:$0xff]
      %v1627 = vld [vmem:[%s8 + $0x10] sm:$0xff]
      %v1628 = vld [vmem:[%s8 + $0x18] sm:$0xff]
      %v1629 = vld [vmem:[%s8 + $0x20] sm:$0xff]
      %v1630 = vld [vmem:[%s8 + $0x28] sm:$0xff]
      %v1631 = vld [vmem:[%s8 + $0x30] sm:$0xff]
      %v1632 = vld [vmem:[%s8 + $0x38] sm:$0xff]
      %v1633 = vld [vmem:[%s8 + $0x40] sm:$0xff]
      %v1634 = vld [vmem:[%s8 + $0x48] sm:$0xff]
      %v1635 = vld [vmem:[%s8 + $0x50] sm:$0xff]
      %v1636 = vld [vmem:[%s8 + $0x58] sm:$0xff]
      %v1637 = vld [vmem:[%s8 + $0x60] sm:$0xff]
      %v1638 = vld [vmem:[%s8 + $0x68] sm:$0xff]
      %v1639 = vld [vmem:[%s8 + $0x70] sm:$0xff]
      %v1640 = vld [vmem:[%s8 + $0x78] sm:$0xff]
      %v1641 = vld [vmem:[%s8 + $0x80] sm:$0xff]
      %v1642 = vld [vmem:[%s8 + $0x88] sm:$0xff]
      %v1643 = vld [vmem:[%s8 + $0x90] sm:$0xff]
      %v1644 = vld [vmem:[%s8 + $0x98] sm:$0xff]
      %v1645 = vld [vmem:[%s8 + $0xa0] sm:$0xff]
      %v1646 = vld [vmem:[%s8 + $0xa8] sm:$0xff]
      %v1647 = vld [vmem:[%s8 + $0xb0] sm:$0xff]
      %v1648 = vld [vmem:[%s8 + $0xb8] sm:$0xff]
      %v1649 = vld [vmem:[%s8 + $0xc0] sm:$0xff]
      %v1650 = vld [vmem:[%s8 + $0xc8] sm:$0xff]
      %v1651 = vld [vmem:[%s8 + $0xd0] sm:$0xff]
      %v1652 = vld [vmem:[%s8 + $0xd8] sm:$0xff]
      %v1653 = vld [vmem:[%s8 + $0xe0] sm:$0xff]
      %v1654 = vld [vmem:[%s8 + $0xe8] sm:$0xff]
      %v1655 = vld [vmem:[%s8 + $0xf0] sm:$0xff]
      %v1656 = vld [vmem:[%s8 + $0xf8] sm:$0xff]
      %v1657 = vld [vmem:[%s8 + $0x100] sm:$0xff]
      %v1658 = vld [vmem:[%s8 + $0x108] sm:$0xff]
      %v1659 = vld [vmem:[%s8 + $0x110] sm:$0xff]
      %v1660 = vld [vmem:[%s8 + $0x118] sm:$0xff]
      %v1661 = vld [vmem:[%s8 + $0x120] sm:$0xff]
      %v1662 = vld [vmem:[%s8 + $0x128] sm:$0xff]
      %v1663 = vld [vmem:[%s8 + $0x130] sm:$0xff]
      %v1664 = vld [vmem:[%s8 + $0x138] sm:$0xff]
      %v1665 = vld [vmem:[%s8 + $0x140] sm:$0xff]
      %v1666 = vld [vmem:[%s8 + $0x148] sm:$0xff]
      %v1667 = vld [vmem:[%s8 + $0x150] sm:$0xff]
      %v1668 = vld [vmem:[%s8 + $0x158] sm:$0xff]
      %v1669 = vld [vmem:[%s8 + $0x160] sm:$0xff]
      %v1670 = vld [vmem:[%s8 + $0x168] sm:$0xff]
      %v1671 = vld [vmem:[%s8 + $0x170] sm:$0xff]
      %v1672 = vld [vmem:[%s8 + $0x178] sm:$0xff]
      %v1673 = vld [vmem:[%s8 + $0x180] sm:$0xff]
      %v1674 = vld [vmem:[%s8 + $0x188] sm:$0xff]
      %v1675 = vld [vmem:[%s8 + $0x190] sm:$0xff]
      %v1676 = vld [vmem:[%s8 + $0x198] sm:$0xff]
      %v1677 = vld [vmem:[%s8 + $0x1a0] sm:$0xff]
      %v1678 = vld [vmem:[%s8 + $0x1a8] sm:$0xff]
      %v1679 = vld [vmem:[%s8 + $0x1b0] sm:$0xff]
      %v1680 = vld [vmem:[%s8 + $0x1b8] sm:$0xff]
      %v1681 = vld [vmem:[%s8 + $0x1c0] sm:$0xff]
      %v1682 = vld [vmem:[%s8 + $0x1c8] sm:$0xff]
      %v1683 = vld [vmem:[%s8 + $0x1d0] sm:$0xff]
      %v1684 = vld [vmem:[%s8 + $0x1d8] sm:$0xff]
      %v1685 = vld [vmem:[%s8 + $0x1e0] sm:$0xff]
      %v1686 = vld [vmem:[%s8 + $0x1e8] sm:$0xff]
      %v1687 = vld [vmem:[%s8 + $0x1f0] sm:$0xff]
      %v1688 = vld [vmem:[%s8 + $0x1f8] sm:$0xff]
      %v1689 = vld [vmem:[%s9] sm:$0xf]
      %v1691 = vlaneseq
      %v1692 = vshrl.u32 %v1691, 7
      %v1693 = vsub.s32 0, %v1692
      %v1694 = vrot.slane %v1689, %v1693
      %v1695 = vlaneseq
      %v1696 = vshrl.u32 %v1695, 7
      %v1697 = vsub.s32 1, %v1696
      %v1698 = vrot.slane %v1689, %v1697
      %v1699 = vlaneseq
      %v1700 = vshrl.u32 %v1699, 7
      %v1701 = vsub.s32 2, %v1700
      %v1702 = vrot.slane %v1689, %v1701
      %v1703 = vlaneseq
      %v1704 = vshrl.u32 %v1703, 7
      %v1705 = vsub.s32 3, %v1704
      %v1706 = vrot.slane %v1689, %v1705
      %1711 = vmatprep.subr.mxu0 %v1626
      %1712 = vmatpush1.msra.mxu0 %v1625
      %1713 = vmatprep.subr.mxu0 %v1630
      %1714 = vmatpush1.msra.mxu0 %v1629
      %1715 = vmatprep.subr.mxu0 %v1634
      %1716 = vmatpush1.msra.mxu0 %v1633
      %1717 = vmatprep.subr.mxu0 %v1638
      %1718 = vmatpush1.msra.mxu0 %v1637
      %1719 = vmatprep.subr.mxu0 %v1642
      %1720 = vmatpush1.msra.mxu0 %v1641
      %1721 = vmatprep.subr.mxu0 %v1646
      %1722 = vmatpush1.msra.mxu0 %v1645
      %1723 = vmatprep.subr.mxu0 %v1650
      %1724 = vmatpush1.msra.mxu0 %v1649
      %1725 = vmatprep.subr.mxu0 %v1654
      %1726 = vmatpush1.msra.mxu0 %v1653
      %1727 = vmatprep.subr.mxu0 %v1658
      %1728 = vmatpush1.msra.mxu0 %v1657
      %1729 = vmatprep.subr.mxu0 %v1662
      %1730 = vmatpush1.msra.mxu0 %v1661
      %1731 = vmatprep.subr.mxu0 %v1666
      %1732 = vmatpush1.msra.mxu0 %v1665
      %1733 = vmatprep.subr.mxu0 %v1670
      %1734 = vmatpush1.msra.mxu0 %v1669
      %1735 = vmatprep.subr.mxu0 %v1674
      %1736 = vmatpush1.msra.mxu0 %v1673
      %1737 = vmatprep.subr.mxu0 %v1678
      %1738 = vmatpush1.msra.mxu0 %v1677
      %1739 = vmatprep.subr.mxu0 %v1682
      %1740 = vmatpush1.msra.mxu0 %v1681
      %1741 = vmatprep.subr.mxu0 %v1686
      %1742 = vmatpush1.msra.mxu0 %v1685
      %1743 = vmatprep.subr.mxu0 0.0
      %1744 = vmatpush1.msra.mxu0 0.0
      %1745 = vmatprep.subr.mxu0 0.0
      %1746 = vmatpush1.msra.mxu0 0.0
      %1747 = vmatprep.subr.mxu0 0.0
      %1748 = vmatpush1.msra.mxu0 0.0
      %1749 = vmatprep.subr.mxu0 0.0
      %1750 = vmatpush1.msra.mxu0 0.0
      %1751 = vmatprep.subr.mxu0 0.0
      %1752 = vmatpush1.msra.mxu0 0.0
      %1753 = vmatprep.subr.mxu0 0.0
      %1754 = vmatpush1.msra.mxu0 0.0
      %1755 = vmatprep.subr.mxu0 0.0
      %1756 = vmatpush1.msra.mxu0 0.0
      %1757 = vmatprep.subr.mxu0 0.0
      %1758 = vmatpush1.msra.mxu0 0.0
      %1759 = vmatprep.subr.mxu0 0.0
      %1760 = vmatpush1.msra.mxu0 0.0
      %1761 = vmatprep.subr.mxu0 0.0
      %1762 = vmatpush1.msra.mxu0 0.0
      %1763 = vmatprep.subr.mxu0 0.0
      %1764 = vmatpush1.msra.mxu0 0.0
      %1765 = vmatprep.subr.mxu0 0.0
      %1766 = vmatpush1.msra.mxu0 0.0
      %1767 = vmatprep.subr.mxu0 0.0
      %1768 = vmatpush1.msra.mxu0 0.0
      %1769 = vmatprep.subr.mxu0 0.0
      %1770 = vmatpush1.msra.mxu0 0.0
      %1771 = vmatprep.subr.mxu0 0.0
      %1772 = vmatpush1.msra.mxu0 0.0
      %1773 = vmatprep.subr.mxu0 0.0
      %1774 = vmatpush1.msra.mxu0 0.0
      %1775 = vmatprep.mubr.f32.mxu0 0.0
      %1776 = vmatmul.mubr.f32.gmra.mrb[0].mxu0 %v1623
      %v1777 = vpop.f32.mrb[0].mxu0
      %v1778 = vadd.f32 %v1694, %v1777
      %v1779 = vpop.f32.mrb[0].mxu0
      %v1780 = vadd.f32 %v1698, %v1779
      %1781 = vmatprep.mubr.f32.mxu0 0.0
      %1782 = vmatmul.mubr.f32.gmra.mrb[0].mxu0 %v1624
      %v1783 = vpop.f32.mrb[0].mxu0
      %v1784 = vadd.f32 %v1694, %v1783
      %v1785 = vpop.f32.mrb[0].mxu0
      %v1786 = vadd.f32 %v1698, %v1785
      %1787 = vdwg.mxu0
      %1788 = vmatprep.subr.mxu0 %v1628
      %1789 = vmatpush1.msra.mxu0 %v1627
      %1790 = vmatprep.subr.mxu0 %v1632
      %1791 = vmatpush1.msra.mxu0 %v1631
      %1792 = vmatprep.subr.mxu0 %v1636
      %1793 = vmatpush1.msra.mxu0 %v1635
      %1794 = vmatprep.subr.mxu0 %v1640
      %1795 = vmatpush1.msra.mxu0 %v1639
      %1796 = vmatprep.subr.mxu0 %v1644
      %1797 = vmatpush1.msra.mxu0 %v1643
      %1798 = vmatprep.subr.mxu0 %v1648
      %1799 = vmatpush1.msra.mxu0 %v1647
      %1800 = vmatprep.subr.mxu0 %v1652
      %1801 = vmatpush1.msra.mxu0 %v1651
      %1802 = vmatprep.subr.mxu0 %v1656
      %1803 = vmatpush1.msra.mxu0 %v1655
      %1804 = vmatprep.subr.mxu0 %v1660
      %1805 = vmatpush1.msra.mxu0 %v1659
      %1806 = vmatprep.subr.mxu0 %v1664
      %1807 = vmatpush1.msra.mxu0 %v1663
      %1808 = vmatprep.subr.mxu0 %v1668
      %1809 = vmatpush1.msra.mxu0 %v1667
      %1810 = vmatprep.subr.mxu0 %v1672
      %1811 = vmatpush1.msra.mxu0 %v1671
      %1812 = vmatprep.subr.mxu0 %v1676
      %1813 = vmatpush1.msra.mxu0 %v1675
      %1814 = vmatprep.subr.mxu0 %v1680
      %1815 = vmatpush1.msra.mxu0 %v1679
      %1816 = vmatprep.subr.mxu0 %v1684
      %1817 = vmatpush1.msra.mxu0 %v1683
      %1818 = vmatprep.subr.mxu0 %v1688
      %1819 = vmatpush1.msra.mxu0 %v1687
      %1820 = vmatprep.subr.mxu0 0.0
      %1821 = vmatpush1.msra.mxu0 0.0
      %1822 = vmatprep.subr.mxu0 0.0
      %1823 = vmatpush1.msra.mxu0 0.0
      %1824 = vmatprep.subr.mxu0 0.0
      %1825 = vmatpush1.msra.mxu0 0.0
      %1826 = vmatprep.subr.mxu0 0.0
      %1827 = vmatpush1.msra.mxu0 0.0
      %1828 = vmatprep.subr.mxu0 0.0
      %1829 = vmatpush1.msra.mxu0 0.0
      %1830 = vmatprep.subr.mxu0 0.0
      %1831 = vmatpush1.msra.mxu0 0.0
      %1832 = vmatprep.subr.mxu0 0.0
      %1833 = vmatpush1.msra.mxu0 0.0
      %1834 = vmatprep.subr.mxu0 0.0
      %1835 = vmatpush1.msra.mxu0 0.0
      %1836 = vmatprep.subr.mxu0 0.0
      %1837 = vmatpush1.msra.mxu0 0.0
      %1838 = vmatprep.subr.mxu0 0.0
      %1839 = vmatpush1.msra.mxu0 0.0
      %1840 = vmatprep.subr.mxu0 0.0
      %1841 = vmatpush1.msra.mxu0 0.0
      %1842 = vmatprep.subr.mxu0 0.0
      %1843 = vmatpush1.msra.mxu0 0.0
      %1844 = vmatprep.subr.mxu0 0.0
      %1845 = vmatpush1.msra.mxu0 0.0
      %1846 = vmatprep.subr.mxu0 0.0
      %1847 = vmatpush1.msra.mxu0 0.0
      %1848 = vmatprep.subr.mxu0 0.0
      %1849 = vmatpush1.msra.mxu0 0.0
      %1850 = vmatprep.subr.mxu0 0.0
      %1851 = vmatpush1.msra.mxu0 0.0
      %1852 = vmatprep.mubr.f32.mxu0 0.0
      %1853 = vmatmul.mubr.f32.gmra.mrb[0].mxu0 %v1623
      %v1854 = vpop.f32.mrb[0].mxu0
      %v1855 = vadd.f32 %v1702, %v1854
      %v1856 = vpop.f32.mrb[0].mxu0
      %v1857 = vadd.f32 %v1706, %v1856
      %1858 = vmatprep.mubr.f32.mxu0 0.0
      %1859 = vmatmul.mubr.f32.gmra.mrb[0].mxu0 %v1624
      %v1860 = vpop.f32.mrb[0].mxu0
      %v1861 = vadd.f32 %v1702, %v1860
      %v1862 = vpop.f32.mrb[0].mxu0
      %v1863 = vadd.f32 %v1706, %v1862
      %1864 = vdwg.mxu0
      %v1865 = vmul.f32 %v1778, 0.5
      %v1866 = vmul.f32 %v1780, 0.5
      %v1867 = vmul.f32 %v1855, 0.5
      %v1868 = vmul.f32 %v1857, 0.5
      %v1869 = vmul.f32 %v1784, 0.5
      %v1870 = vmul.f32 %v1786, 0.5
      %v1871 = vmul.f32 %v1861, 0.5
      %v1872 = vmul.f32 %v1863, 0.5
      %v1873 = vmul.f32 %v1778, 0.70710677
      %v1874 = vmul.f32 %v1780, 0.70710677
      %v1875 = vmul.f32 %v1855, 0.70710677
      %v1876 = vmul.f32 %v1857, 0.70710677
      %v1877 = vmul.f32 %v1784, 0.70710677
      %v1878 = vmul.f32 %v1786, 0.70710677
      %v1879 = vmul.f32 %v1861, 0.70710677
      %v1880 = vmul.f32 %v1863, 0.70710677
      %vm1881 = vcmp.ge.f32.partialorder %v1873, 0.0
      %vm1882 = vcmp.ge.f32.partialorder %v1874, 0.0
      %vm1883 = vcmp.ge.f32.partialorder %v1875, 0.0
      %vm1884 = vcmp.ge.f32.partialorder %v1876, 0.0
      %vm1885 = vcmp.ge.f32.partialorder %v1877, 0.0
      %vm1886 = vcmp.ge.f32.partialorder %v1878, 0.0
      %vm1887 = vcmp.ge.f32.partialorder %v1879, 0.0
      %vm1888 = vcmp.ge.f32.partialorder %v1880, 0.0
      %v1889 = vsel %vm1881, 1.0, -1.0
      %v1890 = vsel %vm1882, 1.0, -1.0
      %v1891 = vsel %vm1883, 1.0, -1.0
      %v1892 = vsel %vm1884, 1.0, -1.0
      %v1893 = vsel %vm1885, 1.0, -1.0
      %v1894 = vsel %vm1886, 1.0, -1.0
      %v1895 = vsel %vm1887, 1.0, -1.0
      %v1896 = vsel %vm1888, 1.0, -1.0
      %v1897 = vand.u32 2147483647, %v1873
      %v1898 = vand.u32 2147483647, %v1874
      %v1899 = vand.u32 2147483647, %v1875
      %v1900 = vand.u32 2147483647, %v1876
      %v1901 = vand.u32 2147483647, %v1877
      %v1902 = vand.u32 2147483647, %v1878
      %v1903 = vand.u32 2147483647, %v1879
      %v1904 = vand.u32 2147483647, %v1880
      %v1905 = vmul.f32 %v1897, 0.3275911
      %v1906 = vmul.f32 %v1898, 0.3275911
      %v1907 = vmul.f32 %v1899, 0.3275911
      %v1908 = vmul.f32 %v1900, 0.3275911
      %v1909 = vmul.f32 %v1901, 0.3275911
      %v1910 = vmul.f32 %v1902, 0.3275911
      %v1911 = vmul.f32 %v1903, 0.3275911
      %v1912 = vmul.f32 %v1904, 0.3275911
      %v1913 = vadd.f32 %v1905, 1.0
      %v1914 = vadd.f32 %v1906, 1.0
      %v1915 = vadd.f32 %v1907, 1.0
      %v1916 = vadd.f32 %v1908, 1.0
      %v1917 = vadd.f32 %v1909, 1.0
      %v1918 = vadd.f32 %v1910, 1.0
      %v1919 = vadd.f32 %v1911, 1.0
      %v1920 = vadd.f32 %v1912, 1.0
      %v1921 = vrcp.pop %v1913
      %v1922 = vmul.f32 1.0, %v1921
      %v1923 = vrcp.pop %v1914
      %v1924 = vmul.f32 1.0, %v1923
      %v1925 = vrcp.pop %v1915
      %v1926 = vmul.f32 1.0, %v1925
      %v1927 = vrcp.pop %v1916
      %v1928 = vmul.f32 1.0, %v1927
      %v1929 = vrcp.pop %v1917
      %v1930 = vmul.f32 1.0, %v1929
      %v1931 = vrcp.pop %v1918
      %v1932 = vmul.f32 1.0, %v1931
      %v1933 = vrcp.pop %v1919
      %v1934 = vmul.f32 1.0, %v1933
      %v1935 = vrcp.pop %v1920
      %v1936 = vmul.f32 1.0, %v1935
      %v1937 = vmul.f32 %v1922, 1.0614054
      %v1938 = vmul.f32 %v1924, 1.0614054
      %v1939 = vmul.f32 %v1926, 1.0614054
      %v1940 = vmul.f32 %v1928, 1.0614054
      %v1941 = vmul.f32 %v1930, 1.0614054
      %v1942 = vmul.f32 %v1932, 1.0614054
      %v1943 = vmul.f32 %v1934, 1.0614054
      %v1944 = vmul.f32 %v1936, 1.0614054
      %v1945 = vadd.f32 %v1937, -1.4531521
      %v1946 = vadd.f32 %v1938, -1.4531521
      %v1947 = vadd.f32 %v1939, -1.4531521
      %v1948 = vadd.f32 %v1940, -1.4531521
      %v1949 = vadd.f32 %v1941, -1.4531521
      %v1950 = vadd.f32 %v1942, -1.4531521
      %v1951 = vadd.f32 %v1943, -1.4531521
      %v1952 = vadd.f32 %v1944, -1.4531521
      %v1953 = vmul.f32 %v1945, %v1922
      %v1954 = vmul.f32 %v1946, %v1924
      %v1955 = vmul.f32 %v1947, %v1926
      %v1956 = vmul.f32 %v1948, %v1928
      %v1957 = vmul.f32 %v1949, %v1930
      %v1958 = vmul.f32 %v1950, %v1932
      %v1959 = vmul.f32 %v1951, %v1934
      %v1960 = vmul.f32 %v1952, %v1936
      %v1961 = vadd.f32 %v1953, 1.4214138
      %v1962 = vadd.f32 %v1954, 1.4214138
      %v1963 = vadd.f32 %v1955, 1.4214138
      %v1964 = vadd.f32 %v1956, 1.4214138
      %v1965 = vadd.f32 %v1957, 1.4214138
      %v1966 = vadd.f32 %v1958, 1.4214138
      %v1967 = vadd.f32 %v1959, 1.4214138
      %v1968 = vadd.f32 %v1960, 1.4214138
      %v1969 = vmul.f32 %v1961, %v1922
      %v1970 = vmul.f32 %v1962, %v1924
      %v1971 = vmul.f32 %v1963, %v1926
      %v1972 = vmul.f32 %v1964, %v1928
      %v1973 = vmul.f32 %v1965, %v1930
      %v1974 = vmul.f32 %v1966, %v1932
      %v1975 = vmul.f32 %v1967, %v1934
      %v1976 = vmul.f32 %v1968, %v1936
      %v1977 = vadd.f32 %v1969, -0.28449672
      %v1978 = vadd.f32 %v1970, -0.28449672
      %v1979 = vadd.f32 %v1971, -0.28449672
      %v1980 = vadd.f32 %v1972, -0.28449672
      %v1981 = vadd.f32 %v1973, -0.28449672
      %v1982 = vadd.f32 %v1974, -0.28449672
      %v1983 = vadd.f32 %v1975, -0.28449672
      %v1984 = vadd.f32 %v1976, -0.28449672
      %v1985 = vmul.f32 %v1977, %v1922
      %v1986 = vmul.f32 %v1978, %v1924
      %v1987 = vmul.f32 %v1979, %v1926
      %v1988 = vmul.f32 %v1980, %v1928
      %v1989 = vmul.f32 %v1981, %v1930
      %v1990 = vmul.f32 %v1982, %v1932
      %v1991 = vmul.f32 %v1983, %v1934
      %v1992 = vmul.f32 %v1984, %v1936
      %v1993 = vadd.f32 %v1985, 0.2548296
      %v1994 = vadd.f32 %v1986, 0.2548296
      %v1995 = vadd.f32 %v1987, 0.2548296
      %v1996 = vadd.f32 %v1988, 0.2548296
      %v1997 = vadd.f32 %v1989, 0.2548296
      %v1998 = vadd.f32 %v1990, 0.2548296
      %v1999 = vadd.f32 %v1991, 0.2548296
      %v2000 = vadd.f32 %v1992, 0.2548296
      %v2001 = vmul.f32 %v1993, %v1922
      %v2002 = vmul.f32 %v1994, %v1924
      %v2003 = vmul.f32 %v1995, %v1926
      %v2004 = vmul.f32 %v1996, %v1928
      %v2005 = vmul.f32 %v1997, %v1930
      %v2006 = vmul.f32 %v1998, %v1932
      %v2007 = vmul.f32 %v1999, %v1934
      %v2008 = vmul.f32 %v2000, %v1936
      %v2009 = vsub.f32 0.0, %v1897
      %v2010 = vsub.f32 0.0, %v1898
      %v2011 = vsub.f32 0.0, %v1899
      %v2012 = vsub.f32 0.0, %v1900
      %v2013 = vsub.f32 0.0, %v1901
      %v2014 = vsub.f32 0.0, %v1902
      %v2015 = vsub.f32 0.0, %v1903
      %v2016 = vsub.f32 0.0, %v1904
      %v2017 = vmul.f32 %v2009, %v1897
      %v2018 = vmul.f32 %v2010, %v1898
      %v2019 = vmul.f32 %v2011, %v1899
      %v2020 = vmul.f32 %v2012, %v1900
      %v2021 = vmul.f32 %v2013, %v1901
      %v2022 = vmul.f32 %v2014, %v1902
      %v2023 = vmul.f32 %v2015, %v1903
      %v2024 = vmul.f32 %v2016, %v1904
      %v2025 = vmul.f32 %v2017, 1.442695
      %v2026 = vpow.pop %v2025
      %v2027 = vmul.f32 %v2018, 1.442695
      %v2028 = vpow.pop %v2027
      %v2029 = vmul.f32 %v2019, 1.442695
      %v2030 = vpow.pop %v2029
      %v2031 = vmul.f32 %v2020, 1.442695
      %v2032 = vpow.pop %v2031
      %v2033 = vmul.f32 %v2021, 1.442695
      %v2034 = vpow.pop %v2033
      %v2035 = vmul.f32 %v2022, 1.442695
      %v2036 = vpow.pop %v2035
      %v2037 = vmul.f32 %v2023, 1.442695
      %v2038 = vpow.pop %v2037
      %v2039 = vmul.f32 %v2024, 1.442695
      %v2040 = vpow.pop %v2039
      %v2041 = vmul.f32 %v2001, %v2026
      %v2042 = vmul.f32 %v2002, %v2028
      %v2043 = vmul.f32 %v2003, %v2030
      %v2044 = vmul.f32 %v2004, %v2032
      %v2045 = vmul.f32 %v2005, %v2034
      %v2046 = vmul.f32 %v2006, %v2036
      %v2047 = vmul.f32 %v2007, %v2038
      %v2048 = vmul.f32 %v2008, %v2040
      %v2049 = vsub.f32 1.0, %v2041
      %v2050 = vsub.f32 1.0, %v2042
      %v2051 = vsub.f32 1.0, %v2043
      %v2052 = vsub.f32 1.0, %v2044
      %v2053 = vsub.f32 1.0, %v2045
      %v2054 = vsub.f32 1.0, %v2046
      %v2055 = vsub.f32 1.0, %v2047
      %v2056 = vsub.f32 1.0, %v2048
      %v2057 = vmul.f32 %v1889, %v2049
      %v2058 = vmul.f32 %v1890, %v2050
      %v2059 = vmul.f32 %v1891, %v2051
      %v2060 = vmul.f32 %v1892, %v2052
      %v2061 = vmul.f32 %v1893, %v2053
      %v2062 = vmul.f32 %v1894, %v2054
      %v2063 = vmul.f32 %v1895, %v2055
      %v2064 = vmul.f32 %v1896, %v2056
      %v2065 = vadd.f32 %v2057, 1.0
      %v2066 = vadd.f32 %v2058, 1.0
      %v2067 = vadd.f32 %v2059, 1.0
      %v2068 = vadd.f32 %v2060, 1.0
      %v2069 = vadd.f32 %v2061, 1.0
      %v2070 = vadd.f32 %v2062, 1.0
      %v2071 = vadd.f32 %v2063, 1.0
      %v2072 = vadd.f32 %v2064, 1.0
      %v2073 = vmul.f32 %v1865, %v2065
      %v2074 = vmul.f32 %v1866, %v2066
      %v2075 = vmul.f32 %v1867, %v2067
      %v2076 = vmul.f32 %v1868, %v2068
      %v2077 = vmul.f32 %v1869, %v2069
      %v2078 = vmul.f32 %v1870, %v2070
      %v2079 = vmul.f32 %v1871, %v2071
      %v2080 = vmul.f32 %v1872, %v2072
      %v2081 = vld [vmem:[%s10] sm:$0xff]
      %v2082 = vld [vmem:[%s10 + $0x8] sm:$0xff]
      %v2083 = vld [vmem:[%s10 + $0x10] sm:$0xff]
      %v2084 = vld [vmem:[%s10 + $0x18] sm:$0xff]
      %v2085 = vld [vmem:[%s10 + $0x20] sm:$0xff]
      %v2086 = vld [vmem:[%s10 + $0x28] sm:$0xff]
      %v2087 = vld [vmem:[%s10 + $0x30] sm:$0xff]
      %v2088 = vld [vmem:[%s10 + $0x38] sm:$0xff]
      %v2089 = vld [vmem:[%s10 + $0x40] sm:$0xff]
      %v2090 = vld [vmem:[%s10 + $0x48] sm:$0xff]
      %v2091 = vld [vmem:[%s10 + $0x50] sm:$0xff]
      %v2092 = vld [vmem:[%s10 + $0x58] sm:$0xff]
      %v2093 = vld [vmem:[%s10 + $0x60] sm:$0xff]
      %v2094 = vld [vmem:[%s10 + $0x68] sm:$0xff]
      %v2095 = vld [vmem:[%s10 + $0x70] sm:$0xff]
      %v2096 = vld [vmem:[%s10 + $0x78] sm:$0xff]
      %v2097 = vld [vmem:[%s10 + $0x80] sm:$0xff]
      %v2098 = vld [vmem:[%s10 + $0x88] sm:$0xff]
      %v2099 = vld [vmem:[%s10 + $0x90] sm:$0xff]
      %v2100 = vld [vmem:[%s10 + $0x98] sm:$0xff]
      %v2101 = vld [vmem:[%s10 + $0xa0] sm:$0xff]
      %v2102 = vld [vmem:[%s10 + $0xa8] sm:$0xff]
      %v2103 = vld [vmem:[%s10 + $0xb0] sm:$0xff]
      %v2104 = vld [vmem:[%s10 + $0xb8] sm:$0xff]
      %v2105 = vld [vmem:[%s10 + $0xc0] sm:$0xff]
      %v2106 = vld [vmem:[%s10 + $0xc8] sm:$0xff]
      %v2107 = vld [vmem:[%s10 + $0xd0] sm:$0xff]
      %v2108 = vld [vmem:[%s10 + $0xd8] sm:$0xff]
      %v2109 = vld [vmem:[%s10 + $0xe0] sm:$0xff]
      %v2110 = vld [vmem:[%s10 + $0xe8] sm:$0xff]
      %v2111 = vld [vmem:[%s10 + $0xf0] sm:$0xff]
      %v2112 = vld [vmem:[%s10 + $0xf8] sm:$0xff]
      %v2113 = vld [vmem:[%s10 + $0x100] sm:$0xff]
      %v2114 = vld [vmem:[%s10 + $0x108] sm:$0xff]
      %v2115 = vld [vmem:[%s10 + $0x110] sm:$0xff]
      %v2116 = vld [vmem:[%s10 + $0x118] sm:$0xff]
      %v2117 = vld [vmem:[%s10 + $0x120] sm:$0xff]
      %v2118 = vld [vmem:[%s10 + $0x128] sm:$0xff]
      %v2119 = vld [vmem:[%s10 + $0x130] sm:$0xff]
      %v2120 = vld [vmem:[%s10 + $0x138] sm:$0xff]
      %v2121 = vld [vmem:[%s10 + $0x140] sm:$0xff]
      %v2122 = vld [vmem:[%s10 + $0x148] sm:$0xff]
      %v2123 = vld [vmem:[%s10 + $0x150] sm:$0xff]
      %v2124 = vld [vmem:[%s10 + $0x158] sm:$0xff]
      %v2125 = vld [vmem:[%s10 + $0x160] sm:$0xff]
      %v2126 = vld [vmem:[%s10 + $0x168] sm:$0xff]
      %v2127 = vld [vmem:[%s10 + $0x170] sm:$0xff]
      %v2128 = vld [vmem:[%s10 + $0x178] sm:$0xff]
      %v2129 = vld [vmem:[%s10 + $0x180] sm:$0xff]
      %v2130 = vld [vmem:[%s10 + $0x188] sm:$0xff]
      %v2131 = vld [vmem:[%s10 + $0x190] sm:$0xff]
      %v2132 = vld [vmem:[%s10 + $0x198] sm:$0xff]
      %v2133 = vld [vmem:[%s10 + $0x1a0] sm:$0xff]
      %v2134 = vld [vmem:[%s10 + $0x1a8] sm:$0xff]
      %v2135 = vld [vmem:[%s10 + $0x1b0] sm:$0xff]
      %v2136 = vld [vmem:[%s10 + $0x1b8] sm:$0xff]
      %v2137 = vld [vmem:[%s10 + $0x1c0] sm:$0xff]
      %v2138 = vld [vmem:[%s10 + $0x1c8] sm:$0xff]
      %v2139 = vld [vmem:[%s10 + $0x1d0] sm:$0xff]
      %v2140 = vld [vmem:[%s10 + $0x1d8] sm:$0xff]
      %v2141 = vld [vmem:[%s10 + $0x1e0] sm:$0xff]
      %v2142 = vld [vmem:[%s10 + $0x1e8] sm:$0xff]
      %v2143 = vld [vmem:[%s10 + $0x1f0] sm:$0xff]
      %v2144 = vld [vmem:[%s10 + $0x1f8] sm:$0xff]
      %v2145 = vld [vmem:[%s11] sm:$0x1]
      %v2147 = vlaneseq
      %v2148 = vshrl.u32 %v2147, 7
      %v2149 = vsub.s32 0, %v2148
      %v2150 = vrot.slane %v2145, %v2149
      %2152 = vmatprep.subr.mxu0 0.0
      %2153 = vmatpush1.msra.mxu0 %v2081
      %2154 = vmatprep.subr.mxu0 0.0
      %2155 = vmatpush1.msra.mxu0 %v2082
      %2156 = vmatprep.subr.mxu0 0.0
      %2157 = vmatpush1.msra.mxu0 %v2083
      %2158 = vmatprep.subr.mxu0 0.0
      %2159 = vmatpush1.msra.mxu0 %v2084
      %2160 = vmatprep.subr.mxu0 0.0
      %2161 = vmatpush1.msra.mxu0 %v2085
      %2162 = vmatprep.subr.mxu0 0.0
      %2163 = vmatpush1.msra.mxu0 %v2086
      %2164 = vmatprep.subr.mxu0 0.0
      %2165 = vmatpush1.msra.mxu0 %v2087
      %2166 = vmatprep.subr.mxu0 0.0
      %2167 = vmatpush1.msra.mxu0 %v2088
      %2168 = vmatprep.subr.mxu0 0.0
      %2169 = vmatpush1.msra.mxu0 %v2089
      %2170 = vmatprep.subr.mxu0 0.0
      %2171 = vmatpush1.msra.mxu0 %v2090
      %2172 = vmatprep.subr.mxu0 0.0
      %2173 = vmatpush1.msra.mxu0 %v2091
      %2174 = vmatprep.subr.mxu0 0.0
      %2175 = vmatpush1.msra.mxu0 %v2092
      %2176 = vmatprep.subr.mxu0 0.0
      %2177 = vmatpush1.msra.mxu0 %v2093
      %2178 = vmatprep.subr.mxu0 0.0
      %2179 = vmatpush1.msra.mxu0 %v2094
      %2180 = vmatprep.subr.mxu0 0.0
      %2181 = vmatpush1.msra.mxu0 %v2095
      %2182 = vmatprep.subr.mxu0 0.0
      %2183 = vmatpush1.msra.mxu0 %v2096
      %2184 = vmatprep.subr.mxu0 0.0
      %2185 = vmatpush1.msra.mxu0 %v2097
      %2186 = vmatprep.subr.mxu0 0.0
      %2187 = vmatpush1.msra.mxu0 %v2098
      %2188 = vmatprep.subr.mxu0 0.0
      %2189 = vmatpush1.msra.mxu0 %v2099
      %2190 = vmatprep.subr.mxu0 0.0
      %2191 = vmatpush1.msra.mxu0 %v2100
      %2192 = vmatprep.subr.mxu0 0.0
      %2193 = vmatpush1.msra.mxu0 %v2101
      %2194 = vmatprep.subr.mxu0 0.0
      %2195 = vmatpush1.msra.mxu0 %v2102
      %2196 = vmatprep.subr.mxu0 0.0
      %2197 = vmatpush1.msra.mxu0 %v2103
      %2198 = vmatprep.subr.mxu0 0.0
      %2199 = vmatpush1.msra.mxu0 %v2104
      %2200 = vmatprep.subr.mxu0 0.0
      %2201 = vmatpush1.msra.mxu0 %v2105
      %2202 = vmatprep.subr.mxu0 0.0
      %2203 = vmatpush1.msra.mxu0 %v2106
      %2204 = vmatprep.subr.mxu0 0.0
      %2205 = vmatpush1.msra.mxu0 %v2107
      %2206 = vmatprep.subr.mxu0 0.0
      %2207 = vmatpush1.msra.mxu0 %v2108
      %2208 = vmatprep.subr.mxu0 0.0
      %2209 = vmatpush1.msra.mxu0 %v2109
      %2210 = vmatprep.subr.mxu0 0.0
      %2211 = vmatpush1.msra.mxu0 %v2110
      %2212 = vmatprep.subr.mxu0 0.0
      %2213 = vmatpush1.msra.mxu0 %v2111
      %2214 = vmatprep.subr.mxu0 0.0
      %2215 = vmatpush1.msra.mxu0 %v2112
      %2216 = vmatprep.mubr.f32.mxu0 %v2074
      %2217 = vmatmul.mubr.f32.gmra.mrb[0].mxu0 %v2073
      %v2218 = vpop.f32.mrb[0].mxu0
      %v2219 = vadd.f32 %v2150, %v2218
      %v2220 = vpop.f32.mrb[0].mxu0
      %2221 = vmatprep.mubr.f32.mxu0 %v2078
      %2222 = vmatmul.mubr.f32.gmra.mrb[0].mxu0 %v2077
      %v2223 = vpop.f32.mrb[0].mxu0
      %v2224 = vadd.f32 %v2150, %v2223
      %v2225 = vpop.f32.mrb[0].mxu0
      %2226 = vdwg.mxu0
      %2227 = vmatprep.subr.mxu0 0.0
      %2228 = vmatpush1.msra.mxu0 %v2113
      %2229 = vmatprep.subr.mxu0 0.0
      %2230 = vmatpush1.msra.mxu0 %v2114
      %2231 = vmatprep.subr.mxu0 0.0
      %2232 = vmatpush1.msra.mxu0 %v2115
      %2233 = vmatprep.subr.mxu0 0.0
      %2234 = vmatpush1.msra.mxu0 %v2116
      %2235 = vmatprep.subr.mxu0 0.0
      %2236 = vmatpush1.msra.mxu0 %v2117
      %2237 = vmatprep.subr.mxu0 0.0
      %2238 = vmatpush1.msra.mxu0 %v2118
      %2239 = vmatprep.subr.mxu0 0.0
      %2240 = vmatpush1.msra.mxu0 %v2119
      %2241 = vmatprep.subr.mxu0 0.0
      %2242 = vmatpush1.msra.mxu0 %v2120
      %2243 = vmatprep.subr.mxu0 0.0
      %2244 = vmatpush1.msra.mxu0 %v2121
      %2245 = vmatprep.subr.mxu0 0.0
      %2246 = vmatpush1.msra.mxu0 %v2122
      %2247 = vmatprep.subr.mxu0 0.0
      %2248 = vmatpush1.msra.mxu0 %v2123
      %2249 = vmatprep.subr.mxu0 0.0
      %2250 = vmatpush1.msra.mxu0 %v2124
      %2251 = vmatprep.subr.mxu0 0.0
      %2252 = vmatpush1.msra.mxu0 %v2125
      %2253 = vmatprep.subr.mxu0 0.0
      %2254 = vmatpush1.msra.mxu0 %v2126
      %2255 = vmatprep.subr.mxu0 0.0
      %2256 = vmatpush1.msra.mxu0 %v2127
      %2257 = vmatprep.subr.mxu0 0.0
      %2258 = vmatpush1.msra.mxu0 %v2128
      %2259 = vmatprep.subr.mxu0 0.0
      %2260 = vmatpush1.msra.mxu0 %v2129
      %2261 = vmatprep.subr.mxu0 0.0
      %2262 = vmatpush1.msra.mxu0 %v2130
      %2263 = vmatprep.subr.mxu0 0.0
      %2264 = vmatpush1.msra.mxu0 %v2131
      %2265 = vmatprep.subr.mxu0 0.0
      %2266 = vmatpush1.msra.mxu0 %v2132
      %2267 = vmatprep.subr.mxu0 0.0
      %2268 = vmatpush1.msra.mxu0 %v2133
      %2269 = vmatprep.subr.mxu0 0.0
      %2270 = vmatpush1.msra.mxu0 %v2134
      %2271 = vmatprep.subr.mxu0 0.0
      %2272 = vmatpush1.msra.mxu0 %v2135
      %2273 = vmatprep.subr.mxu0 0.0
      %2274 = vmatpush1.msra.mxu0 %v2136
      %2275 = vmatprep.subr.mxu0 0.0
      %2276 = vmatpush1.msra.mxu0 %v2137
      %2277 = vmatprep.subr.mxu0 0.0
      %2278 = vmatpush1.msra.mxu0 %v2138
      %2279 = vmatprep.subr.mxu0 0.0
      %2280 = vmatpush1.msra.mxu0 %v2139
      %2281 = vmatprep.subr.mxu0 0.0
      %2282 = vmatpush1.msra.mxu0 %v2140
      %2283 = vmatprep.subr.mxu0 0.0
      %2284 = vmatpush1.msra.mxu0 %v2141
      %2285 = vmatprep.subr.mxu0 0.0
      %2286 = vmatpush1.msra.mxu0 %v2142
      %2287 = vmatprep.subr.mxu0 0.0
      %2288 = vmatpush1.msra.mxu0 %v2143
      %2289 = vmatprep.subr.mxu0 0.0
      %2290 = vmatpush1.msra.mxu0 %v2144
      %2291 = vmatprep.mubr.f32.mxu0 %v2076
      %2292 = vmatmul.mubr.f32.gmra.mrb[0].mxu0 %v2075
      %v2293 = vpop.f32.mrb[0].mxu0
      %v2294 = vadd.f32 %v2219, %v2293
      %v2295 = vpop.f32.mrb[0].mxu0
      %2296 = vmatprep.mubr.f32.mxu0 %v2080
      %2297 = vmatmul.mubr.f32.gmra.mrb[0].mxu0 %v2079
      %v2298 = vpop.f32.mrb[0].mxu0
      %v2299 = vadd.f32 %v2224, %v2298
      %v2300 = vpop.f32.mrb[0].mxu0
      %2301 = vdwg.mxu0
      %v2302 = vadd.f32 %v1583, %v2294
      %v2303 = vadd.f32 %v1584, %v2299
      %2304 = vst [vmem:[%s413] sm:$0xff] %v2302
      %2305 = vst [vmem:[%s413 + $0x8] sm:$0xff] %v2303
      %p2306 = scmp.lt.s32.totalorder %s23, 1
      %s2307 = scalar_select %p2306, %s23, 1
      %s2308 = smul.addr %s2307, 2
      %s2309 = smul.addr %s2308, 8
      %s2310 = scalar_lea.vmem %s12, %s2309
      // Predicated region
      $region69: #{_vit_forward.5} parent=67 // pred_check
        %p2311 = pneg %p298
      $region70: #{_vit_forward.5} parent=67 // pred_check_branch
        %2313 = sbr.rel (%p2311) target = $region72
      $region71: #{_vit_forward.5} parent=67 // pred_region
        _
      $region72: #{_vit_forward.5} parent=67 // pred_fallthru
        _
    $region68: #{_vit_forward.5} parent=5 // pred_fallthru
      _
    %p2314 = scmp.le.s32.totalorder 2, %s18
    // Predicated region
    $region73: #{_vit_forward.5} parent=5 // pred_check
      %p2315 = pneg %p2314
    $region74: #{_vit_forward.5} parent=5 // pred_check_branch
      %2317 = sbr.rel (%p2315) target = $region76
    $region75: #{_vit_forward.5} parent=5 // pred_region
      %s2318 = ssub.s32 %s18, 2
      // Predicated region
      $region77: #{_vit_forward.5} parent=75 // pred_check
        %p2319 = pneg %p304
      $region78: #{_vit_forward.5} parent=75 // pred_check_branch
        %2321 = sbr.rel (%p2319) target = $region80
      $region79: #{_vit_forward.5} parent=75 // pred_region
        %p2322 = scmp.lt.s32.totalorder %s24, 1
        %s2323 = scalar_select %p2322, %s24, 1
        %s2324 = smul.addr %s2323, 2
        %s2325 = smul.addr %s2324, 8
        %s2326 = scalar_lea.vmem %s12, %s2325
      $region80: #{_vit_forward.5} parent=75 // pred_fallthru
        _
    $region76: #{_vit_forward.5} parent=5 // pred_fallthru
      _
  $region6: #{_vit_forward.5} parent=0 // loop_footer
    %s22 = sadd.s32 1, %s18
  $region7: #{_vit_forward.5} parent=0 // loop_footer_branch
    %17 = sbr.rel target = $region3
  $region8: #{_vit_forward.5} parent=0 // loop_exit
    _

</llo_original>
